<compile_context>
chip_gen: v6e
topology: v6e:2x2x1
jax: 0.10.0
libtpu: 0.0.40
codegen_flags: <defaults>
</compile_context>

<pallas_src>
import functools

import jax
import jax.numpy as jnp
from jax import lax
from jax.experimental import pallas as pl
from jax.experimental.pallas import tpu as pltpu


# ----------------------------------------------------------------------------
# Kernel: one grid step == one TransformerEncoderLayer (+ lm_projection last)
# ----------------------------------------------------------------------------
def connector_kernel(x_ref, mask_ref,
                     wqkv_ref, bqkv_ref, wo_ref, dvec_ref,
                     w1_ref, b1_ref, w2_ref,
                     projw_ref, projb_ref,
                     out_ref,
                     x_sc, bias_sc,
                     *, num_heads: int, eps: float = 1e-5):
    l = pl.program_id(0)
    n_layers = pl.num_programs(0)

    B, S, D = x_ref.shape
    BS = B * S
    H = num_heads
    hd = D // H
    scale = 1.0 / (float(hd) ** 0.5)

    # ---- one-time init: activations + head-tiled key-padding bias ----------
    @pl.when(l == 0)
    def _():
        x_sc[...] = x_ref[...].astype(jnp.float32).reshape(BS, D)
        m = mask_ref[...].astype(jnp.float32)              # (B, 1, S)
        b = jnp.where(m > 0.0, 0.0, -1e30)                 # keep in f32
        bias_sc[...] = jnp.concatenate([b] * H, axis=0)    # (H*B, 1, S), h-major

    def layer_norm(y, g, b):
        mu = jnp.mean(y, axis=-1, keepdims=True)
        var = jnp.mean(jnp.square(y - mu), axis=-1, keepdims=True)
        return (y - mu) * lax.rsqrt(var + eps) * g + b

    x = x_sc[...]                                          # (BS, D) f32

    dv = dvec_ref[0]                                       # (6, D) f32
    bo, g1, be1 = dv[0:1], dv[1:2], dv[2:3]
    b2, g2, be2 = dv[3:4], dv[4:5], dv[5:6]

    # ---- fused QKV projection: one bf16 MXU matmul, f32 accumulate ---------
    qkv = jnp.dot(x.astype(jnp.bfloat16), wqkv_ref[0],
                  preferred_element_type=jnp.float32) + bqkv_ref[0]     # (BS, 3D)

    # ---- head-batched attention: batch = H*B, ONE einsum pair --------------
    def to_heads(off):   # (BS, D) lane block -> (H*B, S, hd), h-major batch
        return jnp.concatenate(
            [qkv[:, off + h * hd: off + (h + 1) * hd].reshape(B, S, hd)
             for h in range(H)], axis=0).astype(jnp.bfloat16)

    qh, kh, vh = to_heads(0), to_heads(D), to_heads(2 * D)

    s = jnp.einsum('bqd,bkd->bqk', qh, kh,
                   preferred_element_type=jnp.float32) * scale          # (H*B,S,S)
    s = s + bias_sc[...]                           # key padding bias (f32)
    s = s - jnp.max(s, axis=-1, keepdims=True)     # fully-masked rows stay finite
    p = jnp.exp(s)
    p = p * pl.reciprocal(jnp.sum(p, axis=-1, keepdims=True), approx=True)
    ctx_b = jnp.einsum('bqk,bkd->bqd', p.astype(jnp.bfloat16), vh,
                       preferred_element_type=jnp.float32)              # (H*B,S,hd)
    ctx = jnp.concatenate([ctx_b[h * B:(h + 1) * B] for h in range(H)],
                          axis=-1).reshape(BS, D)                       # (BS, D)

    attn = jnp.dot(ctx.astype(jnp.bfloat16), wo_ref[0],
                   preferred_element_type=jnp.float32) + bo
    x = layer_norm(x + attn, g1, be1)

    # ---- feed forward -------------------------------------------------------
    h1 = jnp.dot(x.astype(jnp.bfloat16), w1_ref[0],
                 preferred_element_type=jnp.float32) + b1_ref[0]
    h1 = jnp.maximum(h1, 0.0)
    ff = jnp.dot(h1.astype(jnp.bfloat16), w2_ref[0],
                 preferred_element_type=jnp.float32) + b2
    x = layer_norm(x + ff, g2, be2)

    x_sc[...] = x

    # ---- lm_projection + the only HBM store (lane-dense), last step only ---
    @pl.when(l == n_layers - 1)
    def _():
        y = jnp.dot(x.astype(jnp.bfloat16), projw_ref[...],
                    preferred_element_type=jnp.float32) + projb_ref[...]
        out_ref[...] = y.astype(out_ref.dtype)


# ----------------------------------------------------------------------------
# Parameter packing: run ONCE at model build time (not per forward call)
# ----------------------------------------------------------------------------
def pack_connector_params(layer_params, proj_w, proj_b,
                          compute_dtype=jnp.bfloat16):
    ff_dims = {p["w1"].shape[1] for p in layer_params}
    assert len(ff_dims) == 1, "layer stacking requires equal ff dims per layer"

    wqkv = jnp.stack([jnp.concatenate([p["wq"], p["wk"], p["wv"]], axis=1)
                      for p in layer_params]).astype(compute_dtype)        # (L,D,3D)
    bqkv = jnp.stack([jnp.concatenate([p["bq"], p["bk"], p["bv"]], axis=1)
                      for p in layer_params])                              # (L,1,3D)
    wo = jnp.stack([p["wo"] for p in layer_params]).astype(compute_dtype)  # (L,D,D)
    w1 = jnp.stack([p["w1"] for p in layer_params]).astype(compute_dtype)  # (L,D,F)
    w2 = jnp.stack([p["w2"] for p in layer_params]).astype(compute_dtype)  # (L,F,D)
    b1 = jnp.stack([p["b1"] for p in layer_params])                        # (L,1,F)
    dvec = jnp.stack([jnp.concatenate(
        [p["bo"], p["g1"], p["be1"], p["b2"], p["g2"], p["be2"]], axis=0)
        for p in layer_params])                                            # (L,6,D)

    D, O = proj_w.shape
    O_pad = ((O + 127) // 128) * 128
    pw = jnp.zeros((D, O_pad), compute_dtype).at[:, :O].set(
        proj_w.astype(compute_dtype))
    pb = jnp.zeros((1, O_pad), jnp.float32).at[:, :O].set(
        proj_b.astype(jnp.float32))

    return dict(wqkv=wqkv, bqkv=bqkv, wo=wo, dvec=dvec, w1=w1, b1=b1, w2=w2,
                proj_w=pw, proj_b=pb, O=O, O_pad=O_pad)


# ----------------------------------------------------------------------------
# Wrapper: grid over layers, weights streamed (double-buffered) through VMEM
# ----------------------------------------------------------------------------
def transformer_connector_forward(x, mask, packed, n_heads):
    B, S, D = x.shape
    L = packed["wqkv"].shape[0]
    F = packed["w1"].shape[-1]
    O, O_pad = packed["O"], packed["O_pad"]
    BS = B * S

    heads = {int(h) for h in n_heads}
    assert len(heads) == 1, "layer-grid pipeline requires uniform n_heads"
    H = heads.pop()
    hd = D // H

    kernel = functools.partial(connector_kernel, num_heads=H)

    lmap = lambda l: (l, 0, 0)            # per-layer (pipelined) operands
    rmap3 = lambda l: (0, 0, 0)           # resident operands
    rmap2 = lambda l: (0, 0)
    in_specs = [
        pl.BlockSpec((B, S, D), rmap3),         # x
        pl.BlockSpec((B, 1, S), rmap3),         # mask
        pl.BlockSpec((1, D, 3 * D), lmap),      # wqkv
        pl.BlockSpec((1, 1, 3 * D), lmap),      # bqkv
        pl.BlockSpec((1, D, D), lmap),          # wo
        pl.BlockSpec((1, 6, D), lmap),          # dvec (bo,g1,be1,b2,g2,be2)
        pl.BlockSpec((1, D, F), lmap),          # w1
        pl.BlockSpec((1, 1, F), lmap),          # b1
        pl.BlockSpec((1, F, D), lmap),          # w2
        pl.BlockSpec((D, O_pad), rmap2),        # proj_w (padded, lane-dense)
        pl.BlockSpec((1, O_pad), rmap2),        # proj_b
    ]
    out_spec = pl.BlockSpec((BS, O_pad), rmap2)

    scratch_shapes = [pltpu.VMEM((BS, D), jnp.float32),        # activations
                      pltpu.VMEM((H * B, 1, S), jnp.float32)]  # key-pad bias

    # --- explicit VMEM budget + cost hint ------------------------------------
    def nbytes(a):
        return int(a.size) * jnp.dtype(a.dtype).itemsize

    operands = (x, mask, packed["wqkv"], packed["bqkv"], packed["wo"],
                packed["dvec"], packed["w1"], packed["b1"], packed["w2"],
                packed["proj_w"], packed["proj_b"])
    per_layer = sum(nbytes(packed[k]) // L
                    for k in ("wqkv", "bqkv", "wo", "dvec", "w1", "b1", "w2"))
    resident = (nbytes(x) + nbytes(mask)
                + nbytes(packed["proj_w"]) + nbytes(packed["proj_b"]))
    out_bytes = BS * O_pad * jnp.dtype(x.dtype).itemsize
    scratch_bytes = (BS * D + H * B * S) * 4
    needed = 2 * per_layer + 2 * resident + 2 * out_bytes + scratch_bytes
    vmem_limit = int(min(64 << 20, max(2 * needed + (4 << 20), 16 << 20)))

    flops_layer = (2 * BS * D * 3 * D                # fused QKV
                   + 2 * 2 * B * H * S * S * hd      # scores + context
                   + 2 * BS * D * D                  # attention out-proj
                   + 2 * BS * D * F + 2 * BS * F * D)  # FFN
    flops = L * flops_layer + 2 * BS * D * O_pad
    transcendentals = L * (B * H * S * S + 2 * BS)
    bytes_accessed = sum(nbytes(a) for a in operands) + out_bytes

    out = pl.pallas_call(
        kernel,
        out_shape=jax.ShapeDtypeStruct((BS, O_pad), x.dtype),
        grid_spec=pltpu.PrefetchScalarGridSpec(
            num_scalar_prefetch=0,
            grid=(L,),
            in_specs=in_specs,
            out_specs=out_spec,
            scratch_shapes=scratch_shapes),
        compiler_params=pltpu.CompilerParams(
            dimension_semantics=("arbitrary",),
            vmem_limit_bytes=vmem_limit),
        cost_estimate=pl.CostEstimate(flops=int(flops),
                                      transcendentals=int(transcendentals),
                                      bytes_accessed=int(bytes_accessed)),
    )(*operands)

    return out[:, :O].reshape(B, S, O)


# ----------------------------------------------------------------------------
# Deterministic parameter construction (f32 master weights)
# ----------------------------------------------------------------------------
def init_layer_params(key, d_model, ff_dim):
    ks = jax.random.split(key, 6)
    std = 0.02
    return {
        "wq": jax.random.normal(ks[0], (d_model, d_model), jnp.float32) * std,
        "bq": jnp.zeros((1, d_model), jnp.float32),
        "wk": jax.random.normal(ks[1], (d_model, d_model), jnp.float32) * std,
        "bk": jnp.zeros((1, d_model), jnp.float32),
        "wv": jax.random.normal(ks[2], (d_model, d_model), jnp.float32) * std,
        "bv": jnp.zeros((1, d_model), jnp.float32),
        "wo": jax.random.normal(ks[3], (d_model, d_model), jnp.float32) * std,
        "bo": jnp.zeros((1, d_model), jnp.float32),
        "g1": jnp.ones((1, d_model), jnp.float32),
        "be1": jnp.zeros((1, d_model), jnp.float32),
        "w1": jax.random.normal(ks[4], (d_model, ff_dim), jnp.float32) * std,
        "b1": jnp.zeros((1, ff_dim), jnp.float32),
        "w2": jax.random.normal(ks[5], (ff_dim, d_model), jnp.float32) * std,
        "b2": jnp.zeros((1, d_model), jnp.float32),
        "g2": jnp.ones((1, d_model), jnp.float32),
        "be2": jnp.zeros((1, d_model), jnp.float32),
    }


if __name__ == "__main__":
    key = jax.random.PRNGKey(0)

    # Module config (small, consistent with TransformerConnector defaults).
    B, S = 2, 8
    output_size = 32          # transformer embedding dim (module's `output_size`)
    input_size = 64           # LM hidden size, target of lm_projection_layer
    n_layers = 2
    n_heads = [8] * n_layers
    forward_expansions = [2] * n_layers

    k_x, k_p, k_proj = jax.random.split(key, 3)

    x = jax.random.normal(k_x, (B, S, output_size), jnp.float32)
    mask = jnp.ones((B, 1, S), jnp.float32)
    mask = mask.at[1, 0, 6:].set(0.0)   # pad the last 2 tokens of sample 1

    layer_keys = jax.random.split(k_p, n_layers)
    layer_params = [
        init_layer_params(layer_keys[i], output_size,
                          output_size * forward_expansions[i])
        for i in range(n_layers)
    ]
    proj_w = jax.random.normal(k_proj, (output_size, input_size), jnp.float32) * 0.02
    proj_b = jnp.zeros((1, input_size), jnp.float32)

    # Pack ONCE at build time (stack / QKV-fuse / bf16 cast / lane-pad) and
    # reuse the packed dict for every forward call.
    packed = pack_connector_params(layer_params, proj_w, proj_b)

    out = transformer_connector_forward(x, mask, packed, n_heads)
    out = jax.block_until_ready(out)

    assert out.shape == (B, S, input_size), out.shape
    assert bool(jnp.all(jnp.isfinite(out)))
    print("KERNEL_OK")
</pallas_src>

<mosaic_0001>
module attributes {stable_mosaic.version = 11 : i64} {
  func.func @connector_kernel(%arg0: i32, %arg1: memref<2x8x32xf32, #tpu.memory_space<vmem>>, %arg2: memref<2x1x8xf32, #tpu.memory_space<vmem>>, %arg3: memref<1x32x96xbf16, #tpu.memory_space<vmem>>, %arg4: memref<1x1x96xf32, #tpu.memory_space<vmem>>, %arg5: memref<1x32x32xbf16, #tpu.memory_space<vmem>>, %arg6: memref<1x6x32xf32, #tpu.memory_space<vmem>>, %arg7: memref<1x32x64xbf16, #tpu.memory_space<vmem>>, %arg8: memref<1x1x64xf32, #tpu.memory_space<vmem>>, %arg9: memref<1x64x32xbf16, #tpu.memory_space<vmem>>, %arg10: memref<32x128xbf16, #tpu.memory_space<vmem>>, %arg11: memref<1x128xf32, #tpu.memory_space<vmem>>, %arg12: memref<16x128xf32, #tpu.memory_space<vmem>>, %arg13: memref<16x32xf32, #tpu.memory_space<vmem>>, %arg14: memref<16x1x8xf32, #tpu.memory_space<vmem>>) attributes {dimension_semantics = [#tpu.dimension_semantics<arbitrary>], iteration_bounds = array<i64: 2>, scalar_prefetch = 0 : i64, scratch_operands = 2 : i64, tpu.core_type = #tpu.core_type<tc>, window_params = [{pipeline_mode = #tpu.pipeline_mode<synchronous>, transform_indices = @transform_0, window_bounds = array<i64: 2, 8, 32>}, {pipeline_mode = #tpu.pipeline_mode<synchronous>, transform_indices = @transform_1, window_bounds = array<i64: 2, 1, 8>}, {transform_indices = @transform_2, window_bounds = array<i64: 1, 32, 96>}, {transform_indices = @transform_3, window_bounds = array<i64: 1, 1, 96>}, {transform_indices = @transform_4, window_bounds = array<i64: 1, 32, 32>}, {transform_indices = @transform_5, window_bounds = array<i64: 1, 6, 32>}, {transform_indices = @transform_6, window_bounds = array<i64: 1, 32, 64>}, {transform_indices = @transform_7, window_bounds = array<i64: 1, 1, 64>}, {transform_indices = @transform_8, window_bounds = array<i64: 1, 64, 32>}, {pipeline_mode = #tpu.pipeline_mode<synchronous>, transform_indices = @transform_9, window_bounds = array<i64: 32, 128>}, {pipeline_mode = #tpu.pipeline_mode<synchronous>, transform_indices = @transform_10, window_bounds = array<i64: 1, 128>}, {pipeline_mode = #tpu.pipeline_mode<synchronous>, transform_indices = @transform_11, window_bounds = array<i64: 16, 128>}]} {
    %c0_i32 = arith.constant 0 : i32
    %0 = arith.cmpi eq, %arg0, %c0_i32 : i32
    %1 = arith.extui %0 : i1 to i32
    %c0_i32_0 = arith.constant 0 : i32
    %2 = arith.cmpi ne, %1, %c0_i32_0 : i32
    scf.if %2 {
      %c0_48 = arith.constant 0 : index
      %c0_49 = arith.constant 0 : index
      %c0_50 = arith.constant 0 : index
      %174 = vector.load %arg1[%c0_48, %c0_49, %c0_50] : memref<2x8x32xf32, #tpu.memory_space<vmem>>, vector<2x8x32xf32>
      %175 = vector.shape_cast %174 : vector<2x8x32xf32> to vector<16x32xf32>
      %c0_51 = arith.constant 0 : index
      %c0_52 = arith.constant 0 : index
      %176 = vector.load %arg13[%c0_51, %c0_52] : memref<16x32xf32, #tpu.memory_space<vmem>>, vector<16x32xf32>
      tpu.vector_store %arg13[%c0_51, %c0_52], %175 {strides = array<i32>} : memref<16x32xf32, #tpu.memory_space<vmem>>, vector<16x32xf32>,
      %c0_53 = arith.constant 0 : index
      %c0_54 = arith.constant 0 : index
      %c0_55 = arith.constant 0 : index
      %177 = vector.load %arg2[%c0_53, %c0_54, %c0_55] : memref<2x1x8xf32, #tpu.memory_space<vmem>>, vector<2x1x8xf32>
      %cst_56 = arith.constant 0.000000e+00 : f32
      %178 = vector.broadcast %cst_56 : f32 to vector<2x1x8xf32>
      %179 = arith.cmpf ogt, %177, %178 : vector<2x1x8xf32>
      %cst_57 = arith.constant 0.000000e+00 : f32
      %cst_58 = arith.constant -1.000000e+30 : f32
      %180 = vector.broadcast %cst_57 : f32 to vector<2x1x8xf32>
      %181 = vector.broadcast %cst_58 : f32 to vector<2x1x8xf32>
      %182 = arith.select %179, %180, %181 : vector<2x1x8xi1>, vector<2x1x8xf32>
      %183 = tpu.concatenate %182, %182, %182, %182, %182, %182, %182, %182 in 0 : vector<2x1x8xf32>, vector<2x1x8xf32>, vector<2x1x8xf32>, vector<2x1x8xf32>, vector<2x1x8xf32>, vector<2x1x8xf32>, vector<2x1x8xf32>, vector<2x1x8xf32> -> vector<16x1x8xf32>
      %c0_59 = arith.constant 0 : index
      %c0_60 = arith.constant 0 : index
      %c0_61 = arith.constant 0 : index
      %184 = vector.load %arg14[%c0_59, %c0_60, %c0_61] : memref<16x1x8xf32, #tpu.memory_space<vmem>>, vector<16x1x8xf32>
      tpu.vector_store %arg14[%c0_59, %c0_60, %c0_61], %183 {strides = array<i32>} : memref<16x1x8xf32, #tpu.memory_space<vmem>>, vector<16x1x8xf32>,
    } else {
    }
    %c0 = arith.constant 0 : index
    %c0_1 = arith.constant 0 : index
    %3 = vector.load %arg13[%c0, %c0_1] : memref<16x32xf32, #tpu.memory_space<vmem>>, vector<16x32xf32>
    %c0_2 = arith.constant 0 : index
    %c0_3 = arith.constant 0 : index
    %c0_4 = arith.constant 0 : index
    %4 = vector.load %arg6[%c0_2, %c0_3, %c0_4] : memref<1x6x32xf32, #tpu.memory_space<vmem>>, vector<1x6x32xf32>
    %5 = vector.shape_cast %4 : vector<1x6x32xf32> to vector<6x32xf32>
    %6 = vector.extract_strided_slice %5 {offsets = [0, 0], sizes = [1, 32], strides = [1, 1]} : vector<6x32xf32> to vector<1x32xf32>
    %7 = vector.extract_strided_slice %5 {offsets = [1, 0], sizes = [1, 32], strides = [1, 1]} : vector<6x32xf32> to vector<1x32xf32>
    %8 = vector.extract_strided_slice %5 {offsets = [2, 0], sizes = [1, 32], strides = [1, 1]} : vector<6x32xf32> to vector<1x32xf32>
    %9 = vector.extract_strided_slice %5 {offsets = [3, 0], sizes = [1, 32], strides = [1, 1]} : vector<6x32xf32> to vector<1x32xf32>
    %10 = vector.extract_strided_slice %5 {offsets = [4, 0], sizes = [1, 32], strides = [1, 1]} : vector<6x32xf32> to vector<1x32xf32>
    %11 = vector.extract_strided_slice %5 {offsets = [5, 0], sizes = [1, 32], strides = [1, 1]} : vector<6x32xf32> to vector<1x32xf32>
    %12 = arith.truncf %3 : vector<16x32xf32> to vector<16x32xbf16>
    %c0_5 = arith.constant 0 : index
    %c0_6 = arith.constant 0 : index
    %c0_7 = arith.constant 0 : index
    %13 = vector.load %arg3[%c0_5, %c0_6, %c0_7] : memref<1x32x96xbf16, #tpu.memory_space<vmem>>, vector<1x32x96xbf16>
    %14 = vector.shape_cast %13 : vector<1x32x96xbf16> to vector<32x96xbf16>
    %cst = arith.constant dense<0.000000e+00> : vector<16x96xf32>
    %15 = tpu.matmul %12, %14, %cst {dimension_numbers = #tpu.dot_dimension_numbers<[1], [0], [0], [1], [0, 0, 1, 1], [], []>} : vector<16x32xbf16>, vector<32x96xbf16>, vector<16x96xf32> -> vector<16x96xf32>
    %c0_8 = arith.constant 0 : index
    %c0_9 = arith.constant 0 : index
    %c0_10 = arith.constant 0 : index
    %16 = vector.load %arg4[%c0_8, %c0_9, %c0_10] : memref<1x1x96xf32, #tpu.memory_space<vmem>>, vector<1x1x96xf32>
    %17 = vector.shape_cast %16 : vector<1x1x96xf32> to vector<1x96xf32>
    %18 = vector.broadcast %17 : vector<1x96xf32> to vector<16x96xf32>
    %19 = arith.addf %15, %18 : vector<16x96xf32>
    %20 = vector.extract_strided_slice %19 {offsets = [0, 0], sizes = [16, 4], strides = [1, 1]} : vector<16x96xf32> to vector<16x4xf32>
    %21 = vector.shape_cast %20 : vector<16x4xf32> to vector<2x8x4xf32>
    %22 = vector.extract_strided_slice %19 {offsets = [0, 4], sizes = [16, 4], strides = [1, 1]} : vector<16x96xf32> to vector<16x4xf32>
    %23 = vector.shape_cast %22 : vector<16x4xf32> to vector<2x8x4xf32>
    %24 = vector.extract_strided_slice %19 {offsets = [0, 8], sizes = [16, 4], strides = [1, 1]} : vector<16x96xf32> to vector<16x4xf32>
    %25 = vector.shape_cast %24 : vector<16x4xf32> to vector<2x8x4xf32>
    %26 = vector.extract_strided_slice %19 {offsets = [0, 12], sizes = [16, 4], strides = [1, 1]} : vector<16x96xf32> to vector<16x4xf32>
    %27 = vector.shape_cast %26 : vector<16x4xf32> to vector<2x8x4xf32>
    %28 = vector.extract_strided_slice %19 {offsets = [0, 16], sizes = [16, 4], strides = [1, 1]} : vector<16x96xf32> to vector<16x4xf32>
    %29 = vector.shape_cast %28 : vector<16x4xf32> to vector<2x8x4xf32>
    %30 = vector.extract_strided_slice %19 {offsets = [0, 20], sizes = [16, 4], strides = [1, 1]} : vector<16x96xf32> to vector<16x4xf32>
    %31 = vector.shape_cast %30 : vector<16x4xf32> to vector<2x8x4xf32>
    %32 = vector.extract_strided_slice %19 {offsets = [0, 24], sizes = [16, 4], strides = [1, 1]} : vector<16x96xf32> to vector<16x4xf32>
    %33 = vector.shape_cast %32 : vector<16x4xf32> to vector<2x8x4xf32>
    %34 = vector.extract_strided_slice %19 {offsets = [0, 28], sizes = [16, 4], strides = [1, 1]} : vector<16x96xf32> to vector<16x4xf32>
    %35 = vector.shape_cast %34 : vector<16x4xf32> to vector<2x8x4xf32>
    %36 = tpu.concatenate %21, %23, %25, %27, %29, %31, %33, %35 in 0 : vector<2x8x4xf32>, vector<2x8x4xf32>, vector<2x8x4xf32>, vector<2x8x4xf32>, vector<2x8x4xf32>, vector<2x8x4xf32>, vector<2x8x4xf32>, vector<2x8x4xf32> -> vector<16x8x4xf32>
    %37 = arith.truncf %36 : vector<16x8x4xf32> to vector<16x8x4xbf16>
    %38 = vector.extract_strided_slice %19 {offsets = [0, 32], sizes = [16, 4], strides = [1, 1]} : vector<16x96xf32> to vector<16x4xf32>
    %39 = vector.shape_cast %38 : vector<16x4xf32> to vector<2x8x4xf32>
    %40 = vector.extract_strided_slice %19 {offsets = [0, 36], sizes = [16, 4], strides = [1, 1]} : vector<16x96xf32> to vector<16x4xf32>
    %41 = vector.shape_cast %40 : vector<16x4xf32> to vector<2x8x4xf32>
    %42 = vector.extract_strided_slice %19 {offsets = [0, 40], sizes = [16, 4], strides = [1, 1]} : vector<16x96xf32> to vector<16x4xf32>
    %43 = vector.shape_cast %42 : vector<16x4xf32> to vector<2x8x4xf32>
    %44 = vector.extract_strided_slice %19 {offsets = [0, 44], sizes = [16, 4], strides = [1, 1]} : vector<16x96xf32> to vector<16x4xf32>
    %45 = vector.shape_cast %44 : vector<16x4xf32> to vector<2x8x4xf32>
    %46 = vector.extract_strided_slice %19 {offsets = [0, 48], sizes = [16, 4], strides = [1, 1]} : vector<16x96xf32> to vector<16x4xf32>
    %47 = vector.shape_cast %46 : vector<16x4xf32> to vector<2x8x4xf32>
    %48 = vector.extract_strided_slice %19 {offsets = [0, 52], sizes = [16, 4], strides = [1, 1]} : vector<16x96xf32> to vector<16x4xf32>
    %49 = vector.shape_cast %48 : vector<16x4xf32> to vector<2x8x4xf32>
    %50 = vector.extract_strided_slice %19 {offsets = [0, 56], sizes = [16, 4], strides = [1, 1]} : vector<16x96xf32> to vector<16x4xf32>
    %51 = vector.shape_cast %50 : vector<16x4xf32> to vector<2x8x4xf32>
    %52 = vector.extract_strided_slice %19 {offsets = [0, 60], sizes = [16, 4], strides = [1, 1]} : vector<16x96xf32> to vector<16x4xf32>
    %53 = vector.shape_cast %52 : vector<16x4xf32> to vector<2x8x4xf32>
    %54 = tpu.concatenate %39, %41, %43, %45, %47, %49, %51, %53 in 0 : vector<2x8x4xf32>, vector<2x8x4xf32>, vector<2x8x4xf32>, vector<2x8x4xf32>, vector<2x8x4xf32>, vector<2x8x4xf32>, vector<2x8x4xf32>, vector<2x8x4xf32> -> vector<16x8x4xf32>
    %55 = arith.truncf %54 : vector<16x8x4xf32> to vector<16x8x4xbf16>
    %56 = vector.extract_strided_slice %19 {offsets = [0, 64], sizes = [16, 4], strides = [1, 1]} : vector<16x96xf32> to vector<16x4xf32>
    %57 = vector.shape_cast %56 : vector<16x4xf32> to vector<2x8x4xf32>
    %58 = vector.extract_strided_slice %19 {offsets = [0, 68], sizes = [16, 4], strides = [1, 1]} : vector<16x96xf32> to vector<16x4xf32>
    %59 = vector.shape_cast %58 : vector<16x4xf32> to vector<2x8x4xf32>
    %60 = vector.extract_strided_slice %19 {offsets = [0, 72], sizes = [16, 4], strides = [1, 1]} : vector<16x96xf32> to vector<16x4xf32>
    %61 = vector.shape_cast %60 : vector<16x4xf32> to vector<2x8x4xf32>
    %62 = vector.extract_strided_slice %19 {offsets = [0, 76], sizes = [16, 4], strides = [1, 1]} : vector<16x96xf32> to vector<16x4xf32>
    %63 = vector.shape_cast %62 : vector<16x4xf32> to vector<2x8x4xf32>
    %64 = vector.extract_strided_slice %19 {offsets = [0, 80], sizes = [16, 4], strides = [1, 1]} : vector<16x96xf32> to vector<16x4xf32>
    %65 = vector.shape_cast %64 : vector<16x4xf32> to vector<2x8x4xf32>
    %66 = vector.extract_strided_slice %19 {offsets = [0, 84], sizes = [16, 4], strides = [1, 1]} : vector<16x96xf32> to vector<16x4xf32>
    %67 = vector.shape_cast %66 : vector<16x4xf32> to vector<2x8x4xf32>
    %68 = vector.extract_strided_slice %19 {offsets = [0, 88], sizes = [16, 4], strides = [1, 1]} : vector<16x96xf32> to vector<16x4xf32>
    %69 = vector.shape_cast %68 : vector<16x4xf32> to vector<2x8x4xf32>
    %70 = vector.extract_strided_slice %19 {offsets = [0, 92], sizes = [16, 4], strides = [1, 1]} : vector<16x96xf32> to vector<16x4xf32>
    %71 = vector.shape_cast %70 : vector<16x4xf32> to vector<2x8x4xf32>
    %72 = tpu.concatenate %57, %59, %61, %63, %65, %67, %69, %71 in 0 : vector<2x8x4xf32>, vector<2x8x4xf32>, vector<2x8x4xf32>, vector<2x8x4xf32>, vector<2x8x4xf32>, vector<2x8x4xf32>, vector<2x8x4xf32>, vector<2x8x4xf32> -> vector<16x8x4xf32>
    %73 = arith.truncf %72 : vector<16x8x4xf32> to vector<16x8x4xbf16>
    "tpu.trace_start"() <{level = 10 : i32, message = "bqd,bkd->bqk"}> : () -> ()
    %cst_11 = arith.constant dense<0.000000e+00> : vector<16x8x8xf32>
    %74 = tpu.matmul %37, %55, %cst_11 {dimension_numbers = #tpu.dot_dimension_numbers<[2], [2], [1], [1], [0, 0, 0, 1, 1, 1], [0], [0]>} : vector<16x8x4xbf16>, vector<16x8x4xbf16>, vector<16x8x8xf32> -> vector<16x8x8xf32>
    "tpu.trace_stop"() : () -> ()
    %cst_12 = arith.constant 5.000000e-01 : f32
    %75 = vector.broadcast %cst_12 : f32 to vector<16x8x8xf32>
    %76 = arith.mulf %74, %75 : vector<16x8x8xf32>
    %c0_13 = arith.constant 0 : index
    %c0_14 = arith.constant 0 : index
    %c0_15 = arith.constant 0 : index
    %77 = vector.load %arg14[%c0_13, %c0_14, %c0_15] : memref<16x1x8xf32, #tpu.memory_space<vmem>>, vector<16x1x8xf32>
    %78 = vector.broadcast %77 : vector<16x1x8xf32> to vector<16x8x8xf32>
    %79 = arith.addf %76, %78 : vector<16x8x8xf32>
    %cst_16 = arith.constant dense<0xFF800000> : vector<16x8xf32>
    %80 = vector.multi_reduction <maximumf>, %79, %cst_16 [2] : vector<16x8x8xf32> to vector<16x8xf32>
    %81 = vector.shape_cast %80 : vector<16x8xf32> to vector<16x8x1xf32>
    %82 = vector.broadcast %81 : vector<16x8x1xf32> to vector<16x8x8xf32>
    %83 = arith.subf %79, %82 : vector<16x8x8xf32>
    %84 = math.exp %83 : vector<16x8x8xf32>
    %cst_17 = arith.constant dense<0.000000e+00> : vector<16x8xf32>
    %85 = vector.multi_reduction <add>, %84, %cst_17 [2] : vector<16x8x8xf32> to vector<16x8xf32>
    %86 = vector.shape_cast %85 : vector<16x8xf32> to vector<16x8x1xf32>
    %87 = tpu.reciprocal %86 {approx = true} : vector<16x8x1xf32> -> vector<16x8x1xf32>
    %88 = vector.broadcast %87 : vector<16x8x1xf32> to vector<16x8x8xf32>
    %89 = arith.mulf %84, %88 : vector<16x8x8xf32>
    %90 = arith.truncf %89 : vector<16x8x8xf32> to vector<16x8x8xbf16>
    "tpu.trace_start"() <{level = 10 : i32, message = "bqk,bkd->bqd"}> : () -> ()
    %cst_18 = arith.constant dense<0.000000e+00> : vector<16x8x4xf32>
    %91 = tpu.matmul %90, %73, %cst_18 {dimension_numbers = #tpu.dot_dimension_numbers<[2], [1], [1], [2], [0, 0, 0, 1, 1, 2], [0], [0]>} : vector<16x8x8xbf16>, vector<16x8x4xbf16>, vector<16x8x4xf32> -> vector<16x8x4xf32>
    "tpu.trace_stop"() : () -> ()
    %92 = vector.extract_strided_slice %91 {offsets = [0, 0, 0], sizes = [2, 8, 4], strides = [1, 1, 1]} : vector<16x8x4xf32> to vector<2x8x4xf32>
    %93 = vector.extract_strided_slice %91 {offsets = [2, 0, 0], sizes = [2, 8, 4], strides = [1, 1, 1]} : vector<16x8x4xf32> to vector<2x8x4xf32>
    %94 = vector.extract_strided_slice %91 {offsets = [4, 0, 0], sizes = [2, 8, 4], strides = [1, 1, 1]} : vector<16x8x4xf32> to vector<2x8x4xf32>
    %95 = vector.extract_strided_slice %91 {offsets = [6, 0, 0], sizes = [2, 8, 4], strides = [1, 1, 1]} : vector<16x8x4xf32> to vector<2x8x4xf32>
    %96 = vector.extract_strided_slice %91 {offsets = [8, 0, 0], sizes = [2, 8, 4], strides = [1, 1, 1]} : vector<16x8x4xf32> to vector<2x8x4xf32>
    %97 = vector.extract_strided_slice %91 {offsets = [10, 0, 0], sizes = [2, 8, 4], strides = [1, 1, 1]} : vector<16x8x4xf32> to vector<2x8x4xf32>
    %98 = vector.extract_strided_slice %91 {offsets = [12, 0, 0], sizes = [2, 8, 4], strides = [1, 1, 1]} : vector<16x8x4xf32> to vector<2x8x4xf32>
    %99 = vector.extract_strided_slice %91 {offsets = [14, 0, 0], sizes = [2, 8, 4], strides = [1, 1, 1]} : vector<16x8x4xf32> to vector<2x8x4xf32>
    %100 = tpu.concatenate %92, %93, %94, %95, %96, %97, %98, %99 in 2 : vector<2x8x4xf32>, vector<2x8x4xf32>, vector<2x8x4xf32>, vector<2x8x4xf32>, vector<2x8x4xf32>, vector<2x8x4xf32>, vector<2x8x4xf32>, vector<2x8x4xf32> -> vector<2x8x32xf32>
    %101 = vector.shape_cast %100 : vector<2x8x32xf32> to vector<16x32xf32>
    %102 = arith.truncf %101 : vector<16x32xf32> to vector<16x32xbf16>
    %c0_19 = arith.constant 0 : index
    %c0_20 = arith.constant 0 : index
    %c0_21 = arith.constant 0 : index
    %103 = vector.load %arg5[%c0_19, %c0_20, %c0_21] : memref<1x32x32xbf16, #tpu.memory_space<vmem>>, vector<1x32x32xbf16>
    %104 = vector.shape_cast %103 : vector<1x32x32xbf16> to vector<32x32xbf16>
    %cst_22 = arith.constant dense<0.000000e+00> : vector<16x32xf32>
    %105 = tpu.matmul %102, %104, %cst_22 {dimension_numbers = #tpu.dot_dimension_numbers<[1], [0], [0], [1], [0, 0, 1, 1], [], []>} : vector<16x32xbf16>, vector<32x32xbf16>, vector<16x32xf32> -> vector<16x32xf32>
    %106 = vector.broadcast %6 : vector<1x32xf32> to vector<16x32xf32>
    %107 = arith.addf %105, %106 : vector<16x32xf32>
    %108 = arith.addf %3, %107 : vector<16x32xf32>
    %cst_23 = arith.constant dense<0.000000e+00> : vector<16xf32>
    %109 = vector.multi_reduction <add>, %108, %cst_23 [1] : vector<16x32xf32> to vector<16xf32>
    %110 = vector.shape_cast %109 : vector<16xf32> to vector<16x1xf32>
    %cst_24 = arith.constant 3.200000e+01 : f32
    %111 = vector.broadcast %cst_24 : f32 to vector<16x1xf32>
    %112 = arith.divf %110, %111 : vector<16x1xf32>
    %113 = vector.broadcast %112 : vector<16x1xf32> to vector<16x32xf32>
    %114 = arith.subf %108, %113 : vector<16x32xf32>
    %115 = arith.mulf %114, %114 : vector<16x32xf32>
    %cst_25 = arith.constant dense<0.000000e+00> : vector<16xf32>
    %116 = vector.multi_reduction <add>, %115, %cst_25 [1] : vector<16x32xf32> to vector<16xf32>
    %117 = vector.shape_cast %116 : vector<16xf32> to vector<16x1xf32>
    %cst_26 = arith.constant 3.200000e+01 : f32
    %118 = vector.broadcast %cst_26 : f32 to vector<16x1xf32>
    %119 = arith.divf %117, %118 : vector<16x1xf32>
    %120 = vector.broadcast %112 : vector<16x1xf32> to vector<16x32xf32>
    %121 = arith.subf %108, %120 : vector<16x32xf32>
    %cst_27 = arith.constant 9.99999974E-6 : f32
    %122 = vector.broadcast %cst_27 : f32 to vector<16x1xf32>
    %123 = arith.addf %119, %122 : vector<16x1xf32>
    %124 = math.rsqrt %123 : vector<16x1xf32>
    %125 = vector.broadcast %124 : vector<16x1xf32> to vector<16x32xf32>
    %126 = arith.mulf %121, %125 : vector<16x32xf32>
    %127 = vector.broadcast %7 : vector<1x32xf32> to vector<16x32xf32>
    %128 = arith.mulf %126, %127 : vector<16x32xf32>
    %129 = vector.broadcast %8 : vector<1x32xf32> to vector<16x32xf32>
    %130 = arith.addf %128, %129 : vector<16x32xf32>
    %131 = arith.truncf %130 : vector<16x32xf32> to vector<16x32xbf16>
    %c0_28 = arith.constant 0 : index
    %c0_29 = arith.constant 0 : index
    %c0_30 = arith.constant 0 : index
    %132 = vector.load %arg7[%c0_28, %c0_29, %c0_30] : memref<1x32x64xbf16, #tpu.memory_space<vmem>>, vector<1x32x64xbf16>
    %133 = vector.shape_cast %132 : vector<1x32x64xbf16> to vector<32x64xbf16>
    %cst_31 = arith.constant dense<0.000000e+00> : vector<16x64xf32>
    %134 = tpu.matmul %131, %133, %cst_31 {dimension_numbers = #tpu.dot_dimension_numbers<[1], [0], [0], [1], [0, 0, 1, 1], [], []>} : vector<16x32xbf16>, vector<32x64xbf16>, vector<16x64xf32> -> vector<16x64xf32>
    %c0_32 = arith.constant 0 : index
    %c0_33 = arith.constant 0 : index
    %c0_34 = arith.constant 0 : index
    %135 = vector.load %arg8[%c0_32, %c0_33, %c0_34] : memref<1x1x64xf32, #tpu.memory_space<vmem>>, vector<1x1x64xf32>
    %136 = vector.shape_cast %135 : vector<1x1x64xf32> to vector<1x64xf32>
    %137 = vector.broadcast %136 : vector<1x64xf32> to vector<16x64xf32>
    %138 = arith.addf %134, %137 : vector<16x64xf32>
    %cst_35 = arith.constant 0.000000e+00 : f32
    %139 = vector.broadcast %cst_35 : f32 to vector<16x64xf32>
    %140 = arith.maximumf %138, %139 : vector<16x64xf32>
    %141 = arith.truncf %140 : vector<16x64xf32> to vector<16x64xbf16>
    %c0_36 = arith.constant 0 : index
    %c0_37 = arith.constant 0 : index
    %c0_38 = arith.constant 0 : index
    %142 = vector.load %arg9[%c0_36, %c0_37, %c0_38] : memref<1x64x32xbf16, #tpu.memory_space<vmem>>, vector<1x64x32xbf16>
    %143 = vector.shape_cast %142 : vector<1x64x32xbf16> to vector<64x32xbf16>
    %cst_39 = arith.constant dense<0.000000e+00> : vector<16x32xf32>
    %144 = tpu.matmul %141, %143, %cst_39 {dimension_numbers = #tpu.dot_dimension_numbers<[1], [0], [0], [1], [0, 0, 1, 1], [], []>} : vector<16x64xbf16>, vector<64x32xbf16>, vector<16x32xf32> -> vector<16x32xf32>
    %145 = vector.broadcast %9 : vector<1x32xf32> to vector<16x32xf32>
    %146 = arith.addf %144, %145 : vector<16x32xf32>
    %147 = arith.addf %130, %146 : vector<16x32xf32>
    %cst_40 = arith.constant dense<0.000000e+00> : vector<16xf32>
    %148 = vector.multi_reduction <add>, %147, %cst_40 [1] : vector<16x32xf32> to vector<16xf32>
    %149 = vector.shape_cast %148 : vector<16xf32> to vector<16x1xf32>
    %cst_41 = arith.constant 3.200000e+01 : f32
    %150 = vector.broadcast %cst_41 : f32 to vector<16x1xf32>
    %151 = arith.divf %149, %150 : vector<16x1xf32>
    %152 = vector.broadcast %151 : vector<16x1xf32> to vector<16x32xf32>
    %153 = arith.subf %147, %152 : vector<16x32xf32>
    %154 = arith.mulf %153, %153 : vector<16x32xf32>
    %cst_42 = arith.constant dense<0.000000e+00> : vector<16xf32>
    %155 = vector.multi_reduction <add>, %154, %cst_42 [1] : vector<16x32xf32> to vector<16xf32>
    %156 = vector.shape_cast %155 : vector<16xf32> to vector<16x1xf32>
    %cst_43 = arith.constant 3.200000e+01 : f32
    %157 = vector.broadcast %cst_43 : f32 to vector<16x1xf32>
    %158 = arith.divf %156, %157 : vector<16x1xf32>
    %159 = vector.broadcast %151 : vector<16x1xf32> to vector<16x32xf32>
    %160 = arith.subf %147, %159 : vector<16x32xf32>
    %cst_44 = arith.constant 9.99999974E-6 : f32
    %161 = vector.broadcast %cst_44 : f32 to vector<16x1xf32>
    %162 = arith.addf %158, %161 : vector<16x1xf32>
    %163 = math.rsqrt %162 : vector<16x1xf32>
    %164 = vector.broadcast %163 : vector<16x1xf32> to vector<16x32xf32>
    %165 = arith.mulf %160, %164 : vector<16x32xf32>
    %166 = vector.broadcast %10 : vector<1x32xf32> to vector<16x32xf32>
    %167 = arith.mulf %165, %166 : vector<16x32xf32>
    %168 = vector.broadcast %11 : vector<1x32xf32> to vector<16x32xf32>
    %169 = arith.addf %167, %168 : vector<16x32xf32>
    %c0_45 = arith.constant 0 : index
    %c0_46 = arith.constant 0 : index
    %170 = vector.load %arg13[%c0_45, %c0_46] : memref<16x32xf32, #tpu.memory_space<vmem>>, vector<16x32xf32>
    tpu.vector_store %arg13[%c0_45, %c0_46], %169 {strides = array<i32>} : memref<16x32xf32, #tpu.memory_space<vmem>>, vector<16x32xf32>,
    %c1_i32 = arith.constant 1 : i32
    %171 = arith.cmpi eq, %arg0, %c1_i32 : i32
    %172 = arith.extui %171 : i1 to i32
    %c0_i32_47 = arith.constant 0 : i32
    %173 = arith.cmpi ne, %172, %c0_i32_47 : i32
    scf.if %173 {
      %174 = arith.truncf %169 : vector<16x32xf32> to vector<16x32xbf16>
      %c0_48 = arith.constant 0 : index
      %c0_49 = arith.constant 0 : index
      %175 = vector.load %arg10[%c0_48, %c0_49] : memref<32x128xbf16, #tpu.memory_space<vmem>>, vector<32x128xbf16>
      %cst_50 = arith.constant dense<0.000000e+00> : vector<16x128xf32>
      %176 = tpu.matmul %174, %175, %cst_50 {dimension_numbers = #tpu.dot_dimension_numbers<[1], [0], [0], [1], [0, 0, 1, 1], [], []>} : vector<16x32xbf16>, vector<32x128xbf16>, vector<16x128xf32> -> vector<16x128xf32>
      %c0_51 = arith.constant 0 : index
      %c0_52 = arith.constant 0 : index
      %177 = vector.load %arg11[%c0_51, %c0_52] : memref<1x128xf32, #tpu.memory_space<vmem>>, vector<1x128xf32>
      %178 = vector.broadcast %177 : vector<1x128xf32> to vector<16x128xf32>
      %179 = arith.addf %176, %178 : vector<16x128xf32>
      %c0_53 = arith.constant 0 : index
      %c0_54 = arith.constant 0 : index
      %180 = vector.load %arg12[%c0_53, %c0_54] : memref<16x128xf32, #tpu.memory_space<vmem>>, vector<16x128xf32>
      tpu.vector_store %arg12[%c0_53, %c0_54], %179 {strides = array<i32>} : memref<16x128xf32, #tpu.memory_space<vmem>>, vector<16x128xf32>,
    } else {
    }
    return
  }
  func.func @transform_0(%arg0: i32) -> (i32, i32, i32) {
    %c0_i32 = arith.constant 0 : i32
    %c0_i32_0 = arith.constant 0 : i32
    %c0_i32_1 = arith.constant 0 : i32
    %c0_i32_2 = arith.constant 0 : i32
    return %c0_i32, %c0_i32_0, %c0_i32_1 : i32, i32, i32
  }
  func.func @transform_1(%arg0: i32) -> (i32, i32, i32) {
    %c0_i32 = arith.constant 0 : i32
    %c0_i32_0 = arith.constant 0 : i32
    %c0_i32_1 = arith.constant 0 : i32
    %c0_i32_2 = arith.constant 0 : i32
    return %c0_i32, %c0_i32_0, %c0_i32_1 : i32, i32, i32
  }
  func.func @transform_2(%arg0: i32) -> (i32, i32, i32) {
    %c0_i32 = arith.constant 0 : i32
    %c0_i32_0 = arith.constant 0 : i32
    %c0_i32_1 = arith.constant 0 : i32
    return %arg0, %c0_i32, %c0_i32_0 : i32, i32, i32
  }
  func.func @transform_3(%arg0: i32) -> (i32, i32, i32) {
    %c0_i32 = arith.constant 0 : i32
    %c0_i32_0 = arith.constant 0 : i32
    %c0_i32_1 = arith.constant 0 : i32
    return %arg0, %c0_i32, %c0_i32_0 : i32, i32, i32
  }
  func.func @transform_4(%arg0: i32) -> (i32, i32, i32) {
    %c0_i32 = arith.constant 0 : i32
    %c0_i32_0 = arith.constant 0 : i32
    %c0_i32_1 = arith.constant 0 : i32
    return %arg0, %c0_i32, %c0_i32_0 : i32, i32, i32
  }
  func.func @transform_5(%arg0: i32) -> (i32, i32, i32) {
    %c0_i32 = arith.constant 0 : i32
    %c0_i32_0 = arith.constant 0 : i32
    %c0_i32_1 = arith.constant 0 : i32
    return %arg0, %c0_i32, %c0_i32_0 : i32, i32, i32
  }
  func.func @transform_6(%arg0: i32) -> (i32, i32, i32) {
    %c0_i32 = arith.constant 0 : i32
    %c0_i32_0 = arith.constant 0 : i32
    %c0_i32_1 = arith.constant 0 : i32
    return %arg0, %c0_i32, %c0_i32_0 : i32, i32, i32
  }
  func.func @transform_7(%arg0: i32) -> (i32, i32, i32) {
    %c0_i32 = arith.constant 0 : i32
    %c0_i32_0 = arith.constant 0 : i32
    %c0_i32_1 = arith.constant 0 : i32
    return %arg0, %c0_i32, %c0_i32_0 : i32, i32, i32
  }
  func.func @transform_8(%arg0: i32) -> (i32, i32, i32) {
    %c0_i32 = arith.constant 0 : i32
    %c0_i32_0 = arith.constant 0 : i32
    %c0_i32_1 = arith.constant 0 : i32
    return %arg0, %c0_i32, %c0_i32_0 : i32, i32, i32
  }
  func.func @transform_9(%arg0: i32) -> (i32, i32) {
    %c0_i32 = arith.constant 0 : i32
    %c0_i32_0 = arith.constant 0 : i32
    %c0_i32_1 = arith.constant 0 : i32
    return %c0_i32, %c0_i32_0 : i32, i32
  }
  func.func @transform_10(%arg0: i32) -> (i32, i32) {
    %c0_i32 = arith.constant 0 : i32
    %c0_i32_0 = arith.constant 0 : i32
    %c0_i32_1 = arith.constant 0 : i32
    return %c0_i32, %c0_i32_0 : i32, i32
  }
  func.func @transform_11(%arg0: i32) -> (i32, i32) {
    %c0_i32 = arith.constant 0 : i32
    %c0_i32_0 = arith.constant 0 : i32
    %c0_i32_1 = arith.constant 0 : i32
    return %c0_i32, %c0_i32_0 : i32, i32
  }
}

</mosaic_0001>

<llo_original>
// kernel: tpu_custom_call.1
$region0: #{tpu_custom_call.1}
  #allocation0 [shape = 'u32[]', space=smem, size = 0x4, offset = 0x4, fixed_abs, tag = 'smem constant byte address 0x4 - core index']
  #allocation1 [shape = 'u32[144,128]{1,0:T(1,128)}', space=vmem, size = 0x12000, scoped, tag = 'internal scratch']
  #allocation2 [shape = 'f32[16,32]{1,0:T(8,128)}', space=vmem, size = 0x2000, scoped, tag = 'scratch operand']
  #allocation3 [shape = 'f32[16,1,8]{2,1,0:T(1,128)}', space=vmem, size = 0x2000, scoped, tag = 'scratch operand']
  %s0 = inlined_call_operand.hbm [shape: f32[2,8,32], index: 0, kind: input, shape index: {}]
  %s1 = inlined_call_operand.vmem [shape: f32[2,1,8], index: 1, kind: input, shape index: {}]
  %s2 = inlined_call_operand.vmem [shape: bf16[2,32,96], index: 2, kind: input, shape index: {}]
  %s3 = inlined_call_operand.vmem [shape: f32[2,1,96], index: 3, kind: input, shape index: {}]
  %s4 = inlined_call_operand.vmem [shape: bf16[2,32,32], index: 4, kind: input, shape index: {}]
  %s5 = inlined_call_operand.vmem [shape: f32[2,6,32], index: 5, kind: input, shape index: {}]
  %s6 = inlined_call_operand.vmem [shape: bf16[2,32,64], index: 6, kind: input, shape index: {}]
  %s7 = inlined_call_operand.vmem [shape: f32[2,1,64], index: 7, kind: input, shape index: {}]
  %s8 = inlined_call_operand.vmem [shape: bf16[2,64,32], index: 8, kind: input, shape index: {}]
  %s9 = inlined_call_operand.hbm [shape: bf16[32,128], index: 9, kind: input, shape index: {}]
  %s10 = inlined_call_operand.vmem [shape: f32[1,128], index: 10, kind: input, shape index: {}]
  %s11 = inlined_call_operand.hbm [shape: f32[16,128], index: 11, kind: output, shape index: {}]
  %s12 = sld [smem:[#allocation0]]
  $region93: #{tpu_custom_call.1} parent=0
    _
  %s14 = ssub.s32 1, %s12
  %s15 = scalar_select 0, %s14, %s12
  $region1: #{tpu_custom_call.1} parent=0
    #allocation4 [shape = 'u8[8192]{0}', space=vmem, size = 0x2000, scoped, tag = 'input window, operand 0, single buffered']
    #allocation5 [shape = 's32[2]{0}', space=sflag, size = 0x8, scoped, tag = 'scoped memory for tpu_custom_call.1']
    #allocation6 [shape = 's32[2]{0}', space=sflag, size = 0x8, scoped, tag = 'scoped memory for tpu_custom_call.1']
    #allocation7 [shape = 'u8[8192]{0}', space=vmem, size = 0x2000, scoped, tag = 'input window, operand 9, single buffered']
    #allocation8 [shape = 's32[1]{0}', space=sflag, size = 0x4, scoped, tag = 'scoped memory for tpu_custom_call.1']
    #allocation9 [shape = 'u8[8192]{0}', space=vmem, size = 0x2000, scoped, tag = 'output window, operand 0, single buffered']
    %16 = vsyncpa [#allocation5], 0
    %17 = vsyncpa [#allocation8], 0
    %18 = vsyncpa [#allocation6], 0
    loop: start=0, step=1, limit=4
    $region2: #{tpu_custom_call.1} parent=1 // loop_pre_header
      _
    $region3: #{tpu_custom_call.1} parent=1 // loop_header
      %s20 = sphi 0, %s24
      %p21 = scmp.ge.s32.totalorder %s20, 4
      %s28 = sphi 0, %s28
      %s30 = sphi 0, %s28
      %s31 = sphi 0, %s30
      %s45 = sphi 0, %s31
      %s49 = sphi 0, %s49
      %s51 = sphi 0, %s49
      %s52 = sphi 0, %s51
      %s66 = sphi 0, %s52
      %s72 = sphi 0, %s74
      %s75 = sphi 0, %s72
      %s76 = sphi 0, %s75
      %s92 = sphi 0, %s76
      %s98 = sphi 0, %s100
      %s101 = sphi 0, %s98
      %s102 = sphi 0, %s101
      %s118 = sphi 0, %s102
      %s124 = sphi 0, %s126
      %s127 = sphi 0, %s124
      %s128 = sphi 0, %s127
      %s144 = sphi 0, %s128
      %s150 = sphi 0, %s152
      %s153 = sphi 0, %s150
      %s154 = sphi 0, %s153
      %s170 = sphi 0, %s154
      %s176 = sphi 0, %s178
      %s179 = sphi 0, %s176
      %s180 = sphi 0, %s179
      %s196 = sphi 0, %s180
      %s202 = sphi 0, %s204
      %s205 = sphi 0, %s202
      %s206 = sphi 0, %s205
      %s222 = sphi 0, %s206
      %s228 = sphi 0, %s230
      %s231 = sphi 0, %s228
      %s232 = sphi 0, %s231
      %s248 = sphi 0, %s232
      %s252 = sphi 0, %s252
      %s254 = sphi 0, %s252
      %s255 = sphi 0, %s254
      %s269 = sphi 0, %s255
      %s273 = sphi 0, %s273
      %s275 = sphi 0, %s273
      %s276 = sphi 0, %s275
      %s290 = sphi 0, %s276
      %s294 = sphi 0, %s294
      %s296 = sphi 0, %s294
      %s297 = sphi 0, %s296
      %s311 = sphi 0, %s297
    $region4: #{tpu_custom_call.1} parent=1 // loop_header_branch
      %23 = sbr.rel (%p21) target = $region8
    $region5: #{tpu_custom_call.1} parent=1 // loop_body
      %s25 = ssub.s32 %s20, 1
      %s26 = ssub.s32 %s20, 2
      %s27 = sadd.s32 %s20, 1
      %s29 = sadd.s32 %s28, 1
      %p32 = scmp.eq.s32.totalorder %s20, 1
      %p33 = scmp.ne.s32.totalorder %s28, %s30
      %p34 = scmp.eq.s32.totalorder %s20, 0
      %p35 = por %p33, %p34
      %p36 = scmp.ne.s32.totalorder %s28, %s30
      %p37 = scmp.eq.s32.totalorder %s25, 1
      %p38 = por %p36, %p37
      %p39 = scmp.ne.s32.totalorder %s30, %s31
      %p40 = scmp.eq.s32.totalorder %s25, 0
      %p41 = por %p39, %p40
      %p42 = scmp.ne.s32.totalorder %s30, %s31
      %p43 = scmp.eq.s32.totalorder %s26, 1
      %p44 = por %p42, %p43
      %p46 = scmp.ne.s32.totalorder %s31, %s45
      %p47 = scmp.eq.s32.totalorder %s26, 0
      %p48 = por %p46, %p47
      %s50 = sadd.s32 %s49, 1
      %p53 = scmp.eq.s32.totalorder %s20, 1
      %p54 = scmp.ne.s32.totalorder %s49, %s51
      %p55 = scmp.eq.s32.totalorder %s20, 0
      %p56 = por %p54, %p55
      %p57 = scmp.ne.s32.totalorder %s49, %s51
      %p58 = scmp.eq.s32.totalorder %s25, 1
      %p59 = por %p57, %p58
      %p60 = scmp.ne.s32.totalorder %s51, %s52
      %p61 = scmp.eq.s32.totalorder %s25, 0
      %p62 = por %p60, %p61
      %p63 = scmp.ne.s32.totalorder %s51, %s52
      %p64 = scmp.eq.s32.totalorder %s26, 1
      %p65 = por %p63, %p64
      %p67 = scmp.ne.s32.totalorder %s52, %s66
      %p68 = scmp.eq.s32.totalorder %s26, 0
      %p69 = por %p67, %p68
      %s70 = ssub.s32 %s20, %s27
      %p71 = scmp.eq.s32.totalorder %s70, 0
      %s73 = sadd.s32 %s72, 1
      %s74 = scalar_select %p71, %s72, %s73
      %p77 = pneg %p71
      %p78 = scmp.eq.s32.totalorder %s20, 1
      %p79 = por %p77, %p78
      %p80 = scmp.ne.s32.totalorder %s72, %s75
      %p81 = scmp.eq.s32.totalorder %s20, 0
      %p82 = por %p80, %p81
      %p83 = scmp.ne.s32.totalorder %s72, %s75
      %p84 = scmp.eq.s32.totalorder %s25, 1
      %p85 = por %p83, %p84
      %p86 = scmp.ne.s32.totalorder %s75, %s76
      %p87 = scmp.eq.s32.totalorder %s25, 0
      %p88 = por %p86, %p87
      %p89 = scmp.ne.s32.totalorder %s75, %s76
      %p90 = scmp.eq.s32.totalorder %s26, 1
      %p91 = por %p89, %p90
      %p93 = scmp.ne.s32.totalorder %s76, %s92
      %p94 = scmp.eq.s32.totalorder %s26, 0
      %p95 = por %p93, %p94
      %s96 = ssub.s32 %s20, %s27
      %p97 = scmp.eq.s32.totalorder %s96, 0
      %s99 = sadd.s32 %s98, 1
      %s100 = scalar_select %p97, %s98, %s99
      %p103 = pneg %p97
      %p104 = scmp.eq.s32.totalorder %s20, 1
      %p105 = por %p103, %p104
      %p106 = scmp.ne.s32.totalorder %s98, %s101
      %p107 = scmp.eq.s32.totalorder %s20, 0
      %p108 = por %p106, %p107
      %p109 = scmp.ne.s32.totalorder %s98, %s101
      %p110 = scmp.eq.s32.totalorder %s25, 1
      %p111 = por %p109, %p110
      %p112 = scmp.ne.s32.totalorder %s101, %s102
      %p113 = scmp.eq.s32.totalorder %s25, 0
      %p114 = por %p112, %p113
      %p115 = scmp.ne.s32.totalorder %s101, %s102
      %p116 = scmp.eq.s32.totalorder %s26, 1
      %p117 = por %p115, %p116
      %p119 = scmp.ne.s32.totalorder %s102, %s118
      %p120 = scmp.eq.s32.totalorder %s26, 0
      %p121 = por %p119, %p120
      %s122 = ssub.s32 %s20, %s27
      %p123 = scmp.eq.s32.totalorder %s122, 0
      %s125 = sadd.s32 %s124, 1
      %s126 = scalar_select %p123, %s124, %s125
      %p129 = pneg %p123
      %p130 = scmp.eq.s32.totalorder %s20, 1
      %p131 = por %p129, %p130
      %p132 = scmp.ne.s32.totalorder %s124, %s127
      %p133 = scmp.eq.s32.totalorder %s20, 0
      %p134 = por %p132, %p133
      %p135 = scmp.ne.s32.totalorder %s124, %s127
      %p136 = scmp.eq.s32.totalorder %s25, 1
      %p137 = por %p135, %p136
      %p138 = scmp.ne.s32.totalorder %s127, %s128
      %p139 = scmp.eq.s32.totalorder %s25, 0
      %p140 = por %p138, %p139
      %p141 = scmp.ne.s32.totalorder %s127, %s128
      %p142 = scmp.eq.s32.totalorder %s26, 1
      %p143 = por %p141, %p142
      %p145 = scmp.ne.s32.totalorder %s128, %s144
      %p146 = scmp.eq.s32.totalorder %s26, 0
      %p147 = por %p145, %p146
      %s148 = ssub.s32 %s20, %s27
      %p149 = scmp.eq.s32.totalorder %s148, 0
      %s151 = sadd.s32 %s150, 1
      %s152 = scalar_select %p149, %s150, %s151
      %p155 = pneg %p149
      %p156 = scmp.eq.s32.totalorder %s20, 1
      %p157 = por %p155, %p156
      %p158 = scmp.ne.s32.totalorder %s150, %s153
      %p159 = scmp.eq.s32.totalorder %s20, 0
      %p160 = por %p158, %p159
      %p161 = scmp.ne.s32.totalorder %s150, %s153
      %p162 = scmp.eq.s32.totalorder %s25, 1
      %p163 = por %p161, %p162
      %p164 = scmp.ne.s32.totalorder %s153, %s154
      %p165 = scmp.eq.s32.totalorder %s25, 0
      %p166 = por %p164, %p165
      %p167 = scmp.ne.s32.totalorder %s153, %s154
      %p168 = scmp.eq.s32.totalorder %s26, 1
      %p169 = por %p167, %p168
      %p171 = scmp.ne.s32.totalorder %s154, %s170
      %p172 = scmp.eq.s32.totalorder %s26, 0
      %p173 = por %p171, %p172
      %s174 = ssub.s32 %s20, %s27
      %p175 = scmp.eq.s32.totalorder %s174, 0
      %s177 = sadd.s32 %s176, 1
      %s178 = scalar_select %p175, %s176, %s177
      %p181 = pneg %p175
      %p182 = scmp.eq.s32.totalorder %s20, 1
      %p183 = por %p181, %p182
      %p184 = scmp.ne.s32.totalorder %s176, %s179
      %p185 = scmp.eq.s32.totalorder %s20, 0
      %p186 = por %p184, %p185
      %p187 = scmp.ne.s32.totalorder %s176, %s179
      %p188 = scmp.eq.s32.totalorder %s25, 1
      %p189 = por %p187, %p188
      %p190 = scmp.ne.s32.totalorder %s179, %s180
      %p191 = scmp.eq.s32.totalorder %s25, 0
      %p192 = por %p190, %p191
      %p193 = scmp.ne.s32.totalorder %s179, %s180
      %p194 = scmp.eq.s32.totalorder %s26, 1
      %p195 = por %p193, %p194
      %p197 = scmp.ne.s32.totalorder %s180, %s196
      %p198 = scmp.eq.s32.totalorder %s26, 0
      %p199 = por %p197, %p198
      %s200 = ssub.s32 %s20, %s27
      %p201 = scmp.eq.s32.totalorder %s200, 0
      %s203 = sadd.s32 %s202, 1
      %s204 = scalar_select %p201, %s202, %s203
      %p207 = pneg %p201
      %p208 = scmp.eq.s32.totalorder %s20, 1
      %p209 = por %p207, %p208
      %p210 = scmp.ne.s32.totalorder %s202, %s205
      %p211 = scmp.eq.s32.totalorder %s20, 0
      %p212 = por %p210, %p211
      %p213 = scmp.ne.s32.totalorder %s202, %s205
      %p214 = scmp.eq.s32.totalorder %s25, 1
      %p215 = por %p213, %p214
      %p216 = scmp.ne.s32.totalorder %s205, %s206
      %p217 = scmp.eq.s32.totalorder %s25, 0
      %p218 = por %p216, %p217
      %p219 = scmp.ne.s32.totalorder %s205, %s206
      %p220 = scmp.eq.s32.totalorder %s26, 1
      %p221 = por %p219, %p220
      %p223 = scmp.ne.s32.totalorder %s206, %s222
      %p224 = scmp.eq.s32.totalorder %s26, 0
      %p225 = por %p223, %p224
      %s226 = ssub.s32 %s20, %s27
      %p227 = scmp.eq.s32.totalorder %s226, 0
      %s229 = sadd.s32 %s228, 1
      %s230 = scalar_select %p227, %s228, %s229
      %p233 = pneg %p227
      %p234 = scmp.eq.s32.totalorder %s20, 1
      %p235 = por %p233, %p234
      %p236 = scmp.ne.s32.totalorder %s228, %s231
      %p237 = scmp.eq.s32.totalorder %s20, 0
      %p238 = por %p236, %p237
      %p239 = scmp.ne.s32.totalorder %s228, %s231
      %p240 = scmp.eq.s32.totalorder %s25, 1
      %p241 = por %p239, %p240
      %p242 = scmp.ne.s32.totalorder %s231, %s232
      %p243 = scmp.eq.s32.totalorder %s25, 0
      %p244 = por %p242, %p243
      %p245 = scmp.ne.s32.totalorder %s231, %s232
      %p246 = scmp.eq.s32.totalorder %s26, 1
      %p247 = por %p245, %p246
      %p249 = scmp.ne.s32.totalorder %s232, %s248
      %p250 = scmp.eq.s32.totalorder %s26, 0
      %p251 = por %p249, %p250
      %s253 = sadd.s32 %s252, 1
      %p256 = scmp.eq.s32.totalorder %s20, 1
      %p257 = scmp.ne.s32.totalorder %s252, %s254
      %p258 = scmp.eq.s32.totalorder %s20, 0
      %p259 = por %p257, %p258
      %p260 = scmp.ne.s32.totalorder %s252, %s254
      %p261 = scmp.eq.s32.totalorder %s25, 1
      %p262 = por %p260, %p261
      %p263 = scmp.ne.s32.totalorder %s254, %s255
      %p264 = scmp.eq.s32.totalorder %s25, 0
      %p265 = por %p263, %p264
      %p266 = scmp.ne.s32.totalorder %s254, %s255
      %p267 = scmp.eq.s32.totalorder %s26, 1
      %p268 = por %p266, %p267
      %p270 = scmp.ne.s32.totalorder %s255, %s269
      %p271 = scmp.eq.s32.totalorder %s26, 0
      %p272 = por %p270, %p271
      %s274 = sadd.s32 %s273, 1
      %p277 = scmp.eq.s32.totalorder %s20, 1
      %p278 = scmp.ne.s32.totalorder %s273, %s275
      %p279 = scmp.eq.s32.totalorder %s20, 0
      %p280 = por %p278, %p279
      %p281 = scmp.ne.s32.totalorder %s273, %s275
      %p282 = scmp.eq.s32.totalorder %s25, 1
      %p283 = por %p281, %p282
      %p284 = scmp.ne.s32.totalorder %s275, %s276
      %p285 = scmp.eq.s32.totalorder %s25, 0
      %p286 = por %p284, %p285
      %p287 = scmp.ne.s32.totalorder %s275, %s276
      %p288 = scmp.eq.s32.totalorder %s26, 1
      %p289 = por %p287, %p288
      %p291 = scmp.ne.s32.totalorder %s276, %s290
      %p292 = scmp.eq.s32.totalorder %s26, 0
      %p293 = por %p291, %p292
      %s295 = sadd.s32 %s294, 1
      %p298 = scmp.eq.s32.totalorder %s20, 1
      %p299 = scmp.ne.s32.totalorder %s294, %s296
      %p300 = scmp.eq.s32.totalorder %s20, 0
      %p301 = por %p299, %p300
      %p302 = scmp.ne.s32.totalorder %s294, %s296
      %p303 = scmp.eq.s32.totalorder %s25, 1
      %p304 = por %p302, %p303
      %p305 = scmp.ne.s32.totalorder %s296, %s297
      %p306 = scmp.eq.s32.totalorder %s25, 0
      %p307 = por %p305, %p306
      %p308 = scmp.ne.s32.totalorder %s296, %s297
      %p309 = scmp.eq.s32.totalorder %s26, 1
      %p310 = por %p308, %p309
      %p312 = scmp.ne.s32.totalorder %s297, %s311
      %p313 = scmp.eq.s32.totalorder %s26, 0
      %p314 = por %p312, %p313
      %p315 = scmp.le.s32.totalorder 1, %s20
      %p316 = scmp.lt.s32.totalorder %s20, 3
      %p317 = pnand %p315, %p316
      %p318 = pneg %p317
      // Predicated region
      $region9: #{tpu_custom_call.1} parent=5 // pred_check
        _
      $region10: #{tpu_custom_call.1} parent=5 // pred_check_branch
        %320 = sbr.rel (%p317) target = $region12
      $region11: #{tpu_custom_call.1} parent=5 // pred_region
        %s321 = ssub.s32 %s20, 1
        // Predicated region
        $region13: #{tpu_custom_call.1} parent=11 // pred_check
          %p322 = pneg %p41
        $region14: #{tpu_custom_call.1} parent=11 // pred_check_branch
          %324 = sbr.rel (%p322) target = $region16
        $region15: #{tpu_custom_call.1} parent=11 // pred_region
          %s326 = ssub.s32 256, 256
          %327 = vsyncadd [#allocation5], %s326
          %s328 = sshll.u32 [#allocation4], 4
          %s329 = int_to_ptr.vmem [resolvable:$true] %s328
          %334 = dma.hbm_to_vmem [thread:$0]  %s0, 256, %s329, [#allocation5], 128, 128, 8
        $region16: #{tpu_custom_call.1} parent=11 // pred_fallthru
          _
        // Predicated region
        $region17: #{tpu_custom_call.1} parent=11 // pred_check
          %p335 = pneg %p62
        $region18: #{tpu_custom_call.1} parent=11 // pred_check_branch
          %337 = sbr.rel (%p335) target = $region20
        $region19: #{tpu_custom_call.1} parent=11 // pred_region
          _
        $region20: #{tpu_custom_call.1} parent=11 // pred_fallthru
          _
        // Predicated region
        $region21: #{tpu_custom_call.1} parent=11 // pred_check
          %p338 = pneg %p265
        $region22: #{tpu_custom_call.1} parent=11 // pred_check_branch
          %340 = sbr.rel (%p338) target = $region24
        $region23: #{tpu_custom_call.1} parent=11 // pred_region
          %s342 = ssub.s32 256, 256
          %343 = vsyncadd [#allocation8], %s342
          %s344 = sshll.u32 [#allocation7], 4
          %s345 = int_to_ptr.vmem [resolvable:$true] %s344
          %350 = dma.hbm_to_vmem [thread:$0]  %s9, 256, %s345, [#allocation8], 64, 64, 4
        $region24: #{tpu_custom_call.1} parent=11 // pred_fallthru
          _
        // Predicated region
        $region25: #{tpu_custom_call.1} parent=11 // pred_check
          %p351 = pneg %p286
        $region26: #{tpu_custom_call.1} parent=11 // pred_check_branch
          %353 = sbr.rel (%p351) target = $region28
        $region27: #{tpu_custom_call.1} parent=11 // pred_region
          _
        $region28: #{tpu_custom_call.1} parent=11 // pred_fallthru
          _
      $region12: #{tpu_custom_call.1} parent=5 // pred_fallthru
        _
      %p354 = scmp.lt.s32.totalorder %s20, 2
      // Predicated region
      $region29: #{tpu_custom_call.1} parent=5 // pred_check
        %p355 = pneg %p354
      $region30: #{tpu_custom_call.1} parent=5 // pred_check_branch
        %357 = sbr.rel (%p355) target = $region32
      $region31: #{tpu_custom_call.1} parent=5 // pred_region
        // Predicated region
        $region33: #{tpu_custom_call.1} parent=31 // pred_check
          %p358 = pneg %p82
        $region34: #{tpu_custom_call.1} parent=31 // pred_check_branch
          %360 = sbr.rel (%p358) target = $region36
        $region35: #{tpu_custom_call.1} parent=31 // pred_region
          %p361 = scmp.lt.s32.totalorder %s20, 1
          %s362 = scalar_select %p361, %s20, 1
          %s363 = smul.addr %s362, 4
          %s364 = smul.addr %s363, 4
          %s365 = scalar_lea.vmem %s2, %s364
        $region36: #{tpu_custom_call.1} parent=31 // pred_fallthru
          _
        // Predicated region
        $region37: #{tpu_custom_call.1} parent=31 // pred_check
          %p366 = pneg %p108
        $region38: #{tpu_custom_call.1} parent=31 // pred_check_branch
          %368 = sbr.rel (%p366) target = $region40
        $region39: #{tpu_custom_call.1} parent=31 // pred_region
          %p369 = scmp.lt.s32.totalorder %s20, 1
          %s370 = scalar_select %p369, %s20, 1
          %s371 = scalar_lea.vmem %s3, %s370
        $region40: #{tpu_custom_call.1} parent=31 // pred_fallthru
          _
        // Predicated region
        $region41: #{tpu_custom_call.1} parent=31 // pred_check
          %p372 = pneg %p134
        $region42: #{tpu_custom_call.1} parent=31 // pred_check_branch
          %374 = sbr.rel (%p372) target = $region44
        $region43: #{tpu_custom_call.1} parent=31 // pred_region
          %p375 = scmp.lt.s32.totalorder %s20, 1
          %s376 = scalar_select %p375, %s20, 1
          %s377 = smul.addr %s376, 4
          %s378 = smul.addr %s377, 4
          %s379 = scalar_lea.vmem %s4, %s378
        $region44: #{tpu_custom_call.1} parent=31 // pred_fallthru
          _
        // Predicated region
        $region45: #{tpu_custom_call.1} parent=31 // pred_check
          %p380 = pneg %p160
        $region46: #{tpu_custom_call.1} parent=31 // pred_check_branch
          %382 = sbr.rel (%p380) target = $region48
        $region47: #{tpu_custom_call.1} parent=31 // pred_region
          %p383 = scmp.lt.s32.totalorder %s20, 1
          %s384 = scalar_select %p383, %s20, 1
          %s385 = smul.addr %s384, 8
          %s386 = scalar_lea.vmem %s5, %s385
        $region48: #{tpu_custom_call.1} parent=31 // pred_fallthru
          _
        // Predicated region
        $region49: #{tpu_custom_call.1} parent=31 // pred_check
          %p387 = pneg %p186
        $region50: #{tpu_custom_call.1} parent=31 // pred_check_branch
          %389 = sbr.rel (%p387) target = $region52
        $region51: #{tpu_custom_call.1} parent=31 // pred_region
          %p390 = scmp.lt.s32.totalorder %s20, 1
          %s391 = scalar_select %p390, %s20, 1
          %s392 = smul.addr %s391, 4
          %s393 = smul.addr %s392, 4
          %s394 = scalar_lea.vmem %s6, %s393
        $region52: #{tpu_custom_call.1} parent=31 // pred_fallthru
          _
        // Predicated region
        $region53: #{tpu_custom_call.1} parent=31 // pred_check
          %p395 = pneg %p212
        $region54: #{tpu_custom_call.1} parent=31 // pred_check_branch
          %397 = sbr.rel (%p395) target = $region56
        $region55: #{tpu_custom_call.1} parent=31 // pred_region
          %p398 = scmp.lt.s32.totalorder %s20, 1
          %s399 = scalar_select %p398, %s20, 1
          %s400 = scalar_lea.vmem %s7, %s399
        $region56: #{tpu_custom_call.1} parent=31 // pred_fallthru
          _
        // Predicated region
        $region57: #{tpu_custom_call.1} parent=31 // pred_check
          %p401 = pneg %p238
        $region58: #{tpu_custom_call.1} parent=31 // pred_check_branch
          %403 = sbr.rel (%p401) target = $region60
        $region59: #{tpu_custom_call.1} parent=31 // pred_region
          %p404 = scmp.lt.s32.totalorder %s20, 1
          %s405 = scalar_select %p404, %s20, 1
          %s406 = smul.addr %s405, 8
          %s407 = smul.addr %s406, 4
          %s408 = scalar_lea.vmem %s8, %s407
        $region60: #{tpu_custom_call.1} parent=31 // pred_fallthru
          _
      $region32: #{tpu_custom_call.1} parent=5 // pred_fallthru
        _
      %p409 = scmp.le.s32.totalorder 1, %s20
      %p410 = scmp.lt.s32.totalorder %s20, 3
      %p411 = pnand %p409, %p410
      %p412 = pneg %p411
      // Predicated region
      $region61: #{tpu_custom_call.1} parent=5 // pred_check
        _
      $region62: #{tpu_custom_call.1} parent=5 // pred_check_branch
        %414 = sbr.rel (%p411) target = $region64
      $region63: #{tpu_custom_call.1} parent=5 // pred_region
        %s415 = ssub.s32 %s20, 1
        // Predicated region
        $region65: #{tpu_custom_call.1} parent=63 // pred_check
          %p416 = pneg %p41
        $region66: #{tpu_custom_call.1} parent=63 // pred_check_branch
          %418 = sbr.rel (%p416) target = $region68
        $region67: #{tpu_custom_call.1} parent=63 // pred_region
          %419 = dma.done [#allocation5], 256
        $region68: #{tpu_custom_call.1} parent=63 // pred_fallthru
          _
        // Predicated region
        $region69: #{tpu_custom_call.1} parent=63 // pred_check
          %p420 = pneg %p265
        $region70: #{tpu_custom_call.1} parent=63 // pred_check_branch
          %422 = sbr.rel (%p420) target = $region72
        $region71: #{tpu_custom_call.1} parent=63 // pred_region
          %423 = dma.done [#allocation8], 256
        $region72: #{tpu_custom_call.1} parent=63 // pred_fallthru
          _
        %p424 = pneg %p41
        %p425 = pneg %p38
        %p426 = pneg %p62
        %p427 = pneg %p59
        %p428 = scmp.lt.s32.totalorder %s25, 1
        %s429 = scalar_select %p428, %s25, 1
        %s430 = smul.addr %s429, 4
        %s431 = smul.addr %s430, 4
        %s432 = scalar_lea.vmem %s2, %s431
        %p433 = pneg %p88
        %p434 = pneg %p85
        %p435 = scmp.lt.s32.totalorder %s25, 1
        %s436 = scalar_select %p435, %s25, 1
        %s437 = scalar_lea.vmem %s3, %s436
        %p438 = pneg %p114
        %p439 = pneg %p111
        %p440 = scmp.lt.s32.totalorder %s25, 1
        %s441 = scalar_select %p440, %s25, 1
        %s442 = smul.addr %s441, 4
        %s443 = smul.addr %s442, 4
        %s444 = scalar_lea.vmem %s4, %s443
        %p445 = pneg %p140
        %p446 = pneg %p137
        %p447 = scmp.lt.s32.totalorder %s25, 1
        %s448 = scalar_select %p447, %s25, 1
        %s449 = smul.addr %s448, 8
        %s450 = scalar_lea.vmem %s5, %s449
        %p451 = pneg %p166
        %p452 = pneg %p163
        %p453 = scmp.lt.s32.totalorder %s25, 1
        %s454 = scalar_select %p453, %s25, 1
        %s455 = smul.addr %s454, 4
        %s456 = smul.addr %s455, 4
        %s457 = scalar_lea.vmem %s6, %s456
        %p458 = pneg %p192
        %p459 = pneg %p189
        %p460 = scmp.lt.s32.totalorder %s25, 1
        %s461 = scalar_select %p460, %s25, 1
        %s462 = scalar_lea.vmem %s7, %s461
        %p463 = pneg %p218
        %p464 = pneg %p215
        %p465 = scmp.lt.s32.totalorder %s25, 1
        %s466 = scalar_select %p465, %s25, 1
        %s467 = smul.addr %s466, 8
        %s468 = smul.addr %s467, 4
        %s469 = scalar_lea.vmem %s8, %s468
        %p470 = pneg %p244
        %p471 = pneg %p241
        %p472 = pneg %p265
        %p473 = pneg %p262
        %p474 = pneg %p286
        %p475 = pneg %p283
        %p476 = pneg %p307
        %p477 = pneg %p304
        %p478 = scmp.lt.s32.totalorder %s25, 1
        %s479 = scalar_select %p478, %s25, 1
        %s480 = smul.addr %s479, 4
        %s481 = smul.addr %s480, 4
        %s482 = scalar_lea.vmem %s2, %s481
        %p483 = scmp.lt.s32.totalorder %s25, 1
        %s484 = scalar_select %p483, %s25, 1
        %s485 = scalar_lea.vmem %s3, %s484
        %p486 = scmp.lt.s32.totalorder %s25, 1
        %s487 = scalar_select %p486, %s25, 1
        %s488 = smul.addr %s487, 4
        %s489 = smul.addr %s488, 4
        %s490 = scalar_lea.vmem %s4, %s489
        %p491 = scmp.lt.s32.totalorder %s25, 1
        %s492 = scalar_select %p491, %s25, 1
        %s493 = smul.addr %s492, 8
        %s494 = scalar_lea.vmem %s5, %s493
        %p495 = scmp.lt.s32.totalorder %s25, 1
        %s496 = scalar_select %p495, %s25, 1
        %s497 = smul.addr %s496, 4
        %s498 = smul.addr %s497, 4
        %s499 = scalar_lea.vmem %s6, %s498
        %p500 = scmp.lt.s32.totalorder %s25, 1
        %s501 = scalar_select %p500, %s25, 1
        %s502 = scalar_lea.vmem %s7, %s501
        %p503 = scmp.lt.s32.totalorder %s25, 1
        %s504 = scalar_select %p503, %s25, 1
        %s505 = smul.addr %s504, 8
        %s506 = smul.addr %s505, 4
        %s507 = scalar_lea.vmem %s8, %s506
        %p509 = scmp.eq.s32.totalorder %s25, 0
        // Predicated region
        $region73: #{tpu_custom_call.1} parent=63 // pred_check
          %p510 = pneg %p509
        $region74: #{tpu_custom_call.1} parent=63 // pred_check_branch
          %512 = sbr.rel (%p510) target = $region76
        $region75: #{tpu_custom_call.1} parent=63 // pred_region
          %v513 = vld [vmem:[#allocation4] sm:$0xff]
          %v514 = vld [vmem:[#allocation4 + $0x8] sm:$0xff]
          %vm515 = vcmask 261120
          %516 = vst.msk [vmem:[#allocation2] sm:$0xff] %vm515, %v513
          %517 = vst.msk [vmem:[#allocation2 + $0x8] sm:$0xff] %vm515, %v514
          %v518 = vld [vmem:[%s1] sm:$0x1]
          %v519 = vld [vmem:[%s1 + $0x1] sm:$0x1]
          %vm520 = vcmp.gt.f32.partialorder %v518, 0.0
          %vm521 = vcmp.gt.f32.partialorder %v519, 0.0
          %v522 = vsel %vm520, 0.0, -1e+30
          %v523 = vsel %vm521, 0.0, -1e+30
          %vm524 = vcmask 57344
          %525 = vst.msk [vmem:[#allocation3] sm:$0x1] %vm524, %v522
          %526 = vst.msk [vmem:[#allocation3 + $0x1] sm:$0x1] %vm524, %v523
          %527 = vst.msk [vmem:[#allocation3 + $0x2] sm:$0x1] %vm524, %v522
          %528 = vst.msk [vmem:[#allocation3 + $0x3] sm:$0x1] %vm524, %v523
          %529 = vst.msk [vmem:[#allocation3 + $0x4] sm:$0x1] %vm524, %v522
          %530 = vst.msk [vmem:[#allocation3 + $0x5] sm:$0x1] %vm524, %v523
          %531 = vst.msk [vmem:[#allocation3 + $0x6] sm:$0x1] %vm524, %v522
          %532 = vst.msk [vmem:[#allocation3 + $0x7] sm:$0x1] %vm524, %v523
          %533 = vst.msk [vmem:[#allocation3 + $0x8] sm:$0x1] %vm524, %v522
          %534 = vst.msk [vmem:[#allocation3 + $0x9] sm:$0x1] %vm524, %v523
          %535 = vst.msk [vmem:[#allocation3 + $0xa] sm:$0x1] %vm524, %v522
          %536 = vst.msk [vmem:[#allocation3 + $0xb] sm:$0x1] %vm524, %v523
          %537 = vst.msk [vmem:[#allocation3 + $0xc] sm:$0x1] %vm524, %v522
          %538 = vst.msk [vmem:[#allocation3 + $0xd] sm:$0x1] %vm524, %v523
          %539 = vst.msk [vmem:[#allocation3 + $0xe] sm:$0x1] %vm524, %v522
          %540 = vst.msk [vmem:[#allocation3 + $0xf] sm:$0x1] %vm524, %v523
        $region76: #{tpu_custom_call.1} parent=63 // pred_fallthru
          _
        %v541 = vld [vmem:[#allocation2] sm:$0xff]
        %v542 = vld [vmem:[#allocation2 + $0x8] sm:$0xff]
        %v543 = vld [vmem:[%s494] sm:$0x3f]
        %v544 = vpack.c.bf16 %v542, %v541
        %v545 = vld [vmem:[%s482] sm:$0xf]
        %v546 = vld [vmem:[%s482 + $0x4] sm:$0xf]
        %v547 = vld [vmem:[%s482 + $0x8] sm:$0xf]
        %v548 = vld [vmem:[%s482 + $0xc] sm:$0xf]
        %v549 = vld [vmem:[%s485] sm:$0x1]
        %v551 = vlaneseq
        %v552 = vshrl.u32 %v551, 7
        %v553 = vsub.s32 0, %v552
        %v554 = vrot.slane %v549, %v553
        %v560 = vunpack.c.l.b16 %v545
        %v561 = vunpack.c.l.b16 %v546
        %v562 = vunpack.c.l.b16 %v547
        %v563 = vunpack.c.l.b16 %v548
        %v564 = vpack.c.b16 %v561, %v560
        %v565 = vpack.c.b16 %v563, %v562
        %vm568 = vcmask 261120
        %v570 = vsel %vm568, %v544, 0
        %572 = vmatprep.subr.bf16.mxu0 0
        %573 = vmatpush1.bf16.msra.mxu0 0
        %574 = vmatprep.subr.bf16.mxu0 0
        %575 = vmatpush1.bf16.msra.mxu0 0
        %576 = vmatprep.subr.bf16.mxu0 0
        %577 = vmatpush1.bf16.msra.mxu0 0
        %578 = vmatprep.subr.bf16.mxu0 0
        %579 = vmatpush1.bf16.msra.mxu0 0
        %580 = vmatprep.subr.bf16.mxu0 0
        %581 = vmatpush1.bf16.msra.mxu0 0
        %582 = vmatprep.subr.bf16.mxu0 0
        %583 = vmatpush1.bf16.msra.mxu0 0
        %584 = vmatprep.subr.bf16.mxu0 0
        %585 = vmatpush1.bf16.msra.mxu0 %v565
        %586 = vmatprep.subr.bf16.mxu0 0
        %587 = vmatpush1.bf16.msra.mxu0 %v564
        %588 = vmatprep.subr.bf16.mxu0 0
        %589 = vmatpush2.bf16.msra.mxu0 0
        %590 = vmatprep.subr.bf16.mxu0 0
        %591 = vmatpush2.bf16.msra.mxu0 0
        %592 = vmatprep.subr.bf16.mxu0 0
        %593 = vmatpush2.bf16.msra.mxu0 0
        %594 = vmatprep.subr.bf16.mxu0 0
        %595 = vmatpush2.bf16.msra.mxu0 0
        %596 = vmatprep.subr.bf16.mxu0 0
        %597 = vmatpush2.bf16.msra.mxu0 0
        %598 = vmatprep.subr.bf16.mxu0 0
        %599 = vmatpush2.bf16.msra.mxu0 0
        %600 = vmatprep.subr.bf16.mxu0 0
        %601 = vmatpush2.bf16.msra.mxu0 0
        %602 = vmatprep.subr.bf16.mxu0 0
        %603 = vmatpush2.bf16.msra.mxu0 0
        %604 = vmatprep.mubr.bf16.mxu0 0
        %605 = vmatmul.mubr.bf16.gmra.mxu0 %v570
        %v606 = vpop.f32.mrf.mxu0
        %v607 = vadd.f32 %v554, %v606
        %v608 = vpop.f32.mrf.mxu0
        %v609 = vpop.f32.mrf.mxu0
        %v610 = vadd.f32 %v554, %v609
        %v611 = vpop.f32.mrf.mxu0
        %612 = vdwg.mxu0
        %615 = vrot.lane.b32.xlu0 %v607, 124
        %v616 = vpop.permute.xlu0 %615
        %617 = vrot.lane.b32.xlu0 %v610, 124
        %v618 = vpop.permute.xlu0 %617
        %621 = vrot.lane.b32.xlu0 %v607, 120
        %v622 = vpop.permute.xlu0 %621
        %623 = vrot.lane.b32.xlu0 %v610, 120
        %v624 = vpop.permute.xlu0 %623
        %627 = vrot.lane.b32.xlu0 %v607, 116
        %v628 = vpop.permute.xlu0 %627
        %629 = vrot.lane.b32.xlu0 %v610, 116
        %v630 = vpop.permute.xlu0 %629
        %633 = vrot.lane.b32.xlu0 %v607, 112
        %v634 = vpop.permute.xlu0 %633
        %635 = vrot.lane.b32.xlu0 %v610, 112
        %v636 = vpop.permute.xlu0 %635
        %639 = vrot.lane.b32.xlu0 %v607, 108
        %v640 = vpop.permute.xlu0 %639
        %641 = vrot.lane.b32.xlu0 %v610, 108
        %v642 = vpop.permute.xlu0 %641
        %645 = vrot.lane.b32.xlu0 %v607, 104
        %v646 = vpop.permute.xlu0 %645
        %647 = vrot.lane.b32.xlu0 %v610, 104
        %v648 = vpop.permute.xlu0 %647
        %651 = vrot.lane.b32.xlu0 %v607, 100
        %v652 = vpop.permute.xlu0 %651
        %653 = vrot.lane.b32.xlu0 %v610, 100
        %v654 = vpop.permute.xlu0 %653
        %v657 = vpack.c.bf16 %v607, %v607
        %v658 = vpack.c.bf16 %v610, %v610
        %v659 = vpack.c.bf16 %v616, %v616
        %v660 = vpack.c.bf16 %v618, %v618
        %v661 = vpack.c.bf16 %v622, %v622
        %v662 = vpack.c.bf16 %v624, %v624
        %v663 = vpack.c.bf16 %v628, %v628
        %v664 = vpack.c.bf16 %v630, %v630
        %v665 = vpack.c.bf16 %v634, %v634
        %v666 = vpack.c.bf16 %v636, %v636
        %v667 = vpack.c.bf16 %v640, %v640
        %v668 = vpack.c.bf16 %v642, %v642
        %v669 = vpack.c.bf16 %v646, %v646
        %v670 = vpack.c.bf16 %v648, %v648
        %v671 = vpack.c.bf16 %v652, %v652
        %v672 = vpack.c.bf16 %v654, %v654
        %674 = vrot.lane.b32.xlu0 %v657, 96
        %v675 = vpop.permute.xlu0 %674
        %vm676 = vcmask 31744
        %v678 = vsel %vm676, %v657, 0
        %v681 = vsel %vm676, %v675, 0
        %683 = vmatprep.subr.bf16.mxu0 0
        %684 = vmatpush1.bf16.xpose.msra.mxu0 0
        %685 = vmatprep.subr.bf16.mxu0 0
        %686 = vmatpush1.bf16.xpose.msra.mxu0 0
        %687 = vmatprep.subr.bf16.mxu0 0
        %688 = vmatpush1.bf16.xpose.msra.mxu0 0
        %689 = vmatprep.subr.bf16.mxu0 0
        %690 = vmatpush1.bf16.xpose.msra.mxu0 0
        %691 = vmatprep.subr.bf16.mxu0 0
        %692 = vmatpush1.bf16.xpose.msra.mxu0 0
        %693 = vmatprep.subr.bf16.mxu0 0
        %694 = vmatpush1.bf16.xpose.msra.mxu0 0
        %695 = vmatprep.subr.bf16.mxu0 0
        %696 = vmatpush1.bf16.xpose.msra.mxu0 0
        %697 = vmatprep.subr.bf16.mxu0 0
        %698 = vmatpush1.bf16.xpose.msra.mxu0 %v681
        %699 = vmatprep.subr.bf16.mxu0 0
        %700 = vmatpush2.bf16.xpose.msra.mxu0 0
        %701 = vmatprep.subr.bf16.mxu0 0
        %702 = vmatpush2.bf16.xpose.msra.mxu0 0
        %703 = vmatprep.subr.bf16.mxu0 0
        %704 = vmatpush2.bf16.xpose.msra.mxu0 0
        %705 = vmatprep.subr.bf16.mxu0 0
        %706 = vmatpush2.bf16.xpose.msra.mxu0 0
        %707 = vmatprep.subr.bf16.mxu0 0
        %708 = vmatpush2.bf16.xpose.msra.mxu0 0
        %709 = vmatprep.subr.bf16.mxu0 0
        %710 = vmatpush2.bf16.xpose.msra.mxu0 0
        %711 = vmatprep.subr.bf16.mxu0 0
        %712 = vmatpush2.bf16.xpose.msra.mxu0 0
        %713 = vmatprep.subr.bf16.mxu0 0
        %714 = vmatpush2.bf16.xpose.msra.mxu0 0
        %715 = vmatprep.mubr.bf16.mxu0 0
        %716 = vmatmul.mubr.bf16.gmra.mxu0 %v678
        %v717 = vpop.f32.mrf.mxu0
        %v718 = vadd.f32 0.0, %v717
        %v719 = vpop.f32.mrf.mxu0
        %v720 = vpop.f32.mrf.mxu0
        %v721 = vpop.f32.mrf.mxu0
        %722 = vdwg.mxu0
        %724 = vrot.lane.b32.xlu0 %v658, 96
        %v725 = vpop.permute.xlu0 %724
        %v727 = vsel %vm676, %v658, 0
        %v730 = vsel %vm676, %v725, 0
        %732 = vmatprep.subr.bf16.mxu0 0
        %733 = vmatpush1.bf16.xpose.msra.mxu0 0
        %734 = vmatprep.subr.bf16.mxu0 0
        %735 = vmatpush1.bf16.xpose.msra.mxu0 0
        %736 = vmatprep.subr.bf16.mxu0 0
        %737 = vmatpush1.bf16.xpose.msra.mxu0 0
        %738 = vmatprep.subr.bf16.mxu0 0
        %739 = vmatpush1.bf16.xpose.msra.mxu0 0
        %740 = vmatprep.subr.bf16.mxu0 0
        %741 = vmatpush1.bf16.xpose.msra.mxu0 0
        %742 = vmatprep.subr.bf16.mxu0 0
        %743 = vmatpush1.bf16.xpose.msra.mxu0 0
        %744 = vmatprep.subr.bf16.mxu0 0
        %745 = vmatpush1.bf16.xpose.msra.mxu0 0
        %746 = vmatprep.subr.bf16.mxu0 0
        %747 = vmatpush1.bf16.xpose.msra.mxu0 %v730
        %748 = vmatprep.subr.bf16.mxu0 0
        %749 = vmatpush2.bf16.xpose.msra.mxu0 0
        %750 = vmatprep.subr.bf16.mxu0 0
        %751 = vmatpush2.bf16.xpose.msra.mxu0 0
        %752 = vmatprep.subr.bf16.mxu0 0
        %753 = vmatpush2.bf16.xpose.msra.mxu0 0
        %754 = vmatprep.subr.bf16.mxu0 0
        %755 = vmatpush2.bf16.xpose.msra.mxu0 0
        %756 = vmatprep.subr.bf16.mxu0 0
        %757 = vmatpush2.bf16.xpose.msra.mxu0 0
        %758 = vmatprep.subr.bf16.mxu0 0
        %759 = vmatpush2.bf16.xpose.msra.mxu0 0
        %760 = vmatprep.subr.bf16.mxu0 0
        %761 = vmatpush2.bf16.xpose.msra.mxu0 0
        %762 = vmatprep.subr.bf16.mxu0 0
        %763 = vmatpush2.bf16.xpose.msra.mxu0 0
        %764 = vmatprep.mubr.bf16.mxu0 0
        %765 = vmatmul.mubr.bf16.gmra.mxu0 %v727
        %v766 = vpop.f32.mrf.mxu0
        %v767 = vadd.f32 0.0, %v766
        %v768 = vpop.f32.mrf.mxu0
        %v769 = vpop.f32.mrf.mxu0
        %v770 = vpop.f32.mrf.mxu0
        %771 = vdwg.mxu0
        %773 = vrot.lane.b32.xlu0 %v659, 96
        %v774 = vpop.permute.xlu0 %773
        %v776 = vsel %vm676, %v659, 0
        %v779 = vsel %vm676, %v774, 0
        %781 = vmatprep.subr.bf16.mxu0 0
        %782 = vmatpush1.bf16.xpose.msra.mxu0 0
        %783 = vmatprep.subr.bf16.mxu0 0
        %784 = vmatpush1.bf16.xpose.msra.mxu0 0
        %785 = vmatprep.subr.bf16.mxu0 0
        %786 = vmatpush1.bf16.xpose.msra.mxu0 0
        %787 = vmatprep.subr.bf16.mxu0 0
        %788 = vmatpush1.bf16.xpose.msra.mxu0 0
        %789 = vmatprep.subr.bf16.mxu0 0
        %790 = vmatpush1.bf16.xpose.msra.mxu0 0
        %791 = vmatprep.subr.bf16.mxu0 0
        %792 = vmatpush1.bf16.xpose.msra.mxu0 0
        %793 = vmatprep.subr.bf16.mxu0 0
        %794 = vmatpush1.bf16.xpose.msra.mxu0 0
        %795 = vmatprep.subr.bf16.mxu0 0
        %796 = vmatpush1.bf16.xpose.msra.mxu0 %v779
        %797 = vmatprep.subr.bf16.mxu0 0
        %798 = vmatpush2.bf16.xpose.msra.mxu0 0
        %799 = vmatprep.subr.bf16.mxu0 0
        %800 = vmatpush2.bf16.xpose.msra.mxu0 0
        %801 = vmatprep.subr.bf16.mxu0 0
        %802 = vmatpush2.bf16.xpose.msra.mxu0 0
        %803 = vmatprep.subr.bf16.mxu0 0
        %804 = vmatpush2.bf16.xpose.msra.mxu0 0
        %805 = vmatprep.subr.bf16.mxu0 0
        %806 = vmatpush2.bf16.xpose.msra.mxu0 0
        %807 = vmatprep.subr.bf16.mxu0 0
        %808 = vmatpush2.bf16.xpose.msra.mxu0 0
        %809 = vmatprep.subr.bf16.mxu0 0
        %810 = vmatpush2.bf16.xpose.msra.mxu0 0
        %811 = vmatprep.subr.bf16.mxu0 0
        %812 = vmatpush2.bf16.xpose.msra.mxu0 0
        %813 = vmatprep.mubr.bf16.mxu0 0
        %814 = vmatmul.mubr.bf16.gmra.mxu0 %v776
        %v815 = vpop.f32.mrf.mxu0
        %v816 = vadd.f32 0.0, %v815
        %v817 = vpop.f32.mrf.mxu0
        %v818 = vpop.f32.mrf.mxu0
        %v819 = vpop.f32.mrf.mxu0
        %820 = vdwg.mxu0
        %822 = vrot.lane.b32.xlu0 %v660, 96
        %v823 = vpop.permute.xlu0 %822
        %v825 = vsel %vm676, %v660, 0
        %v828 = vsel %vm676, %v823, 0
        %830 = vmatprep.subr.bf16.mxu0 0
        %831 = vmatpush1.bf16.xpose.msra.mxu0 0
        %832 = vmatprep.subr.bf16.mxu0 0
        %833 = vmatpush1.bf16.xpose.msra.mxu0 0
        %834 = vmatprep.subr.bf16.mxu0 0
        %835 = vmatpush1.bf16.xpose.msra.mxu0 0
        %836 = vmatprep.subr.bf16.mxu0 0
        %837 = vmatpush1.bf16.xpose.msra.mxu0 0
        %838 = vmatprep.subr.bf16.mxu0 0
        %839 = vmatpush1.bf16.xpose.msra.mxu0 0
        %840 = vmatprep.subr.bf16.mxu0 0
        %841 = vmatpush1.bf16.xpose.msra.mxu0 0
        %842 = vmatprep.subr.bf16.mxu0 0
        %843 = vmatpush1.bf16.xpose.msra.mxu0 0
        %844 = vmatprep.subr.bf16.mxu0 0
        %845 = vmatpush1.bf16.xpose.msra.mxu0 %v828
        %846 = vmatprep.subr.bf16.mxu0 0
        %847 = vmatpush2.bf16.xpose.msra.mxu0 0
        %848 = vmatprep.subr.bf16.mxu0 0
        %849 = vmatpush2.bf16.xpose.msra.mxu0 0
        %850 = vmatprep.subr.bf16.mxu0 0
        %851 = vmatpush2.bf16.xpose.msra.mxu0 0
        %852 = vmatprep.subr.bf16.mxu0 0
        %853 = vmatpush2.bf16.xpose.msra.mxu0 0
        %854 = vmatprep.subr.bf16.mxu0 0
        %855 = vmatpush2.bf16.xpose.msra.mxu0 0
        %856 = vmatprep.subr.bf16.mxu0 0
        %857 = vmatpush2.bf16.xpose.msra.mxu0 0
        %858 = vmatprep.subr.bf16.mxu0 0
        %859 = vmatpush2.bf16.xpose.msra.mxu0 0
        %860 = vmatprep.subr.bf16.mxu0 0
        %861 = vmatpush2.bf16.xpose.msra.mxu0 0
        %862 = vmatprep.mubr.bf16.mxu0 0
        %863 = vmatmul.mubr.bf16.gmra.mxu0 %v825
        %v864 = vpop.f32.mrf.mxu0
        %v865 = vadd.f32 0.0, %v864
        %v866 = vpop.f32.mrf.mxu0
        %v867 = vpop.f32.mrf.mxu0
        %v868 = vpop.f32.mrf.mxu0
        %869 = vdwg.mxu0
        %871 = vrot.lane.b32.xlu0 %v661, 96
        %v872 = vpop.permute.xlu0 %871
        %v874 = vsel %vm676, %v661, 0
        %v877 = vsel %vm676, %v872, 0
        %879 = vmatprep.subr.bf16.mxu0 0
        %880 = vmatpush1.bf16.xpose.msra.mxu0 0
        %881 = vmatprep.subr.bf16.mxu0 0
        %882 = vmatpush1.bf16.xpose.msra.mxu0 0
        %883 = vmatprep.subr.bf16.mxu0 0
        %884 = vmatpush1.bf16.xpose.msra.mxu0 0
        %885 = vmatprep.subr.bf16.mxu0 0
        %886 = vmatpush1.bf16.xpose.msra.mxu0 0
        %887 = vmatprep.subr.bf16.mxu0 0
        %888 = vmatpush1.bf16.xpose.msra.mxu0 0
        %889 = vmatprep.subr.bf16.mxu0 0
        %890 = vmatpush1.bf16.xpose.msra.mxu0 0
        %891 = vmatprep.subr.bf16.mxu0 0
        %892 = vmatpush1.bf16.xpose.msra.mxu0 0
        %893 = vmatprep.subr.bf16.mxu0 0
        %894 = vmatpush1.bf16.xpose.msra.mxu0 %v877
        %895 = vmatprep.subr.bf16.mxu0 0
        %896 = vmatpush2.bf16.xpose.msra.mxu0 0
        %897 = vmatprep.subr.bf16.mxu0 0
        %898 = vmatpush2.bf16.xpose.msra.mxu0 0
        %899 = vmatprep.subr.bf16.mxu0 0
        %900 = vmatpush2.bf16.xpose.msra.mxu0 0
        %901 = vmatprep.subr.bf16.mxu0 0
        %902 = vmatpush2.bf16.xpose.msra.mxu0 0
        %903 = vmatprep.subr.bf16.mxu0 0
        %904 = vmatpush2.bf16.xpose.msra.mxu0 0
        %905 = vmatprep.subr.bf16.mxu0 0
        %906 = vmatpush2.bf16.xpose.msra.mxu0 0
        %907 = vmatprep.subr.bf16.mxu0 0
        %908 = vmatpush2.bf16.xpose.msra.mxu0 0
        %909 = vmatprep.subr.bf16.mxu0 0
        %910 = vmatpush2.bf16.xpose.msra.mxu0 0
        %911 = vmatprep.mubr.bf16.mxu0 0
        %912 = vmatmul.mubr.bf16.gmra.mxu0 %v874
        %v913 = vpop.f32.mrf.mxu0
        %v914 = vadd.f32 0.0, %v913
        %v915 = vpop.f32.mrf.mxu0
        %v916 = vpop.f32.mrf.mxu0
        %v917 = vpop.f32.mrf.mxu0
        %918 = vdwg.mxu0
        %920 = vrot.lane.b32.xlu0 %v662, 96
        %v921 = vpop.permute.xlu0 %920
        %v923 = vsel %vm676, %v662, 0
        %v926 = vsel %vm676, %v921, 0
        %928 = vmatprep.subr.bf16.mxu0 0
        %929 = vmatpush1.bf16.xpose.msra.mxu0 0
        %930 = vmatprep.subr.bf16.mxu0 0
        %931 = vmatpush1.bf16.xpose.msra.mxu0 0
        %932 = vmatprep.subr.bf16.mxu0 0
        %933 = vmatpush1.bf16.xpose.msra.mxu0 0
        %934 = vmatprep.subr.bf16.mxu0 0
        %935 = vmatpush1.bf16.xpose.msra.mxu0 0
        %936 = vmatprep.subr.bf16.mxu0 0
        %937 = vmatpush1.bf16.xpose.msra.mxu0 0
        %938 = vmatprep.subr.bf16.mxu0 0
        %939 = vmatpush1.bf16.xpose.msra.mxu0 0
        %940 = vmatprep.subr.bf16.mxu0 0
        %941 = vmatpush1.bf16.xpose.msra.mxu0 0
        %942 = vmatprep.subr.bf16.mxu0 0
        %943 = vmatpush1.bf16.xpose.msra.mxu0 %v926
        %944 = vmatprep.subr.bf16.mxu0 0
        %945 = vmatpush2.bf16.xpose.msra.mxu0 0
        %946 = vmatprep.subr.bf16.mxu0 0
        %947 = vmatpush2.bf16.xpose.msra.mxu0 0
        %948 = vmatprep.subr.bf16.mxu0 0
        %949 = vmatpush2.bf16.xpose.msra.mxu0 0
        %950 = vmatprep.subr.bf16.mxu0 0
        %951 = vmatpush2.bf16.xpose.msra.mxu0 0
        %952 = vmatprep.subr.bf16.mxu0 0
        %953 = vmatpush2.bf16.xpose.msra.mxu0 0
        %954 = vmatprep.subr.bf16.mxu0 0
        %955 = vmatpush2.bf16.xpose.msra.mxu0 0
        %956 = vmatprep.subr.bf16.mxu0 0
        %957 = vmatpush2.bf16.xpose.msra.mxu0 0
        %958 = vmatprep.subr.bf16.mxu0 0
        %959 = vmatpush2.bf16.xpose.msra.mxu0 0
        %960 = vmatprep.mubr.bf16.mxu0 0
        %961 = vmatmul.mubr.bf16.gmra.mxu0 %v923
        %v962 = vpop.f32.mrf.mxu0
        %v963 = vadd.f32 0.0, %v962
        %v964 = vpop.f32.mrf.mxu0
        %v965 = vpop.f32.mrf.mxu0
        %v966 = vpop.f32.mrf.mxu0
        %967 = vdwg.mxu0
        %969 = vrot.lane.b32.xlu0 %v663, 96
        %v970 = vpop.permute.xlu0 %969
        %v972 = vsel %vm676, %v663, 0
        %v975 = vsel %vm676, %v970, 0
        %977 = vmatprep.subr.bf16.mxu0 0
        %978 = vmatpush1.bf16.xpose.msra.mxu0 0
        %979 = vmatprep.subr.bf16.mxu0 0
        %980 = vmatpush1.bf16.xpose.msra.mxu0 0
        %981 = vmatprep.subr.bf16.mxu0 0
        %982 = vmatpush1.bf16.xpose.msra.mxu0 0
        %983 = vmatprep.subr.bf16.mxu0 0
        %984 = vmatpush1.bf16.xpose.msra.mxu0 0
        %985 = vmatprep.subr.bf16.mxu0 0
        %986 = vmatpush1.bf16.xpose.msra.mxu0 0
        %987 = vmatprep.subr.bf16.mxu0 0
        %988 = vmatpush1.bf16.xpose.msra.mxu0 0
        %989 = vmatprep.subr.bf16.mxu0 0
        %990 = vmatpush1.bf16.xpose.msra.mxu0 0
        %991 = vmatprep.subr.bf16.mxu0 0
        %992 = vmatpush1.bf16.xpose.msra.mxu0 %v975
        %993 = vmatprep.subr.bf16.mxu0 0
        %994 = vmatpush2.bf16.xpose.msra.mxu0 0
        %995 = vmatprep.subr.bf16.mxu0 0
        %996 = vmatpush2.bf16.xpose.msra.mxu0 0
        %997 = vmatprep.subr.bf16.mxu0 0
        %998 = vmatpush2.bf16.xpose.msra.mxu0 0
        %999 = vmatprep.subr.bf16.mxu0 0
        %1000 = vmatpush2.bf16.xpose.msra.mxu0 0
        %1001 = vmatprep.subr.bf16.mxu0 0
        %1002 = vmatpush2.bf16.xpose.msra.mxu0 0
        %1003 = vmatprep.subr.bf16.mxu0 0
        %1004 = vmatpush2.bf16.xpose.msra.mxu0 0
        %1005 = vmatprep.subr.bf16.mxu0 0
        %1006 = vmatpush2.bf16.xpose.msra.mxu0 0
        %1007 = vmatprep.subr.bf16.mxu0 0
        %1008 = vmatpush2.bf16.xpose.msra.mxu0 0
        %1009 = vmatprep.mubr.bf16.mxu0 0
        %1010 = vmatmul.mubr.bf16.gmra.mxu0 %v972
        %v1011 = vpop.f32.mrf.mxu0
        %v1012 = vadd.f32 0.0, %v1011
        %v1013 = vpop.f32.mrf.mxu0
        %v1014 = vpop.f32.mrf.mxu0
        %v1015 = vpop.f32.mrf.mxu0
        %1016 = vdwg.mxu0
        %1018 = vrot.lane.b32.xlu0 %v664, 96
        %v1019 = vpop.permute.xlu0 %1018
        %v1021 = vsel %vm676, %v664, 0
        %v1024 = vsel %vm676, %v1019, 0
        %1026 = vmatprep.subr.bf16.mxu0 0
        %1027 = vmatpush1.bf16.xpose.msra.mxu0 0
        %1028 = vmatprep.subr.bf16.mxu0 0
        %1029 = vmatpush1.bf16.xpose.msra.mxu0 0
        %1030 = vmatprep.subr.bf16.mxu0 0
        %1031 = vmatpush1.bf16.xpose.msra.mxu0 0
        %1032 = vmatprep.subr.bf16.mxu0 0
        %1033 = vmatpush1.bf16.xpose.msra.mxu0 0
        %1034 = vmatprep.subr.bf16.mxu0 0
        %1035 = vmatpush1.bf16.xpose.msra.mxu0 0
        %1036 = vmatprep.subr.bf16.mxu0 0
        %1037 = vmatpush1.bf16.xpose.msra.mxu0 0
        %1038 = vmatprep.subr.bf16.mxu0 0
        %1039 = vmatpush1.bf16.xpose.msra.mxu0 0
        %1040 = vmatprep.subr.bf16.mxu0 0
        %1041 = vmatpush1.bf16.xpose.msra.mxu0 %v1024
        %1042 = vmatprep.subr.bf16.mxu0 0
        %1043 = vmatpush2.bf16.xpose.msra.mxu0 0
        %1044 = vmatprep.subr.bf16.mxu0 0
        %1045 = vmatpush2.bf16.xpose.msra.mxu0 0
        %1046 = vmatprep.subr.bf16.mxu0 0
        %1047 = vmatpush2.bf16.xpose.msra.mxu0 0
        %1048 = vmatprep.subr.bf16.mxu0 0
        %1049 = vmatpush2.bf16.xpose.msra.mxu0 0
        %1050 = vmatprep.subr.bf16.mxu0 0
        %1051 = vmatpush2.bf16.xpose.msra.mxu0 0
        %1052 = vmatprep.subr.bf16.mxu0 0
        %1053 = vmatpush2.bf16.xpose.msra.mxu0 0
        %1054 = vmatprep.subr.bf16.mxu0 0
        %1055 = vmatpush2.bf16.xpose.msra.mxu0 0
        %1056 = vmatprep.subr.bf16.mxu0 0
        %1057 = vmatpush2.bf16.xpose.msra.mxu0 0
        %1058 = vmatprep.mubr.bf16.mxu0 0
        %1059 = vmatmul.mubr.bf16.gmra.mxu0 %v1021
        %v1060 = vpop.f32.mrf.mxu0
        %v1061 = vadd.f32 0.0, %v1060
        %v1062 = vpop.f32.mrf.mxu0
        %v1063 = vpop.f32.mrf.mxu0
        %v1064 = vpop.f32.mrf.mxu0
        %1065 = vdwg.mxu0
        %1067 = vrot.lane.b32.xlu0 %v665, 96
        %v1068 = vpop.permute.xlu0 %1067
        %v1070 = vsel %vm676, %v665, 0
        %v1073 = vsel %vm676, %v1068, 0
        %1075 = vmatprep.subr.bf16.mxu0 0
        %1076 = vmatpush1.bf16.xpose.msra.mxu0 0
        %1077 = vmatprep.subr.bf16.mxu0 0
        %1078 = vmatpush1.bf16.xpose.msra.mxu0 0
        %1079 = vmatprep.subr.bf16.mxu0 0
        %1080 = vmatpush1.bf16.xpose.msra.mxu0 0
        %1081 = vmatprep.subr.bf16.mxu0 0
        %1082 = vmatpush1.bf16.xpose.msra.mxu0 0
        %1083 = vmatprep.subr.bf16.mxu0 0
        %1084 = vmatpush1.bf16.xpose.msra.mxu0 0
        %1085 = vmatprep.subr.bf16.mxu0 0
        %1086 = vmatpush1.bf16.xpose.msra.mxu0 0
        %1087 = vmatprep.subr.bf16.mxu0 0
        %1088 = vmatpush1.bf16.xpose.msra.mxu0 0
        %1089 = vmatprep.subr.bf16.mxu0 0
        %1090 = vmatpush1.bf16.xpose.msra.mxu0 %v1073
        %1091 = vmatprep.subr.bf16.mxu0 0
        %1092 = vmatpush2.bf16.xpose.msra.mxu0 0
        %1093 = vmatprep.subr.bf16.mxu0 0
        %1094 = vmatpush2.bf16.xpose.msra.mxu0 0
        %1095 = vmatprep.subr.bf16.mxu0 0
        %1096 = vmatpush2.bf16.xpose.msra.mxu0 0
        %1097 = vmatprep.subr.bf16.mxu0 0
        %1098 = vmatpush2.bf16.xpose.msra.mxu0 0
        %1099 = vmatprep.subr.bf16.mxu0 0
        %1100 = vmatpush2.bf16.xpose.msra.mxu0 0
        %1101 = vmatprep.subr.bf16.mxu0 0
        %1102 = vmatpush2.bf16.xpose.msra.mxu0 0
        %1103 = vmatprep.subr.bf16.mxu0 0
        %1104 = vmatpush2.bf16.xpose.msra.mxu0 0
        %1105 = vmatprep.subr.bf16.mxu0 0
        %1106 = vmatpush2.bf16.xpose.msra.mxu0 0
        %1107 = vmatprep.mubr.bf16.mxu0 0
        %1108 = vmatmul.mubr.bf16.gmra.mxu0 %v1070
        %v1109 = vpop.f32.mrf.mxu0
        %v1110 = vadd.f32 0.0, %v1109
        %v1111 = vpop.f32.mrf.mxu0
        %v1112 = vpop.f32.mrf.mxu0
        %v1113 = vpop.f32.mrf.mxu0
        %1114 = vdwg.mxu0
        %1116 = vrot.lane.b32.xlu0 %v666, 96
        %v1117 = vpop.permute.xlu0 %1116
        %v1119 = vsel %vm676, %v666, 0
        %v1122 = vsel %vm676, %v1117, 0
        %1124 = vmatprep.subr.bf16.mxu0 0
        %1125 = vmatpush1.bf16.xpose.msra.mxu0 0
        %1126 = vmatprep.subr.bf16.mxu0 0
        %1127 = vmatpush1.bf16.xpose.msra.mxu0 0
        %1128 = vmatprep.subr.bf16.mxu0 0
        %1129 = vmatpush1.bf16.xpose.msra.mxu0 0
        %1130 = vmatprep.subr.bf16.mxu0 0
        %1131 = vmatpush1.bf16.xpose.msra.mxu0 0
        %1132 = vmatprep.subr.bf16.mxu0 0
        %1133 = vmatpush1.bf16.xpose.msra.mxu0 0
        %1134 = vmatprep.subr.bf16.mxu0 0
        %1135 = vmatpush1.bf16.xpose.msra.mxu0 0
        %1136 = vmatprep.subr.bf16.mxu0 0
        %1137 = vmatpush1.bf16.xpose.msra.mxu0 0
        %1138 = vmatprep.subr.bf16.mxu0 0
        %1139 = vmatpush1.bf16.xpose.msra.mxu0 %v1122
        %1140 = vmatprep.subr.bf16.mxu0 0
        %1141 = vmatpush2.bf16.xpose.msra.mxu0 0
        %1142 = vmatprep.subr.bf16.mxu0 0
        %1143 = vmatpush2.bf16.xpose.msra.mxu0 0
        %1144 = vmatprep.subr.bf16.mxu0 0
        %1145 = vmatpush2.bf16.xpose.msra.mxu0 0
        %1146 = vmatprep.subr.bf16.mxu0 0
        %1147 = vmatpush2.bf16.xpose.msra.mxu0 0
        %1148 = vmatprep.subr.bf16.mxu0 0
        %1149 = vmatpush2.bf16.xpose.msra.mxu0 0
        %1150 = vmatprep.subr.bf16.mxu0 0
        %1151 = vmatpush2.bf16.xpose.msra.mxu0 0
        %1152 = vmatprep.subr.bf16.mxu0 0
        %1153 = vmatpush2.bf16.xpose.msra.mxu0 0
        %1154 = vmatprep.subr.bf16.mxu0 0
        %1155 = vmatpush2.bf16.xpose.msra.mxu0 0
        %1156 = vmatprep.mubr.bf16.mxu0 0
        %1157 = vmatmul.mubr.bf16.gmra.mxu0 %v1119
        %v1158 = vpop.f32.mrf.mxu0
        %v1159 = vadd.f32 0.0, %v1158
        %v1160 = vpop.f32.mrf.mxu0
        %v1161 = vpop.f32.mrf.mxu0
        %v1162 = vpop.f32.mrf.mxu0
        %1163 = vdwg.mxu0
        %1165 = vrot.lane.b32.xlu0 %v667, 96
        %v1166 = vpop.permute.xlu0 %1165
        %v1168 = vsel %vm676, %v667, 0
        %v1171 = vsel %vm676, %v1166, 0
        %1173 = vmatprep.subr.bf16.mxu0 0
        %1174 = vmatpush1.bf16.xpose.msra.mxu0 0
        %1175 = vmatprep.subr.bf16.mxu0 0
        %1176 = vmatpush1.bf16.xpose.msra.mxu0 0
        %1177 = vmatprep.subr.bf16.mxu0 0
        %1178 = vmatpush1.bf16.xpose.msra.mxu0 0
        %1179 = vmatprep.subr.bf16.mxu0 0
        %1180 = vmatpush1.bf16.xpose.msra.mxu0 0
        %1181 = vmatprep.subr.bf16.mxu0 0
        %1182 = vmatpush1.bf16.xpose.msra.mxu0 0
        %1183 = vmatprep.subr.bf16.mxu0 0
        %1184 = vmatpush1.bf16.xpose.msra.mxu0 0
        %1185 = vmatprep.subr.bf16.mxu0 0
        %1186 = vmatpush1.bf16.xpose.msra.mxu0 0
        %1187 = vmatprep.subr.bf16.mxu0 0
        %1188 = vmatpush1.bf16.xpose.msra.mxu0 %v1171
        %1189 = vmatprep.subr.bf16.mxu0 0
        %1190 = vmatpush2.bf16.xpose.msra.mxu0 0
        %1191 = vmatprep.subr.bf16.mxu0 0
        %1192 = vmatpush2.bf16.xpose.msra.mxu0 0
        %1193 = vmatprep.subr.bf16.mxu0 0
        %1194 = vmatpush2.bf16.xpose.msra.mxu0 0
        %1195 = vmatprep.subr.bf16.mxu0 0
        %1196 = vmatpush2.bf16.xpose.msra.mxu0 0
        %1197 = vmatprep.subr.bf16.mxu0 0
        %1198 = vmatpush2.bf16.xpose.msra.mxu0 0
        %1199 = vmatprep.subr.bf16.mxu0 0
        %1200 = vmatpush2.bf16.xpose.msra.mxu0 0
        %1201 = vmatprep.subr.bf16.mxu0 0
        %1202 = vmatpush2.bf16.xpose.msra.mxu0 0
        %1203 = vmatprep.subr.bf16.mxu0 0
        %1204 = vmatpush2.bf16.xpose.msra.mxu0 0
        %1205 = vmatprep.mubr.bf16.mxu0 0
        %1206 = vmatmul.mubr.bf16.gmra.mxu0 %v1168
        %v1207 = vpop.f32.mrf.mxu0
        %v1208 = vadd.f32 0.0, %v1207
        %v1209 = vpop.f32.mrf.mxu0
        %v1210 = vpop.f32.mrf.mxu0
        %v1211 = vpop.f32.mrf.mxu0
        %1212 = vdwg.mxu0
        %1214 = vrot.lane.b32.xlu0 %v668, 96
        %v1215 = vpop.permute.xlu0 %1214
        %v1217 = vsel %vm676, %v668, 0
        %v1220 = vsel %vm676, %v1215, 0
        %1222 = vmatprep.subr.bf16.mxu0 0
        %1223 = vmatpush1.bf16.xpose.msra.mxu0 0
        %1224 = vmatprep.subr.bf16.mxu0 0
        %1225 = vmatpush1.bf16.xpose.msra.mxu0 0
        %1226 = vmatprep.subr.bf16.mxu0 0
        %1227 = vmatpush1.bf16.xpose.msra.mxu0 0
        %1228 = vmatprep.subr.bf16.mxu0 0
        %1229 = vmatpush1.bf16.xpose.msra.mxu0 0
        %1230 = vmatprep.subr.bf16.mxu0 0
        %1231 = vmatpush1.bf16.xpose.msra.mxu0 0
        %1232 = vmatprep.subr.bf16.mxu0 0
        %1233 = vmatpush1.bf16.xpose.msra.mxu0 0
        %1234 = vmatprep.subr.bf16.mxu0 0
        %1235 = vmatpush1.bf16.xpose.msra.mxu0 0
        %1236 = vmatprep.subr.bf16.mxu0 0
        %1237 = vmatpush1.bf16.xpose.msra.mxu0 %v1220
        %1238 = vmatprep.subr.bf16.mxu0 0
        %1239 = vmatpush2.bf16.xpose.msra.mxu0 0
        %1240 = vmatprep.subr.bf16.mxu0 0
        %1241 = vmatpush2.bf16.xpose.msra.mxu0 0
        %1242 = vmatprep.subr.bf16.mxu0 0
        %1243 = vmatpush2.bf16.xpose.msra.mxu0 0
        %1244 = vmatprep.subr.bf16.mxu0 0
        %1245 = vmatpush2.bf16.xpose.msra.mxu0 0
        %1246 = vmatprep.subr.bf16.mxu0 0
        %1247 = vmatpush2.bf16.xpose.msra.mxu0 0
        %1248 = vmatprep.subr.bf16.mxu0 0
        %1249 = vmatpush2.bf16.xpose.msra.mxu0 0
        %1250 = vmatprep.subr.bf16.mxu0 0
        %1251 = vmatpush2.bf16.xpose.msra.mxu0 0
        %1252 = vmatprep.subr.bf16.mxu0 0
        %1253 = vmatpush2.bf16.xpose.msra.mxu0 0
        %1254 = vmatprep.mubr.bf16.mxu0 0
        %1255 = vmatmul.mubr.bf16.gmra.mxu0 %v1217
        %v1256 = vpop.f32.mrf.mxu0
        %v1257 = vadd.f32 0.0, %v1256
        %v1258 = vpop.f32.mrf.mxu0
        %v1259 = vpop.f32.mrf.mxu0
        %v1260 = vpop.f32.mrf.mxu0
        %1261 = vdwg.mxu0
        %1263 = vrot.lane.b32.xlu0 %v669, 96
        %v1264 = vpop.permute.xlu0 %1263
        %v1266 = vsel %vm676, %v669, 0
        %v1269 = vsel %vm676, %v1264, 0
        %1271 = vmatprep.subr.bf16.mxu0 0
        %1272 = vmatpush1.bf16.xpose.msra.mxu0 0
        %1273 = vmatprep.subr.bf16.mxu0 0
        %1274 = vmatpush1.bf16.xpose.msra.mxu0 0
        %1275 = vmatprep.subr.bf16.mxu0 0
        %1276 = vmatpush1.bf16.xpose.msra.mxu0 0
        %1277 = vmatprep.subr.bf16.mxu0 0
        %1278 = vmatpush1.bf16.xpose.msra.mxu0 0
        %1279 = vmatprep.subr.bf16.mxu0 0
        %1280 = vmatpush1.bf16.xpose.msra.mxu0 0
        %1281 = vmatprep.subr.bf16.mxu0 0
        %1282 = vmatpush1.bf16.xpose.msra.mxu0 0
        %1283 = vmatprep.subr.bf16.mxu0 0
        %1284 = vmatpush1.bf16.xpose.msra.mxu0 0
        %1285 = vmatprep.subr.bf16.mxu0 0
        %1286 = vmatpush1.bf16.xpose.msra.mxu0 %v1269
        %1287 = vmatprep.subr.bf16.mxu0 0
        %1288 = vmatpush2.bf16.xpose.msra.mxu0 0
        %1289 = vmatprep.subr.bf16.mxu0 0
        %1290 = vmatpush2.bf16.xpose.msra.mxu0 0
        %1291 = vmatprep.subr.bf16.mxu0 0
        %1292 = vmatpush2.bf16.xpose.msra.mxu0 0
        %1293 = vmatprep.subr.bf16.mxu0 0
        %1294 = vmatpush2.bf16.xpose.msra.mxu0 0
        %1295 = vmatprep.subr.bf16.mxu0 0
        %1296 = vmatpush2.bf16.xpose.msra.mxu0 0
        %1297 = vmatprep.subr.bf16.mxu0 0
        %1298 = vmatpush2.bf16.xpose.msra.mxu0 0
        %1299 = vmatprep.subr.bf16.mxu0 0
        %1300 = vmatpush2.bf16.xpose.msra.mxu0 0
        %1301 = vmatprep.subr.bf16.mxu0 0
        %1302 = vmatpush2.bf16.xpose.msra.mxu0 0
        %1303 = vmatprep.mubr.bf16.mxu0 0
        %1304 = vmatmul.mubr.bf16.gmra.mxu0 %v1266
        %v1305 = vpop.f32.mrf.mxu0
        %v1306 = vadd.f32 0.0, %v1305
        %v1307 = vpop.f32.mrf.mxu0
        %v1308 = vpop.f32.mrf.mxu0
        %v1309 = vpop.f32.mrf.mxu0
        %1310 = vdwg.mxu0
        %1312 = vrot.lane.b32.xlu0 %v670, 96
        %v1313 = vpop.permute.xlu0 %1312
        %v1315 = vsel %vm676, %v670, 0
        %v1318 = vsel %vm676, %v1313, 0
        %1320 = vmatprep.subr.bf16.mxu0 0
        %1321 = vmatpush1.bf16.xpose.msra.mxu0 0
        %1322 = vmatprep.subr.bf16.mxu0 0
        %1323 = vmatpush1.bf16.xpose.msra.mxu0 0
        %1324 = vmatprep.subr.bf16.mxu0 0
        %1325 = vmatpush1.bf16.xpose.msra.mxu0 0
        %1326 = vmatprep.subr.bf16.mxu0 0
        %1327 = vmatpush1.bf16.xpose.msra.mxu0 0
        %1328 = vmatprep.subr.bf16.mxu0 0
        %1329 = vmatpush1.bf16.xpose.msra.mxu0 0
        %1330 = vmatprep.subr.bf16.mxu0 0
        %1331 = vmatpush1.bf16.xpose.msra.mxu0 0
        %1332 = vmatprep.subr.bf16.mxu0 0
        %1333 = vmatpush1.bf16.xpose.msra.mxu0 0
        %1334 = vmatprep.subr.bf16.mxu0 0
        %1335 = vmatpush1.bf16.xpose.msra.mxu0 %v1318
        %1336 = vmatprep.subr.bf16.mxu0 0
        %1337 = vmatpush2.bf16.xpose.msra.mxu0 0
        %1338 = vmatprep.subr.bf16.mxu0 0
        %1339 = vmatpush2.bf16.xpose.msra.mxu0 0
        %1340 = vmatprep.subr.bf16.mxu0 0
        %1341 = vmatpush2.bf16.xpose.msra.mxu0 0
        %1342 = vmatprep.subr.bf16.mxu0 0
        %1343 = vmatpush2.bf16.xpose.msra.mxu0 0
        %1344 = vmatprep.subr.bf16.mxu0 0
        %1345 = vmatpush2.bf16.xpose.msra.mxu0 0
        %1346 = vmatprep.subr.bf16.mxu0 0
        %1347 = vmatpush2.bf16.xpose.msra.mxu0 0
        %1348 = vmatprep.subr.bf16.mxu0 0
        %1349 = vmatpush2.bf16.xpose.msra.mxu0 0
        %1350 = vmatprep.subr.bf16.mxu0 0
        %1351 = vmatpush2.bf16.xpose.msra.mxu0 0
        %1352 = vmatprep.mubr.bf16.mxu0 0
        %1353 = vmatmul.mubr.bf16.gmra.mxu0 %v1315
        %v1354 = vpop.f32.mrf.mxu0
        %v1355 = vadd.f32 0.0, %v1354
        %v1356 = vpop.f32.mrf.mxu0
        %v1357 = vpop.f32.mrf.mxu0
        %v1358 = vpop.f32.mrf.mxu0
        %1359 = vdwg.mxu0
        %1361 = vrot.lane.b32.xlu0 %v671, 96
        %v1362 = vpop.permute.xlu0 %1361
        %v1364 = vsel %vm676, %v671, 0
        %v1367 = vsel %vm676, %v1362, 0
        %1369 = vmatprep.subr.bf16.mxu0 0
        %1370 = vmatpush1.bf16.xpose.msra.mxu0 0
        %1371 = vmatprep.subr.bf16.mxu0 0
        %1372 = vmatpush1.bf16.xpose.msra.mxu0 0
        %1373 = vmatprep.subr.bf16.mxu0 0
        %1374 = vmatpush1.bf16.xpose.msra.mxu0 0
        %1375 = vmatprep.subr.bf16.mxu0 0
        %1376 = vmatpush1.bf16.xpose.msra.mxu0 0
        %1377 = vmatprep.subr.bf16.mxu0 0
        %1378 = vmatpush1.bf16.xpose.msra.mxu0 0
        %1379 = vmatprep.subr.bf16.mxu0 0
        %1380 = vmatpush1.bf16.xpose.msra.mxu0 0
        %1381 = vmatprep.subr.bf16.mxu0 0
        %1382 = vmatpush1.bf16.xpose.msra.mxu0 0
        %1383 = vmatprep.subr.bf16.mxu0 0
        %1384 = vmatpush1.bf16.xpose.msra.mxu0 %v1367
        %1385 = vmatprep.subr.bf16.mxu0 0
        %1386 = vmatpush2.bf16.xpose.msra.mxu0 0
        %1387 = vmatprep.subr.bf16.mxu0 0
        %1388 = vmatpush2.bf16.xpose.msra.mxu0 0
        %1389 = vmatprep.subr.bf16.mxu0 0
        %1390 = vmatpush2.bf16.xpose.msra.mxu0 0
        %1391 = vmatprep.subr.bf16.mxu0 0
        %1392 = vmatpush2.bf16.xpose.msra.mxu0 0
        %1393 = vmatprep.subr.bf16.mxu0 0
        %1394 = vmatpush2.bf16.xpose.msra.mxu0 0
        %1395 = vmatprep.subr.bf16.mxu0 0
        %1396 = vmatpush2.bf16.xpose.msra.mxu0 0
        %1397 = vmatprep.subr.bf16.mxu0 0
        %1398 = vmatpush2.bf16.xpose.msra.mxu0 0
        %1399 = vmatprep.subr.bf16.mxu0 0
        %1400 = vmatpush2.bf16.xpose.msra.mxu0 0
        %1401 = vmatprep.mubr.bf16.mxu0 0
        %1402 = vmatmul.mubr.bf16.gmra.mxu0 %v1364
        %v1403 = vpop.f32.mrf.mxu0
        %v1404 = vadd.f32 0.0, %v1403
        %v1405 = vpop.f32.mrf.mxu0
        %v1406 = vpop.f32.mrf.mxu0
        %v1407 = vpop.f32.mrf.mxu0
        %1408 = vdwg.mxu0
        %1410 = vrot.lane.b32.xlu0 %v672, 96
        %v1411 = vpop.permute.xlu0 %1410
        %v1413 = vsel %vm676, %v672, 0
        %v1416 = vsel %vm676, %v1411, 0
        %1418 = vmatprep.subr.bf16.mxu0 0
        %1419 = vmatpush1.bf16.xpose.msra.mxu0 0
        %1420 = vmatprep.subr.bf16.mxu0 0
        %1421 = vmatpush1.bf16.xpose.msra.mxu0 0
        %1422 = vmatprep.subr.bf16.mxu0 0
        %1423 = vmatpush1.bf16.xpose.msra.mxu0 0
        %1424 = vmatprep.subr.bf16.mxu0 0
        %1425 = vmatpush1.bf16.xpose.msra.mxu0 0
        %1426 = vmatprep.subr.bf16.mxu0 0
        %1427 = vmatpush1.bf16.xpose.msra.mxu0 0
        %1428 = vmatprep.subr.bf16.mxu0 0
        %1429 = vmatpush1.bf16.xpose.msra.mxu0 0
        %1430 = vmatprep.subr.bf16.mxu0 0
        %1431 = vmatpush1.bf16.xpose.msra.mxu0 0
        %1432 = vmatprep.subr.bf16.mxu0 0
        %1433 = vmatpush1.bf16.xpose.msra.mxu0 %v1416
        %1434 = vmatprep.subr.bf16.mxu0 0
        %1435 = vmatpush2.bf16.xpose.msra.mxu0 0
        %1436 = vmatprep.subr.bf16.mxu0 0
        %1437 = vmatpush2.bf16.xpose.msra.mxu0 0
        %1438 = vmatprep.subr.bf16.mxu0 0
        %1439 = vmatpush2.bf16.xpose.msra.mxu0 0
        %1440 = vmatprep.subr.bf16.mxu0 0
        %1441 = vmatpush2.bf16.xpose.msra.mxu0 0
        %1442 = vmatprep.subr.bf16.mxu0 0
        %1443 = vmatpush2.bf16.xpose.msra.mxu0 0
        %1444 = vmatprep.subr.bf16.mxu0 0
        %1445 = vmatpush2.bf16.xpose.msra.mxu0 0
        %1446 = vmatprep.subr.bf16.mxu0 0
        %1447 = vmatpush2.bf16.xpose.msra.mxu0 0
        %1448 = vmatprep.subr.bf16.mxu0 0
        %1449 = vmatpush2.bf16.xpose.msra.mxu0 0
        %1450 = vmatprep.mubr.bf16.mxu0 0
        %1451 = vmatmul.mubr.bf16.gmra.mxu0 %v1413
        %v1452 = vpop.f32.mrf.mxu0
        %v1453 = vadd.f32 0.0, %v1452
        %v1454 = vpop.f32.mrf.mxu0
        %v1455 = vpop.f32.mrf.mxu0
        %v1456 = vpop.f32.mrf.mxu0
        %1457 = vdwg.mxu0
        %v1458 = vmul.f32 %v718, 0.5
        %v1459 = vmul.f32 %v767, 0.5
        %v1460 = vmul.f32 %v816, 0.5
        %v1461 = vmul.f32 %v865, 0.5
        %v1462 = vmul.f32 %v914, 0.5
        %v1463 = vmul.f32 %v963, 0.5
        %v1464 = vmul.f32 %v1012, 0.5
        %v1465 = vmul.f32 %v1061, 0.5
        %v1466 = vmul.f32 %v1110, 0.5
        %v1467 = vmul.f32 %v1159, 0.5
        %v1468 = vmul.f32 %v1208, 0.5
        %v1469 = vmul.f32 %v1257, 0.5
        %v1470 = vmul.f32 %v1306, 0.5
        %v1471 = vmul.f32 %v1355, 0.5
        %v1472 = vmul.f32 %v1404, 0.5
        %v1473 = vmul.f32 %v1453, 0.5
        %v1474 = vld [vmem:[#allocation3] sm:$0x1]
        %v1475 = vld [vmem:[#allocation3 + $0x1] sm:$0x1]
        %v1476 = vld [vmem:[#allocation3 + $0x2] sm:$0x1]
        %v1477 = vld [vmem:[#allocation3 + $0x3] sm:$0x1]
        %v1478 = vld [vmem:[#allocation3 + $0x4] sm:$0x1]
        %v1479 = vld [vmem:[#allocation3 + $0x5] sm:$0x1]
        %v1480 = vld [vmem:[#allocation3 + $0x6] sm:$0x1]
        %v1481 = vld [vmem:[#allocation3 + $0x7] sm:$0x1]
        %v1482 = vld [vmem:[#allocation3 + $0x8] sm:$0x1]
        %v1483 = vld [vmem:[#allocation3 + $0x9] sm:$0x1]
        %v1484 = vld [vmem:[#allocation3 + $0xa] sm:$0x1]
        %v1485 = vld [vmem:[#allocation3 + $0xb] sm:$0x1]
        %v1486 = vld [vmem:[#allocation3 + $0xc] sm:$0x1]
        %v1487 = vld [vmem:[#allocation3 + $0xd] sm:$0x1]
        %v1488 = vld [vmem:[#allocation3 + $0xe] sm:$0x1]
        %v1489 = vld [vmem:[#allocation3 + $0xf] sm:$0x1]
        %v1506 = vlaneseq
        %v1507 = vshrl.u32 %v1506, 7
        %v1508 = vsub.s32 0, %v1507
        %v1509 = vrot.slane %v1474, %v1508
        %v1510 = vlaneseq
        %v1511 = vshrl.u32 %v1510, 7
        %v1512 = vsub.s32 0, %v1511
        %v1513 = vrot.slane %v1475, %v1512
        %v1514 = vlaneseq
        %v1515 = vshrl.u32 %v1514, 7
        %v1516 = vsub.s32 0, %v1515
        %v1517 = vrot.slane %v1476, %v1516
        %v1518 = vlaneseq
        %v1519 = vshrl.u32 %v1518, 7
        %v1520 = vsub.s32 0, %v1519
        %v1521 = vrot.slane %v1477, %v1520
        %v1522 = vlaneseq
        %v1523 = vshrl.u32 %v1522, 7
        %v1524 = vsub.s32 0, %v1523
        %v1525 = vrot.slane %v1478, %v1524
        %v1526 = vlaneseq
        %v1527 = vshrl.u32 %v1526, 7
        %v1528 = vsub.s32 0, %v1527
        %v1529 = vrot.slane %v1479, %v1528
        %v1530 = vlaneseq
        %v1531 = vshrl.u32 %v1530, 7
        %v1532 = vsub.s32 0, %v1531
        %v1533 = vrot.slane %v1480, %v1532
        %v1534 = vlaneseq
        %v1535 = vshrl.u32 %v1534, 7
        %v1536 = vsub.s32 0, %v1535
        %v1537 = vrot.slane %v1481, %v1536
        %v1538 = vlaneseq
        %v1539 = vshrl.u32 %v1538, 7
        %v1540 = vsub.s32 0, %v1539
        %v1541 = vrot.slane %v1482, %v1540
        %v1542 = vlaneseq
        %v1543 = vshrl.u32 %v1542, 7
        %v1544 = vsub.s32 0, %v1543
        %v1545 = vrot.slane %v1483, %v1544
        %v1546 = vlaneseq
        %v1547 = vshrl.u32 %v1546, 7
        %v1548 = vsub.s32 0, %v1547
        %v1549 = vrot.slane %v1484, %v1548
        %v1550 = vlaneseq
        %v1551 = vshrl.u32 %v1550, 7
        %v1552 = vsub.s32 0, %v1551
        %v1553 = vrot.slane %v1485, %v1552
        %v1554 = vlaneseq
        %v1555 = vshrl.u32 %v1554, 7
        %v1556 = vsub.s32 0, %v1555
        %v1557 = vrot.slane %v1486, %v1556
        %v1558 = vlaneseq
        %v1559 = vshrl.u32 %v1558, 7
        %v1560 = vsub.s32 0, %v1559
        %v1561 = vrot.slane %v1487, %v1560
        %v1562 = vlaneseq
        %v1563 = vshrl.u32 %v1562, 7
        %v1564 = vsub.s32 0, %v1563
        %v1565 = vrot.slane %v1488, %v1564
        %v1566 = vlaneseq
        %v1567 = vshrl.u32 %v1566, 7
        %v1568 = vsub.s32 0, %v1567
        %v1569 = vrot.slane %v1489, %v1568
        %v1586 = vadd.f32 %v1458, %v1509
        %v1587 = vadd.f32 %v1459, %v1513
        %v1588 = vadd.f32 %v1460, %v1517
        %v1589 = vadd.f32 %v1461, %v1521
        %v1590 = vadd.f32 %v1462, %v1525
        %v1591 = vadd.f32 %v1463, %v1529
        %v1592 = vadd.f32 %v1464, %v1533
        %v1593 = vadd.f32 %v1465, %v1537
        %v1594 = vadd.f32 %v1466, %v1541
        %v1595 = vadd.f32 %v1467, %v1545
        %v1596 = vadd.f32 %v1468, %v1549
        %v1597 = vadd.f32 %v1469, %v1553
        %v1598 = vadd.f32 %v1470, %v1557
        %v1599 = vadd.f32 %v1471, %v1561
        %v1600 = vadd.f32 %v1472, %v1565
        %v1601 = vadd.f32 %v1473, %v1569
        %vm1602 = vcmask 64512
        %v1603 = vsel %vm1602, %v1586, -inf
        %1604 = vmax.xlane.f32.xlu0 %v1603
        %v1605 = vpop.xlane.xlu0 %1604
        %v1606 = vsel %vm1602, %v1587, -inf
        %1607 = vmax.xlane.f32.xlu0 %v1606
        %v1608 = vpop.xlane.xlu0 %1607
        %v1609 = vsel %vm1602, %v1588, -inf
        %1610 = vmax.xlane.f32.xlu0 %v1609
        %v1611 = vpop.xlane.xlu0 %1610
        %v1612 = vsel %vm1602, %v1589, -inf
        %1613 = vmax.xlane.f32.xlu0 %v1612
        %v1614 = vpop.xlane.xlu0 %1613
        %v1615 = vsel %vm1602, %v1590, -inf
        %1616 = vmax.xlane.f32.xlu0 %v1615
        %v1617 = vpop.xlane.xlu0 %1616
        %v1618 = vsel %vm1602, %v1591, -inf
        %1619 = vmax.xlane.f32.xlu0 %v1618
        %v1620 = vpop.xlane.xlu0 %1619
        %v1621 = vsel %vm1602, %v1592, -inf
        %1622 = vmax.xlane.f32.xlu0 %v1621
        %v1623 = vpop.xlane.xlu0 %1622
        %v1624 = vsel %vm1602, %v1593, -inf
        %1625 = vmax.xlane.f32.xlu0 %v1624
        %v1626 = vpop.xlane.xlu0 %1625
        %v1627 = vsel %vm1602, %v1594, -inf
        %1628 = vmax.xlane.f32.xlu0 %v1627
        %v1629 = vpop.xlane.xlu0 %1628
        %v1630 = vsel %vm1602, %v1595, -inf
        %1631 = vmax.xlane.f32.xlu0 %v1630
        %v1632 = vpop.xlane.xlu0 %1631
        %v1633 = vsel %vm1602, %v1596, -inf
        %1634 = vmax.xlane.f32.xlu0 %v1633
        %v1635 = vpop.xlane.xlu0 %1634
        %v1636 = vsel %vm1602, %v1597, -inf
        %1637 = vmax.xlane.f32.xlu0 %v1636
        %v1638 = vpop.xlane.xlu0 %1637
        %v1639 = vsel %vm1602, %v1598, -inf
        %1640 = vmax.xlane.f32.xlu0 %v1639
        %v1641 = vpop.xlane.xlu0 %1640
        %v1642 = vsel %vm1602, %v1599, -inf
        %1643 = vmax.xlane.f32.xlu0 %v1642
        %v1644 = vpop.xlane.xlu0 %1643
        %v1645 = vsel %vm1602, %v1600, -inf
        %1646 = vmax.xlane.f32.xlu0 %v1645
        %v1647 = vpop.xlane.xlu0 %1646
        %v1648 = vsel %vm1602, %v1601, -inf
        %1649 = vmax.xlane.f32.xlu0 %v1648
        %v1650 = vpop.xlane.xlu0 %1649
        %v1651 = vsub.f32 %v1586, %v1605
        %v1652 = vsub.f32 %v1587, %v1608
        %v1653 = vsub.f32 %v1588, %v1611
        %v1654 = vsub.f32 %v1589, %v1614
        %v1655 = vsub.f32 %v1590, %v1617
        %v1656 = vsub.f32 %v1591, %v1620
        %v1657 = vsub.f32 %v1592, %v1623
        %v1658 = vsub.f32 %v1593, %v1626
        %v1659 = vsub.f32 %v1594, %v1629
        %v1660 = vsub.f32 %v1595, %v1632
        %v1661 = vsub.f32 %v1596, %v1635
        %v1662 = vsub.f32 %v1597, %v1638
        %v1663 = vsub.f32 %v1598, %v1641
        %v1664 = vsub.f32 %v1599, %v1644
        %v1665 = vsub.f32 %v1600, %v1647
        %v1666 = vsub.f32 %v1601, %v1650
        %v1667 = vmul.f32 %v1651, 1.442695
        %v1668 = vpow.pop %v1667
        %v1669 = vmul.f32 %v1652, 1.442695
        %v1670 = vpow.pop %v1669
        %v1671 = vmul.f32 %v1653, 1.442695
        %v1672 = vpow.pop %v1671
        %v1673 = vmul.f32 %v1654, 1.442695
        %v1674 = vpow.pop %v1673
        %v1675 = vmul.f32 %v1655, 1.442695
        %v1676 = vpow.pop %v1675
        %v1677 = vmul.f32 %v1656, 1.442695
        %v1678 = vpow.pop %v1677
        %v1679 = vmul.f32 %v1657, 1.442695
        %v1680 = vpow.pop %v1679
        %v1681 = vmul.f32 %v1658, 1.442695
        %v1682 = vpow.pop %v1681
        %v1683 = vmul.f32 %v1659, 1.442695
        %v1684 = vpow.pop %v1683
        %v1685 = vmul.f32 %v1660, 1.442695
        %v1686 = vpow.pop %v1685
        %v1687 = vmul.f32 %v1661, 1.442695
        %v1688 = vpow.pop %v1687
        %v1689 = vmul.f32 %v1662, 1.442695
        %v1690 = vpow.pop %v1689
        %v1691 = vmul.f32 %v1663, 1.442695
        %v1692 = vpow.pop %v1691
        %v1693 = vmul.f32 %v1664, 1.442695
        %v1694 = vpow.pop %v1693
        %v1695 = vmul.f32 %v1665, 1.442695
        %v1696 = vpow.pop %v1695
        %v1697 = vmul.f32 %v1666, 1.442695
        %v1698 = vpow.pop %v1697
        %v1699 = vsel %vm1602, %v1668, 0.0
        %1700 = vadd.xlane.f32.xlu0 %v1699
        %v1701 = vpop.xlane.xlu0 %1700
        %v1702 = vsel %vm1602, %v1670, 0.0
        %1703 = vadd.xlane.f32.xlu0 %v1702
        %v1704 = vpop.xlane.xlu0 %1703
        %v1705 = vsel %vm1602, %v1672, 0.0
        %1706 = vadd.xlane.f32.xlu0 %v1705
        %v1707 = vpop.xlane.xlu0 %1706
        %v1708 = vsel %vm1602, %v1674, 0.0
        %1709 = vadd.xlane.f32.xlu0 %v1708
        %v1710 = vpop.xlane.xlu0 %1709
        %v1711 = vsel %vm1602, %v1676, 0.0
        %1712 = vadd.xlane.f32.xlu0 %v1711
        %v1713 = vpop.xlane.xlu0 %1712
        %v1714 = vsel %vm1602, %v1678, 0.0
        %1715 = vadd.xlane.f32.xlu0 %v1714
        %v1716 = vpop.xlane.xlu0 %1715
        %v1717 = vsel %vm1602, %v1680, 0.0
        %1718 = vadd.xlane.f32.xlu0 %v1717
        %v1719 = vpop.xlane.xlu0 %1718
        %v1720 = vsel %vm1602, %v1682, 0.0
        %1721 = vadd.xlane.f32.xlu0 %v1720
        %v1722 = vpop.xlane.xlu0 %1721
        %v1723 = vsel %vm1602, %v1684, 0.0
        %1724 = vadd.xlane.f32.xlu0 %v1723
        %v1725 = vpop.xlane.xlu0 %1724
        %v1726 = vsel %vm1602, %v1686, 0.0
        %1727 = vadd.xlane.f32.xlu0 %v1726
        %v1728 = vpop.xlane.xlu0 %1727
        %v1729 = vsel %vm1602, %v1688, 0.0
        %1730 = vadd.xlane.f32.xlu0 %v1729
        %v1731 = vpop.xlane.xlu0 %1730
        %v1732 = vsel %vm1602, %v1690, 0.0
        %1733 = vadd.xlane.f32.xlu0 %v1732
        %v1734 = vpop.xlane.xlu0 %1733
        %v1735 = vsel %vm1602, %v1692, 0.0
        %1736 = vadd.xlane.f32.xlu0 %v1735
        %v1737 = vpop.xlane.xlu0 %1736
        %v1738 = vsel %vm1602, %v1694, 0.0
        %1739 = vadd.xlane.f32.xlu0 %v1738
        %v1740 = vpop.xlane.xlu0 %1739
        %v1741 = vsel %vm1602, %v1696, 0.0
        %1742 = vadd.xlane.f32.xlu0 %v1741
        %v1743 = vpop.xlane.xlu0 %1742
        %v1744 = vsel %vm1602, %v1698, 0.0
        %1745 = vadd.xlane.f32.xlu0 %v1744
        %v1746 = vpop.xlane.xlu0 %1745
        %v1747 = vrcp.pop %v1701
        %v1748 = vrcp.pop %v1704
        %v1749 = vrcp.pop %v1707
        %v1750 = vrcp.pop %v1710
        %v1751 = vrcp.pop %v1713
        %v1752 = vrcp.pop %v1716
        %v1753 = vrcp.pop %v1719
        %v1754 = vrcp.pop %v1722
        %v1755 = vrcp.pop %v1725
        %v1756 = vrcp.pop %v1728
        %v1757 = vrcp.pop %v1731
        %v1758 = vrcp.pop %v1734
        %v1759 = vrcp.pop %v1737
        %v1760 = vrcp.pop %v1740
        %v1761 = vrcp.pop %v1743
        %v1762 = vrcp.pop %v1746
        %v1763 = vmul.f32 %v1668, %v1747
        %v1764 = vmul.f32 %v1670, %v1748
        %v1765 = vmul.f32 %v1672, %v1749
        %v1766 = vmul.f32 %v1674, %v1750
        %v1767 = vmul.f32 %v1676, %v1751
        %v1768 = vmul.f32 %v1678, %v1752
        %v1769 = vmul.f32 %v1680, %v1753
        %v1770 = vmul.f32 %v1682, %v1754
        %v1771 = vmul.f32 %v1684, %v1755
        %v1772 = vmul.f32 %v1686, %v1756
        %v1773 = vmul.f32 %v1688, %v1757
        %v1774 = vmul.f32 %v1690, %v1758
        %v1775 = vmul.f32 %v1692, %v1759
        %v1776 = vmul.f32 %v1694, %v1760
        %v1777 = vmul.f32 %v1696, %v1761
        %v1778 = vmul.f32 %v1698, %v1762
        %v1779 = vpack.c.bf16 %v1763, %v1763
        %v1780 = vpack.c.bf16 %v1764, %v1764
        %v1781 = vpack.c.bf16 %v1765, %v1765
        %v1782 = vpack.c.bf16 %v1766, %v1766
        %v1783 = vpack.c.bf16 %v1767, %v1767
        %v1784 = vpack.c.bf16 %v1768, %v1768
        %v1785 = vpack.c.bf16 %v1769, %v1769
        %v1786 = vpack.c.bf16 %v1770, %v1770
        %v1787 = vpack.c.bf16 %v1771, %v1771
        %v1788 = vpack.c.bf16 %v1772, %v1772
        %v1789 = vpack.c.bf16 %v1773, %v1773
        %v1790 = vpack.c.bf16 %v1774, %v1774
        %v1791 = vpack.c.bf16 %v1775, %v1775
        %v1792 = vpack.c.bf16 %v1776, %v1776
        %v1793 = vpack.c.bf16 %v1777, %v1777
        %v1794 = vpack.c.bf16 %v1778, %v1778
        %1795 = vrot.lane.b32.xlu0 %v657, 64
        %v1796 = vpop.permute.xlu0 %1795
        %v1798 = vsel %vm1602, %v1779, 0
        %vm1800 = vcmask 1043456
        %v1802 = vsel %vm1800, %v1796, 0
        %1804 = vmatprep.subr.bf16.mxu0 0
        %1805 = vmatpush1.bf16.msra.mxu0 0
        %1806 = vmatprep.subr.bf16.mxu0 0
        %1807 = vmatpush1.bf16.msra.mxu0 0
        %1808 = vmatprep.subr.bf16.mxu0 0
        %1809 = vmatpush1.bf16.msra.mxu0 0
        %1810 = vmatprep.subr.bf16.mxu0 0
        %1811 = vmatpush1.bf16.msra.mxu0 0
        %1812 = vmatprep.subr.bf16.mxu0 0
        %1813 = vmatpush1.bf16.msra.mxu0 0
        %1814 = vmatprep.subr.bf16.mxu0 0
        %1815 = vmatpush1.bf16.msra.mxu0 0
        %1816 = vmatprep.subr.bf16.mxu0 0
        %1817 = vmatpush1.bf16.msra.mxu0 0
        %1818 = vmatprep.subr.bf16.mxu0 0
        %1819 = vmatpush1.bf16.msra.mxu0 %v1802
        %1820 = vmatprep.subr.bf16.mxu0 0
        %1821 = vmatpush2.bf16.msra.mxu0 0
        %1822 = vmatprep.subr.bf16.mxu0 0
        %1823 = vmatpush2.bf16.msra.mxu0 0
        %1824 = vmatprep.subr.bf16.mxu0 0
        %1825 = vmatpush2.bf16.msra.mxu0 0
        %1826 = vmatprep.subr.bf16.mxu0 0
        %1827 = vmatpush2.bf16.msra.mxu0 0
        %1828 = vmatprep.subr.bf16.mxu0 0
        %1829 = vmatpush2.bf16.msra.mxu0 0
        %1830 = vmatprep.subr.bf16.mxu0 0
        %1831 = vmatpush2.bf16.msra.mxu0 0
        %1832 = vmatprep.subr.bf16.mxu0 0
        %1833 = vmatpush2.bf16.msra.mxu0 0
        %1834 = vmatprep.subr.bf16.mxu0 0
        %1835 = vmatpush2.bf16.msra.mxu0 0
        %1836 = vmatprep.mubr.bf16.mxu0 0
        %1837 = vmatmul.mubr.bf16.gmra.mxu0 %v1798
        %v1838 = vpop.f32.mrf.mxu0
        %v1839 = vadd.f32 0.0, %v1838
        %v1840 = vpop.f32.mrf.mxu0
        %v1841 = vpop.f32.mrf.mxu0
        %v1842 = vpop.f32.mrf.mxu0
        %1843 = vdwg.mxu0
        %1844 = vrot.lane.b32.xlu0 %v658, 64
        %v1845 = vpop.permute.xlu0 %1844
        %v1847 = vsel %vm1602, %v1780, 0
        %v1850 = vsel %vm1800, %v1845, 0
        %1852 = vmatprep.subr.bf16.mxu0 0
        %1853 = vmatpush1.bf16.msra.mxu0 0
        %1854 = vmatprep.subr.bf16.mxu0 0
        %1855 = vmatpush1.bf16.msra.mxu0 0
        %1856 = vmatprep.subr.bf16.mxu0 0
        %1857 = vmatpush1.bf16.msra.mxu0 0
        %1858 = vmatprep.subr.bf16.mxu0 0
        %1859 = vmatpush1.bf16.msra.mxu0 0
        %1860 = vmatprep.subr.bf16.mxu0 0
        %1861 = vmatpush1.bf16.msra.mxu0 0
        %1862 = vmatprep.subr.bf16.mxu0 0
        %1863 = vmatpush1.bf16.msra.mxu0 0
        %1864 = vmatprep.subr.bf16.mxu0 0
        %1865 = vmatpush1.bf16.msra.mxu0 0
        %1866 = vmatprep.subr.bf16.mxu0 0
        %1867 = vmatpush1.bf16.msra.mxu0 %v1850
        %1868 = vmatprep.subr.bf16.mxu0 0
        %1869 = vmatpush2.bf16.msra.mxu0 0
        %1870 = vmatprep.subr.bf16.mxu0 0
        %1871 = vmatpush2.bf16.msra.mxu0 0
        %1872 = vmatprep.subr.bf16.mxu0 0
        %1873 = vmatpush2.bf16.msra.mxu0 0
        %1874 = vmatprep.subr.bf16.mxu0 0
        %1875 = vmatpush2.bf16.msra.mxu0 0
        %1876 = vmatprep.subr.bf16.mxu0 0
        %1877 = vmatpush2.bf16.msra.mxu0 0
        %1878 = vmatprep.subr.bf16.mxu0 0
        %1879 = vmatpush2.bf16.msra.mxu0 0
        %1880 = vmatprep.subr.bf16.mxu0 0
        %1881 = vmatpush2.bf16.msra.mxu0 0
        %1882 = vmatprep.subr.bf16.mxu0 0
        %1883 = vmatpush2.bf16.msra.mxu0 0
        %1884 = vmatprep.mubr.bf16.mxu0 0
        %1885 = vmatmul.mubr.bf16.gmra.mxu0 %v1847
        %v1886 = vpop.f32.mrf.mxu0
        %v1887 = vadd.f32 0.0, %v1886
        %v1888 = vpop.f32.mrf.mxu0
        %v1889 = vpop.f32.mrf.mxu0
        %v1890 = vpop.f32.mrf.mxu0
        %1891 = vdwg.mxu0
        %1892 = vrot.lane.b32.xlu0 %v659, 64
        %v1893 = vpop.permute.xlu0 %1892
        %v1895 = vsel %vm1602, %v1781, 0
        %v1898 = vsel %vm1800, %v1893, 0
        %1900 = vmatprep.subr.bf16.mxu0 0
        %1901 = vmatpush1.bf16.msra.mxu0 0
        %1902 = vmatprep.subr.bf16.mxu0 0
        %1903 = vmatpush1.bf16.msra.mxu0 0
        %1904 = vmatprep.subr.bf16.mxu0 0
        %1905 = vmatpush1.bf16.msra.mxu0 0
        %1906 = vmatprep.subr.bf16.mxu0 0
        %1907 = vmatpush1.bf16.msra.mxu0 0
        %1908 = vmatprep.subr.bf16.mxu0 0
        %1909 = vmatpush1.bf16.msra.mxu0 0
        %1910 = vmatprep.subr.bf16.mxu0 0
        %1911 = vmatpush1.bf16.msra.mxu0 0
        %1912 = vmatprep.subr.bf16.mxu0 0
        %1913 = vmatpush1.bf16.msra.mxu0 0
        %1914 = vmatprep.subr.bf16.mxu0 0
        %1915 = vmatpush1.bf16.msra.mxu0 %v1898
        %1916 = vmatprep.subr.bf16.mxu0 0
        %1917 = vmatpush2.bf16.msra.mxu0 0
        %1918 = vmatprep.subr.bf16.mxu0 0
        %1919 = vmatpush2.bf16.msra.mxu0 0
        %1920 = vmatprep.subr.bf16.mxu0 0
        %1921 = vmatpush2.bf16.msra.mxu0 0
        %1922 = vmatprep.subr.bf16.mxu0 0
        %1923 = vmatpush2.bf16.msra.mxu0 0
        %1924 = vmatprep.subr.bf16.mxu0 0
        %1925 = vmatpush2.bf16.msra.mxu0 0
        %1926 = vmatprep.subr.bf16.mxu0 0
        %1927 = vmatpush2.bf16.msra.mxu0 0
        %1928 = vmatprep.subr.bf16.mxu0 0
        %1929 = vmatpush2.bf16.msra.mxu0 0
        %1930 = vmatprep.subr.bf16.mxu0 0
        %1931 = vmatpush2.bf16.msra.mxu0 0
        %1932 = vmatprep.mubr.bf16.mxu0 0
        %1933 = vmatmul.mubr.bf16.gmra.mxu0 %v1895
        %v1934 = vpop.f32.mrf.mxu0
        %v1935 = vadd.f32 0.0, %v1934
        %v1936 = vpop.f32.mrf.mxu0
        %v1937 = vpop.f32.mrf.mxu0
        %v1938 = vpop.f32.mrf.mxu0
        %1939 = vdwg.mxu0
        %1940 = vrot.lane.b32.xlu0 %v660, 64
        %v1941 = vpop.permute.xlu0 %1940
        %v1943 = vsel %vm1602, %v1782, 0
        %v1946 = vsel %vm1800, %v1941, 0
        %1948 = vmatprep.subr.bf16.mxu0 0
        %1949 = vmatpush1.bf16.msra.mxu0 0
        %1950 = vmatprep.subr.bf16.mxu0 0
        %1951 = vmatpush1.bf16.msra.mxu0 0
        %1952 = vmatprep.subr.bf16.mxu0 0
        %1953 = vmatpush1.bf16.msra.mxu0 0
        %1954 = vmatprep.subr.bf16.mxu0 0
        %1955 = vmatpush1.bf16.msra.mxu0 0
        %1956 = vmatprep.subr.bf16.mxu0 0
        %1957 = vmatpush1.bf16.msra.mxu0 0
        %1958 = vmatprep.subr.bf16.mxu0 0
        %1959 = vmatpush1.bf16.msra.mxu0 0
        %1960 = vmatprep.subr.bf16.mxu0 0
        %1961 = vmatpush1.bf16.msra.mxu0 0
        %1962 = vmatprep.subr.bf16.mxu0 0
        %1963 = vmatpush1.bf16.msra.mxu0 %v1946
        %1964 = vmatprep.subr.bf16.mxu0 0
        %1965 = vmatpush2.bf16.msra.mxu0 0
        %1966 = vmatprep.subr.bf16.mxu0 0
        %1967 = vmatpush2.bf16.msra.mxu0 0
        %1968 = vmatprep.subr.bf16.mxu0 0
        %1969 = vmatpush2.bf16.msra.mxu0 0
        %1970 = vmatprep.subr.bf16.mxu0 0
        %1971 = vmatpush2.bf16.msra.mxu0 0
        %1972 = vmatprep.subr.bf16.mxu0 0
        %1973 = vmatpush2.bf16.msra.mxu0 0
        %1974 = vmatprep.subr.bf16.mxu0 0
        %1975 = vmatpush2.bf16.msra.mxu0 0
        %1976 = vmatprep.subr.bf16.mxu0 0
        %1977 = vmatpush2.bf16.msra.mxu0 0
        %1978 = vmatprep.subr.bf16.mxu0 0
        %1979 = vmatpush2.bf16.msra.mxu0 0
        %1980 = vmatprep.mubr.bf16.mxu0 0
        %1981 = vmatmul.mubr.bf16.gmra.mxu0 %v1943
        %v1982 = vpop.f32.mrf.mxu0
        %v1983 = vadd.f32 0.0, %v1982
        %v1984 = vpop.f32.mrf.mxu0
        %v1985 = vpop.f32.mrf.mxu0
        %v1986 = vpop.f32.mrf.mxu0
        %1987 = vdwg.mxu0
        %1988 = vrot.lane.b32.xlu0 %v661, 64
        %v1989 = vpop.permute.xlu0 %1988
        %v1991 = vsel %vm1602, %v1783, 0
        %v1994 = vsel %vm1800, %v1989, 0
        %1996 = vmatprep.subr.bf16.mxu0 0
        %1997 = vmatpush1.bf16.msra.mxu0 0
        %1998 = vmatprep.subr.bf16.mxu0 0
        %1999 = vmatpush1.bf16.msra.mxu0 0
        %2000 = vmatprep.subr.bf16.mxu0 0
        %2001 = vmatpush1.bf16.msra.mxu0 0
        %2002 = vmatprep.subr.bf16.mxu0 0
        %2003 = vmatpush1.bf16.msra.mxu0 0
        %2004 = vmatprep.subr.bf16.mxu0 0
        %2005 = vmatpush1.bf16.msra.mxu0 0
        %2006 = vmatprep.subr.bf16.mxu0 0
        %2007 = vmatpush1.bf16.msra.mxu0 0
        %2008 = vmatprep.subr.bf16.mxu0 0
        %2009 = vmatpush1.bf16.msra.mxu0 0
        %2010 = vmatprep.subr.bf16.mxu0 0
        %2011 = vmatpush1.bf16.msra.mxu0 %v1994
        %2012 = vmatprep.subr.bf16.mxu0 0
        %2013 = vmatpush2.bf16.msra.mxu0 0
        %2014 = vmatprep.subr.bf16.mxu0 0
        %2015 = vmatpush2.bf16.msra.mxu0 0
        %2016 = vmatprep.subr.bf16.mxu0 0
        %2017 = vmatpush2.bf16.msra.mxu0 0
        %2018 = vmatprep.subr.bf16.mxu0 0
        %2019 = vmatpush2.bf16.msra.mxu0 0
        %2020 = vmatprep.subr.bf16.mxu0 0
        %2021 = vmatpush2.bf16.msra.mxu0 0
        %2022 = vmatprep.subr.bf16.mxu0 0
        %2023 = vmatpush2.bf16.msra.mxu0 0
        %2024 = vmatprep.subr.bf16.mxu0 0
        %2025 = vmatpush2.bf16.msra.mxu0 0
        %2026 = vmatprep.subr.bf16.mxu0 0
        %2027 = vmatpush2.bf16.msra.mxu0 0
        %2028 = vmatprep.mubr.bf16.mxu0 0
        %2029 = vmatmul.mubr.bf16.gmra.mxu0 %v1991
        %v2030 = vpop.f32.mrf.mxu0
        %v2031 = vadd.f32 0.0, %v2030
        %v2032 = vpop.f32.mrf.mxu0
        %v2033 = vpop.f32.mrf.mxu0
        %v2034 = vpop.f32.mrf.mxu0
        %2035 = vdwg.mxu0
        %2036 = vrot.lane.b32.xlu0 %v662, 64
        %v2037 = vpop.permute.xlu0 %2036
        %v2039 = vsel %vm1602, %v1784, 0
        %v2042 = vsel %vm1800, %v2037, 0
        %2044 = vmatprep.subr.bf16.mxu0 0
        %2045 = vmatpush1.bf16.msra.mxu0 0
        %2046 = vmatprep.subr.bf16.mxu0 0
        %2047 = vmatpush1.bf16.msra.mxu0 0
        %2048 = vmatprep.subr.bf16.mxu0 0
        %2049 = vmatpush1.bf16.msra.mxu0 0
        %2050 = vmatprep.subr.bf16.mxu0 0
        %2051 = vmatpush1.bf16.msra.mxu0 0
        %2052 = vmatprep.subr.bf16.mxu0 0
        %2053 = vmatpush1.bf16.msra.mxu0 0
        %2054 = vmatprep.subr.bf16.mxu0 0
        %2055 = vmatpush1.bf16.msra.mxu0 0
        %2056 = vmatprep.subr.bf16.mxu0 0
        %2057 = vmatpush1.bf16.msra.mxu0 0
        %2058 = vmatprep.subr.bf16.mxu0 0
        %2059 = vmatpush1.bf16.msra.mxu0 %v2042
        %2060 = vmatprep.subr.bf16.mxu0 0
        %2061 = vmatpush2.bf16.msra.mxu0 0
        %2062 = vmatprep.subr.bf16.mxu0 0
        %2063 = vmatpush2.bf16.msra.mxu0 0
        %2064 = vmatprep.subr.bf16.mxu0 0
        %2065 = vmatpush2.bf16.msra.mxu0 0
        %2066 = vmatprep.subr.bf16.mxu0 0
        %2067 = vmatpush2.bf16.msra.mxu0 0
        %2068 = vmatprep.subr.bf16.mxu0 0
        %2069 = vmatpush2.bf16.msra.mxu0 0
        %2070 = vmatprep.subr.bf16.mxu0 0
        %2071 = vmatpush2.bf16.msra.mxu0 0
        %2072 = vmatprep.subr.bf16.mxu0 0
        %2073 = vmatpush2.bf16.msra.mxu0 0
        %2074 = vmatprep.subr.bf16.mxu0 0
        %2075 = vmatpush2.bf16.msra.mxu0 0
        %2076 = vmatprep.mubr.bf16.mxu0 0
        %2077 = vmatmul.mubr.bf16.gmra.mxu0 %v2039
        %v2078 = vpop.f32.mrf.mxu0
        %v2079 = vadd.f32 0.0, %v2078
        %v2080 = vpop.f32.mrf.mxu0
        %v2081 = vpop.f32.mrf.mxu0
        %v2082 = vpop.f32.mrf.mxu0
        %2083 = vdwg.mxu0
        %2084 = vrot.lane.b32.xlu0 %v663, 64
        %v2085 = vpop.permute.xlu0 %2084
        %v2087 = vsel %vm1602, %v1785, 0
        %v2090 = vsel %vm1800, %v2085, 0
        %2092 = vmatprep.subr.bf16.mxu0 0
        %2093 = vmatpush1.bf16.msra.mxu0 0
        %2094 = vmatprep.subr.bf16.mxu0 0
        %2095 = vmatpush1.bf16.msra.mxu0 0
        %2096 = vmatprep.subr.bf16.mxu0 0
        %2097 = vmatpush1.bf16.msra.mxu0 0
        %2098 = vmatprep.subr.bf16.mxu0 0
        %2099 = vmatpush1.bf16.msra.mxu0 0
        %2100 = vmatprep.subr.bf16.mxu0 0
        %2101 = vmatpush1.bf16.msra.mxu0 0
        %2102 = vmatprep.subr.bf16.mxu0 0
        %2103 = vmatpush1.bf16.msra.mxu0 0
        %2104 = vmatprep.subr.bf16.mxu0 0
        %2105 = vmatpush1.bf16.msra.mxu0 0
        %2106 = vmatprep.subr.bf16.mxu0 0
        %2107 = vmatpush1.bf16.msra.mxu0 %v2090
        %2108 = vmatprep.subr.bf16.mxu0 0
        %2109 = vmatpush2.bf16.msra.mxu0 0
        %2110 = vmatprep.subr.bf16.mxu0 0
        %2111 = vmatpush2.bf16.msra.mxu0 0
        %2112 = vmatprep.subr.bf16.mxu0 0
        %2113 = vmatpush2.bf16.msra.mxu0 0
        %2114 = vmatprep.subr.bf16.mxu0 0
        %2115 = vmatpush2.bf16.msra.mxu0 0
        %2116 = vmatprep.subr.bf16.mxu0 0
        %2117 = vmatpush2.bf16.msra.mxu0 0
        %2118 = vmatprep.subr.bf16.mxu0 0
        %2119 = vmatpush2.bf16.msra.mxu0 0
        %2120 = vmatprep.subr.bf16.mxu0 0
        %2121 = vmatpush2.bf16.msra.mxu0 0
        %2122 = vmatprep.subr.bf16.mxu0 0
        %2123 = vmatpush2.bf16.msra.mxu0 0
        %2124 = vmatprep.mubr.bf16.mxu0 0
        %2125 = vmatmul.mubr.bf16.gmra.mxu0 %v2087
        %v2126 = vpop.f32.mrf.mxu0
        %v2127 = vadd.f32 0.0, %v2126
        %v2128 = vpop.f32.mrf.mxu0
        %v2129 = vpop.f32.mrf.mxu0
        %v2130 = vpop.f32.mrf.mxu0
        %2131 = vdwg.mxu0
        %2132 = vrot.lane.b32.xlu0 %v664, 64
        %v2133 = vpop.permute.xlu0 %2132
        %v2135 = vsel %vm1602, %v1786, 0
        %v2138 = vsel %vm1800, %v2133, 0
        %2140 = vmatprep.subr.bf16.mxu0 0
        %2141 = vmatpush1.bf16.msra.mxu0 0
        %2142 = vmatprep.subr.bf16.mxu0 0
        %2143 = vmatpush1.bf16.msra.mxu0 0
        %2144 = vmatprep.subr.bf16.mxu0 0
        %2145 = vmatpush1.bf16.msra.mxu0 0
        %2146 = vmatprep.subr.bf16.mxu0 0
        %2147 = vmatpush1.bf16.msra.mxu0 0
        %2148 = vmatprep.subr.bf16.mxu0 0
        %2149 = vmatpush1.bf16.msra.mxu0 0
        %2150 = vmatprep.subr.bf16.mxu0 0
        %2151 = vmatpush1.bf16.msra.mxu0 0
        %2152 = vmatprep.subr.bf16.mxu0 0
        %2153 = vmatpush1.bf16.msra.mxu0 0
        %2154 = vmatprep.subr.bf16.mxu0 0
        %2155 = vmatpush1.bf16.msra.mxu0 %v2138
        %2156 = vmatprep.subr.bf16.mxu0 0
        %2157 = vmatpush2.bf16.msra.mxu0 0
        %2158 = vmatprep.subr.bf16.mxu0 0
        %2159 = vmatpush2.bf16.msra.mxu0 0
        %2160 = vmatprep.subr.bf16.mxu0 0
        %2161 = vmatpush2.bf16.msra.mxu0 0
        %2162 = vmatprep.subr.bf16.mxu0 0
        %2163 = vmatpush2.bf16.msra.mxu0 0
        %2164 = vmatprep.subr.bf16.mxu0 0
        %2165 = vmatpush2.bf16.msra.mxu0 0
        %2166 = vmatprep.subr.bf16.mxu0 0
        %2167 = vmatpush2.bf16.msra.mxu0 0
        %2168 = vmatprep.subr.bf16.mxu0 0
        %2169 = vmatpush2.bf16.msra.mxu0 0
        %2170 = vmatprep.subr.bf16.mxu0 0
        %2171 = vmatpush2.bf16.msra.mxu0 0
        %2172 = vmatprep.mubr.bf16.mxu0 0
        %2173 = vmatmul.mubr.bf16.gmra.mxu0 %v2135
        %v2174 = vpop.f32.mrf.mxu0
        %v2175 = vadd.f32 0.0, %v2174
        %v2176 = vpop.f32.mrf.mxu0
        %v2177 = vpop.f32.mrf.mxu0
        %v2178 = vpop.f32.mrf.mxu0
        %2179 = vdwg.mxu0
        %2180 = vrot.lane.b32.xlu0 %v665, 64
        %v2181 = vpop.permute.xlu0 %2180
        %v2183 = vsel %vm1602, %v1787, 0
        %v2186 = vsel %vm1800, %v2181, 0
        %2188 = vmatprep.subr.bf16.mxu0 0
        %2189 = vmatpush1.bf16.msra.mxu0 0
        %2190 = vmatprep.subr.bf16.mxu0 0
        %2191 = vmatpush1.bf16.msra.mxu0 0
        %2192 = vmatprep.subr.bf16.mxu0 0
        %2193 = vmatpush1.bf16.msra.mxu0 0
        %2194 = vmatprep.subr.bf16.mxu0 0
        %2195 = vmatpush1.bf16.msra.mxu0 0
        %2196 = vmatprep.subr.bf16.mxu0 0
        %2197 = vmatpush1.bf16.msra.mxu0 0
        %2198 = vmatprep.subr.bf16.mxu0 0
        %2199 = vmatpush1.bf16.msra.mxu0 0
        %2200 = vmatprep.subr.bf16.mxu0 0
        %2201 = vmatpush1.bf16.msra.mxu0 0
        %2202 = vmatprep.subr.bf16.mxu0 0
        %2203 = vmatpush1.bf16.msra.mxu0 %v2186
        %2204 = vmatprep.subr.bf16.mxu0 0
        %2205 = vmatpush2.bf16.msra.mxu0 0
        %2206 = vmatprep.subr.bf16.mxu0 0
        %2207 = vmatpush2.bf16.msra.mxu0 0
        %2208 = vmatprep.subr.bf16.mxu0 0
        %2209 = vmatpush2.bf16.msra.mxu0 0
        %2210 = vmatprep.subr.bf16.mxu0 0
        %2211 = vmatpush2.bf16.msra.mxu0 0
        %2212 = vmatprep.subr.bf16.mxu0 0
        %2213 = vmatpush2.bf16.msra.mxu0 0
        %2214 = vmatprep.subr.bf16.mxu0 0
        %2215 = vmatpush2.bf16.msra.mxu0 0
        %2216 = vmatprep.subr.bf16.mxu0 0
        %2217 = vmatpush2.bf16.msra.mxu0 0
        %2218 = vmatprep.subr.bf16.mxu0 0
        %2219 = vmatpush2.bf16.msra.mxu0 0
        %2220 = vmatprep.mubr.bf16.mxu0 0
        %2221 = vmatmul.mubr.bf16.gmra.mxu0 %v2183
        %v2222 = vpop.f32.mrf.mxu0
        %v2223 = vadd.f32 0.0, %v2222
        %v2224 = vpop.f32.mrf.mxu0
        %v2225 = vpop.f32.mrf.mxu0
        %v2226 = vpop.f32.mrf.mxu0
        %2227 = vdwg.mxu0
        %2228 = vrot.lane.b32.xlu0 %v666, 64
        %v2229 = vpop.permute.xlu0 %2228
        %v2231 = vsel %vm1602, %v1788, 0
        %v2234 = vsel %vm1800, %v2229, 0
        %2236 = vmatprep.subr.bf16.mxu0 0
        %2237 = vmatpush1.bf16.msra.mxu0 0
        %2238 = vmatprep.subr.bf16.mxu0 0
        %2239 = vmatpush1.bf16.msra.mxu0 0
        %2240 = vmatprep.subr.bf16.mxu0 0
        %2241 = vmatpush1.bf16.msra.mxu0 0
        %2242 = vmatprep.subr.bf16.mxu0 0
        %2243 = vmatpush1.bf16.msra.mxu0 0
        %2244 = vmatprep.subr.bf16.mxu0 0
        %2245 = vmatpush1.bf16.msra.mxu0 0
        %2246 = vmatprep.subr.bf16.mxu0 0
        %2247 = vmatpush1.bf16.msra.mxu0 0
        %2248 = vmatprep.subr.bf16.mxu0 0
        %2249 = vmatpush1.bf16.msra.mxu0 0
        %2250 = vmatprep.subr.bf16.mxu0 0
        %2251 = vmatpush1.bf16.msra.mxu0 %v2234
        %2252 = vmatprep.subr.bf16.mxu0 0
        %2253 = vmatpush2.bf16.msra.mxu0 0
        %2254 = vmatprep.subr.bf16.mxu0 0
        %2255 = vmatpush2.bf16.msra.mxu0 0
        %2256 = vmatprep.subr.bf16.mxu0 0
        %2257 = vmatpush2.bf16.msra.mxu0 0
        %2258 = vmatprep.subr.bf16.mxu0 0
        %2259 = vmatpush2.bf16.msra.mxu0 0
        %2260 = vmatprep.subr.bf16.mxu0 0
        %2261 = vmatpush2.bf16.msra.mxu0 0
        %2262 = vmatprep.subr.bf16.mxu0 0
        %2263 = vmatpush2.bf16.msra.mxu0 0
        %2264 = vmatprep.subr.bf16.mxu0 0
        %2265 = vmatpush2.bf16.msra.mxu0 0
        %2266 = vmatprep.subr.bf16.mxu0 0
        %2267 = vmatpush2.bf16.msra.mxu0 0
        %2268 = vmatprep.mubr.bf16.mxu0 0
        %2269 = vmatmul.mubr.bf16.gmra.mxu0 %v2231
        %v2270 = vpop.f32.mrf.mxu0
        %v2271 = vadd.f32 0.0, %v2270
        %v2272 = vpop.f32.mrf.mxu0
        %v2273 = vpop.f32.mrf.mxu0
        %v2274 = vpop.f32.mrf.mxu0
        %2275 = vdwg.mxu0
        %2276 = vrot.lane.b32.xlu0 %v667, 64
        %v2277 = vpop.permute.xlu0 %2276
        %v2279 = vsel %vm1602, %v1789, 0
        %v2282 = vsel %vm1800, %v2277, 0
        %2284 = vmatprep.subr.bf16.mxu0 0
        %2285 = vmatpush1.bf16.msra.mxu0 0
        %2286 = vmatprep.subr.bf16.mxu0 0
        %2287 = vmatpush1.bf16.msra.mxu0 0
        %2288 = vmatprep.subr.bf16.mxu0 0
        %2289 = vmatpush1.bf16.msra.mxu0 0
        %2290 = vmatprep.subr.bf16.mxu0 0
        %2291 = vmatpush1.bf16.msra.mxu0 0
        %2292 = vmatprep.subr.bf16.mxu0 0
        %2293 = vmatpush1.bf16.msra.mxu0 0
        %2294 = vmatprep.subr.bf16.mxu0 0
        %2295 = vmatpush1.bf16.msra.mxu0 0
        %2296 = vmatprep.subr.bf16.mxu0 0
        %2297 = vmatpush1.bf16.msra.mxu0 0
        %2298 = vmatprep.subr.bf16.mxu0 0
        %2299 = vmatpush1.bf16.msra.mxu0 %v2282
        %2300 = vmatprep.subr.bf16.mxu0 0
        %2301 = vmatpush2.bf16.msra.mxu0 0
        %2302 = vmatprep.subr.bf16.mxu0 0
        %2303 = vmatpush2.bf16.msra.mxu0 0
        %2304 = vmatprep.subr.bf16.mxu0 0
        %2305 = vmatpush2.bf16.msra.mxu0 0
        %2306 = vmatprep.subr.bf16.mxu0 0
        %2307 = vmatpush2.bf16.msra.mxu0 0
        %2308 = vmatprep.subr.bf16.mxu0 0
        %2309 = vmatpush2.bf16.msra.mxu0 0
        %2310 = vmatprep.subr.bf16.mxu0 0
        %2311 = vmatpush2.bf16.msra.mxu0 0
        %2312 = vmatprep.subr.bf16.mxu0 0
        %2313 = vmatpush2.bf16.msra.mxu0 0
        %2314 = vmatprep.subr.bf16.mxu0 0
        %2315 = vmatpush2.bf16.msra.mxu0 0
        %2316 = vmatprep.mubr.bf16.mxu0 0
        %2317 = vmatmul.mubr.bf16.gmra.mxu0 %v2279
        %v2318 = vpop.f32.mrf.mxu0
        %v2319 = vadd.f32 0.0, %v2318
        %v2320 = vpop.f32.mrf.mxu0
        %v2321 = vpop.f32.mrf.mxu0
        %v2322 = vpop.f32.mrf.mxu0
        %2323 = vdwg.mxu0
        %2324 = vrot.lane.b32.xlu0 %v668, 64
        %v2325 = vpop.permute.xlu0 %2324
        %v2327 = vsel %vm1602, %v1790, 0
        %v2330 = vsel %vm1800, %v2325, 0
        %2332 = vmatprep.subr.bf16.mxu0 0
        %2333 = vmatpush1.bf16.msra.mxu0 0
        %2334 = vmatprep.subr.bf16.mxu0 0
        %2335 = vmatpush1.bf16.msra.mxu0 0
        %2336 = vmatprep.subr.bf16.mxu0 0
        %2337 = vmatpush1.bf16.msra.mxu0 0
        %2338 = vmatprep.subr.bf16.mxu0 0
        %2339 = vmatpush1.bf16.msra.mxu0 0
        %2340 = vmatprep.subr.bf16.mxu0 0
        %2341 = vmatpush1.bf16.msra.mxu0 0
        %2342 = vmatprep.subr.bf16.mxu0 0
        %2343 = vmatpush1.bf16.msra.mxu0 0
        %2344 = vmatprep.subr.bf16.mxu0 0
        %2345 = vmatpush1.bf16.msra.mxu0 0
        %2346 = vmatprep.subr.bf16.mxu0 0
        %2347 = vmatpush1.bf16.msra.mxu0 %v2330
        %2348 = vmatprep.subr.bf16.mxu0 0
        %2349 = vmatpush2.bf16.msra.mxu0 0
        %2350 = vmatprep.subr.bf16.mxu0 0
        %2351 = vmatpush2.bf16.msra.mxu0 0
        %2352 = vmatprep.subr.bf16.mxu0 0
        %2353 = vmatpush2.bf16.msra.mxu0 0
        %2354 = vmatprep.subr.bf16.mxu0 0
        %2355 = vmatpush2.bf16.msra.mxu0 0
        %2356 = vmatprep.subr.bf16.mxu0 0
        %2357 = vmatpush2.bf16.msra.mxu0 0
        %2358 = vmatprep.subr.bf16.mxu0 0
        %2359 = vmatpush2.bf16.msra.mxu0 0
        %2360 = vmatprep.subr.bf16.mxu0 0
        %2361 = vmatpush2.bf16.msra.mxu0 0
        %2362 = vmatprep.subr.bf16.mxu0 0
        %2363 = vmatpush2.bf16.msra.mxu0 0
        %2364 = vmatprep.mubr.bf16.mxu0 0
        %2365 = vmatmul.mubr.bf16.gmra.mxu0 %v2327
        %v2366 = vpop.f32.mrf.mxu0
        %v2367 = vadd.f32 0.0, %v2366
        %v2368 = vpop.f32.mrf.mxu0
        %v2369 = vpop.f32.mrf.mxu0
        %v2370 = vpop.f32.mrf.mxu0
        %2371 = vdwg.mxu0
        %2372 = vrot.lane.b32.xlu0 %v669, 64
        %v2373 = vpop.permute.xlu0 %2372
        %v2375 = vsel %vm1602, %v1791, 0
        %v2378 = vsel %vm1800, %v2373, 0
        %2380 = vmatprep.subr.bf16.mxu0 0
        %2381 = vmatpush1.bf16.msra.mxu0 0
        %2382 = vmatprep.subr.bf16.mxu0 0
        %2383 = vmatpush1.bf16.msra.mxu0 0
        %2384 = vmatprep.subr.bf16.mxu0 0
        %2385 = vmatpush1.bf16.msra.mxu0 0
        %2386 = vmatprep.subr.bf16.mxu0 0
        %2387 = vmatpush1.bf16.msra.mxu0 0
        %2388 = vmatprep.subr.bf16.mxu0 0
        %2389 = vmatpush1.bf16.msra.mxu0 0
        %2390 = vmatprep.subr.bf16.mxu0 0
        %2391 = vmatpush1.bf16.msra.mxu0 0
        %2392 = vmatprep.subr.bf16.mxu0 0
        %2393 = vmatpush1.bf16.msra.mxu0 0
        %2394 = vmatprep.subr.bf16.mxu0 0
        %2395 = vmatpush1.bf16.msra.mxu0 %v2378
        %2396 = vmatprep.subr.bf16.mxu0 0
        %2397 = vmatpush2.bf16.msra.mxu0 0
        %2398 = vmatprep.subr.bf16.mxu0 0
        %2399 = vmatpush2.bf16.msra.mxu0 0
        %2400 = vmatprep.subr.bf16.mxu0 0
        %2401 = vmatpush2.bf16.msra.mxu0 0
        %2402 = vmatprep.subr.bf16.mxu0 0
        %2403 = vmatpush2.bf16.msra.mxu0 0
        %2404 = vmatprep.subr.bf16.mxu0 0
        %2405 = vmatpush2.bf16.msra.mxu0 0
        %2406 = vmatprep.subr.bf16.mxu0 0
        %2407 = vmatpush2.bf16.msra.mxu0 0
        %2408 = vmatprep.subr.bf16.mxu0 0
        %2409 = vmatpush2.bf16.msra.mxu0 0
        %2410 = vmatprep.subr.bf16.mxu0 0
        %2411 = vmatpush2.bf16.msra.mxu0 0
        %2412 = vmatprep.mubr.bf16.mxu0 0
        %2413 = vmatmul.mubr.bf16.gmra.mxu0 %v2375
        %v2414 = vpop.f32.mrf.mxu0
        %v2415 = vadd.f32 0.0, %v2414
        %v2416 = vpop.f32.mrf.mxu0
        %v2417 = vpop.f32.mrf.mxu0
        %v2418 = vpop.f32.mrf.mxu0
        %2419 = vdwg.mxu0
        %2420 = vrot.lane.b32.xlu0 %v670, 64
        %v2421 = vpop.permute.xlu0 %2420
        %v2423 = vsel %vm1602, %v1792, 0
        %v2426 = vsel %vm1800, %v2421, 0
        %2428 = vmatprep.subr.bf16.mxu0 0
        %2429 = vmatpush1.bf16.msra.mxu0 0
        %2430 = vmatprep.subr.bf16.mxu0 0
        %2431 = vmatpush1.bf16.msra.mxu0 0
        %2432 = vmatprep.subr.bf16.mxu0 0
        %2433 = vmatpush1.bf16.msra.mxu0 0
        %2434 = vmatprep.subr.bf16.mxu0 0
        %2435 = vmatpush1.bf16.msra.mxu0 0
        %2436 = vmatprep.subr.bf16.mxu0 0
        %2437 = vmatpush1.bf16.msra.mxu0 0
        %2438 = vmatprep.subr.bf16.mxu0 0
        %2439 = vmatpush1.bf16.msra.mxu0 0
        %2440 = vmatprep.subr.bf16.mxu0 0
        %2441 = vmatpush1.bf16.msra.mxu0 0
        %2442 = vmatprep.subr.bf16.mxu0 0
        %2443 = vmatpush1.bf16.msra.mxu0 %v2426
        %2444 = vmatprep.subr.bf16.mxu0 0
        %2445 = vmatpush2.bf16.msra.mxu0 0
        %2446 = vmatprep.subr.bf16.mxu0 0
        %2447 = vmatpush2.bf16.msra.mxu0 0
        %2448 = vmatprep.subr.bf16.mxu0 0
        %2449 = vmatpush2.bf16.msra.mxu0 0
        %2450 = vmatprep.subr.bf16.mxu0 0
        %2451 = vmatpush2.bf16.msra.mxu0 0
        %2452 = vmatprep.subr.bf16.mxu0 0
        %2453 = vmatpush2.bf16.msra.mxu0 0
        %2454 = vmatprep.subr.bf16.mxu0 0
        %2455 = vmatpush2.bf16.msra.mxu0 0
        %2456 = vmatprep.subr.bf16.mxu0 0
        %2457 = vmatpush2.bf16.msra.mxu0 0
        %2458 = vmatprep.subr.bf16.mxu0 0
        %2459 = vmatpush2.bf16.msra.mxu0 0
        %2460 = vmatprep.mubr.bf16.mxu0 0
        %2461 = vmatmul.mubr.bf16.gmra.mxu0 %v2423
        %v2462 = vpop.f32.mrf.mxu0
        %v2463 = vadd.f32 0.0, %v2462
        %v2464 = vpop.f32.mrf.mxu0
        %v2465 = vpop.f32.mrf.mxu0
        %v2466 = vpop.f32.mrf.mxu0
        %2467 = vdwg.mxu0
        %2468 = vrot.lane.b32.xlu0 %v671, 64
        %v2469 = vpop.permute.xlu0 %2468
        %v2471 = vsel %vm1602, %v1793, 0
        %v2474 = vsel %vm1800, %v2469, 0
        %2476 = vmatprep.subr.bf16.mxu0 0
        %2477 = vmatpush1.bf16.msra.mxu0 0
        %2478 = vmatprep.subr.bf16.mxu0 0
        %2479 = vmatpush1.bf16.msra.mxu0 0
        %2480 = vmatprep.subr.bf16.mxu0 0
        %2481 = vmatpush1.bf16.msra.mxu0 0
        %2482 = vmatprep.subr.bf16.mxu0 0
        %2483 = vmatpush1.bf16.msra.mxu0 0
        %2484 = vmatprep.subr.bf16.mxu0 0
        %2485 = vmatpush1.bf16.msra.mxu0 0
        %2486 = vmatprep.subr.bf16.mxu0 0
        %2487 = vmatpush1.bf16.msra.mxu0 0
        %2488 = vmatprep.subr.bf16.mxu0 0
        %2489 = vmatpush1.bf16.msra.mxu0 0
        %2490 = vmatprep.subr.bf16.mxu0 0
        %2491 = vmatpush1.bf16.msra.mxu0 %v2474
        %2492 = vmatprep.subr.bf16.mxu0 0
        %2493 = vmatpush2.bf16.msra.mxu0 0
        %2494 = vmatprep.subr.bf16.mxu0 0
        %2495 = vmatpush2.bf16.msra.mxu0 0
        %2496 = vmatprep.subr.bf16.mxu0 0
        %2497 = vmatpush2.bf16.msra.mxu0 0
        %2498 = vmatprep.subr.bf16.mxu0 0
        %2499 = vmatpush2.bf16.msra.mxu0 0
        %2500 = vmatprep.subr.bf16.mxu0 0
        %2501 = vmatpush2.bf16.msra.mxu0 0
        %2502 = vmatprep.subr.bf16.mxu0 0
        %2503 = vmatpush2.bf16.msra.mxu0 0
        %2504 = vmatprep.subr.bf16.mxu0 0
        %2505 = vmatpush2.bf16.msra.mxu0 0
        %2506 = vmatprep.subr.bf16.mxu0 0
        %2507 = vmatpush2.bf16.msra.mxu0 0
        %2508 = vmatprep.mubr.bf16.mxu0 0
        %2509 = vmatmul.mubr.bf16.gmra.mxu0 %v2471
        %v2510 = vpop.f32.mrf.mxu0
        %v2511 = vadd.f32 0.0, %v2510
        %v2512 = vpop.f32.mrf.mxu0
        %v2513 = vpop.f32.mrf.mxu0
        %v2514 = vpop.f32.mrf.mxu0
        %2515 = vdwg.mxu0
        %2516 = vrot.lane.b32.xlu0 %v672, 64
        %v2517 = vpop.permute.xlu0 %2516
        %v2519 = vsel %vm1602, %v1794, 0
        %v2522 = vsel %vm1800, %v2517, 0
        %2524 = vmatprep.subr.bf16.mxu0 0
        %2525 = vmatpush1.bf16.msra.mxu0 0
        %2526 = vmatprep.subr.bf16.mxu0 0
        %2527 = vmatpush1.bf16.msra.mxu0 0
        %2528 = vmatprep.subr.bf16.mxu0 0
        %2529 = vmatpush1.bf16.msra.mxu0 0
        %2530 = vmatprep.subr.bf16.mxu0 0
        %2531 = vmatpush1.bf16.msra.mxu0 0
        %2532 = vmatprep.subr.bf16.mxu0 0
        %2533 = vmatpush1.bf16.msra.mxu0 0
        %2534 = vmatprep.subr.bf16.mxu0 0
        %2535 = vmatpush1.bf16.msra.mxu0 0
        %2536 = vmatprep.subr.bf16.mxu0 0
        %2537 = vmatpush1.bf16.msra.mxu0 0
        %2538 = vmatprep.subr.bf16.mxu0 0
        %2539 = vmatpush1.bf16.msra.mxu0 %v2522
        %2540 = vmatprep.subr.bf16.mxu0 0
        %2541 = vmatpush2.bf16.msra.mxu0 0
        %2542 = vmatprep.subr.bf16.mxu0 0
        %2543 = vmatpush2.bf16.msra.mxu0 0
        %2544 = vmatprep.subr.bf16.mxu0 0
        %2545 = vmatpush2.bf16.msra.mxu0 0
        %2546 = vmatprep.subr.bf16.mxu0 0
        %2547 = vmatpush2.bf16.msra.mxu0 0
        %2548 = vmatprep.subr.bf16.mxu0 0
        %2549 = vmatpush2.bf16.msra.mxu0 0
        %2550 = vmatprep.subr.bf16.mxu0 0
        %2551 = vmatpush2.bf16.msra.mxu0 0
        %2552 = vmatprep.subr.bf16.mxu0 0
        %2553 = vmatpush2.bf16.msra.mxu0 0
        %2554 = vmatprep.subr.bf16.mxu0 0
        %2555 = vmatpush2.bf16.msra.mxu0 0
        %2556 = vmatprep.mubr.bf16.mxu0 0
        %2557 = vmatmul.mubr.bf16.gmra.mxu0 %v2519
        %v2558 = vpop.f32.mrf.mxu0
        %v2559 = vadd.f32 0.0, %v2558
        %v2560 = vpop.f32.mrf.mxu0
        %v2561 = vpop.f32.mrf.mxu0
        %v2562 = vpop.f32.mrf.mxu0
        %2563 = vdwg.mxu0
        %2566 = vrot.lane.b32.xlu0 %v1935, 4
        %v2567 = vpop.permute.xlu0 %2566
        %2568 = vrot.lane.b32.xlu0 %v1983, 4
        %v2569 = vpop.permute.xlu0 %2568
        %2574 = vrot.lane.b32.xlu0 %v2031, 8
        %v2575 = vpop.permute.xlu0 %2574
        %2576 = vrot.lane.b32.xlu0 %v2079, 8
        %v2577 = vpop.permute.xlu0 %2576
        %2582 = vrot.lane.b32.xlu0 %v2127, 12
        %v2583 = vpop.permute.xlu0 %2582
        %2584 = vrot.lane.b32.xlu0 %v2175, 12
        %v2585 = vpop.permute.xlu0 %2584
        %2590 = vrot.lane.b32.xlu0 %v2223, 16
        %v2591 = vpop.permute.xlu0 %2590
        %2592 = vrot.lane.b32.xlu0 %v2271, 16
        %v2593 = vpop.permute.xlu0 %2592
        %2598 = vrot.lane.b32.xlu0 %v2319, 20
        %v2599 = vpop.permute.xlu0 %2598
        %2600 = vrot.lane.b32.xlu0 %v2367, 20
        %v2601 = vpop.permute.xlu0 %2600
        %2606 = vrot.lane.b32.xlu0 %v2415, 24
        %v2607 = vpop.permute.xlu0 %2606
        %2608 = vrot.lane.b32.xlu0 %v2463, 24
        %v2609 = vpop.permute.xlu0 %2608
        %2614 = vrot.lane.b32.xlu0 %v2511, 28
        %v2615 = vpop.permute.xlu0 %2614
        %2616 = vrot.lane.b32.xlu0 %v2559, 28
        %v2617 = vpop.permute.xlu0 %2616
        %v2620 = vsel %vm676, %v1839, %v2567
        %v2621 = vsel %vm676, %v1887, %v2569
        %v2622 = vsel %vm1602, %v2620, %v2575
        %v2623 = vsel %vm1602, %v2621, %v2577
        %vm2624 = vcmask 97280
        %v2625 = vsel %vm2624, %v2622, %v2583
        %v2626 = vsel %vm2624, %v2623, %v2585
        %vm2627 = vcmask 130048
        %v2628 = vsel %vm2627, %v2625, %v2591
        %v2629 = vsel %vm2627, %v2626, %v2593
        %vm2630 = vcmask 162816
        %v2631 = vsel %vm2630, %v2628, %v2599
        %v2632 = vsel %vm2630, %v2629, %v2601
        %vm2633 = vcmask 195584
        %v2634 = vsel %vm2633, %v2631, %v2607
        %v2635 = vsel %vm2633, %v2632, %v2609
        %vm2636 = vcmask 228352
        %v2637 = vsel %vm2636, %v2634, %v2615
        %v2638 = vsel %vm2636, %v2635, %v2617
        %v2639 = vpack.c.bf16 %v2638, %v2637
        %v2640 = vld [vmem:[%s490] sm:$0xf]
        %v2641 = vld [vmem:[%s490 + $0x4] sm:$0xf]
        %v2642 = vld [vmem:[%s490 + $0x8] sm:$0xf]
        %v2643 = vld [vmem:[%s490 + $0xc] sm:$0xf]
        %v2644 = vlaneseq
        %v2645 = vshrl.u32 %v2644, 7
        %v2646 = vsub.s32 0, %v2645
        %v2647 = vrot.slane %v543, %v2646
        %v2652 = vunpack.c.l.b16 %v2640
        %v2653 = vunpack.c.l.b16 %v2641
        %v2654 = vunpack.c.l.b16 %v2642
        %v2655 = vunpack.c.l.b16 %v2643
        %v2656 = vpack.c.b16 %v2653, %v2652
        %v2657 = vpack.c.b16 %v2655, %v2654
        %v2661 = vsel %vm568, %v2639, 0
        %2663 = vmatprep.subr.bf16.mxu0 0
        %2664 = vmatpush1.bf16.msra.mxu0 0
        %2665 = vmatprep.subr.bf16.mxu0 0
        %2666 = vmatpush1.bf16.msra.mxu0 0
        %2667 = vmatprep.subr.bf16.mxu0 0
        %2668 = vmatpush1.bf16.msra.mxu0 0
        %2669 = vmatprep.subr.bf16.mxu0 0
        %2670 = vmatpush1.bf16.msra.mxu0 0
        %2671 = vmatprep.subr.bf16.mxu0 0
        %2672 = vmatpush1.bf16.msra.mxu0 0
        %2673 = vmatprep.subr.bf16.mxu0 0
        %2674 = vmatpush1.bf16.msra.mxu0 0
        %2675 = vmatprep.subr.bf16.mxu0 0
        %2676 = vmatpush1.bf16.msra.mxu0 %v2657
        %2677 = vmatprep.subr.bf16.mxu0 0
        %2678 = vmatpush1.bf16.msra.mxu0 %v2656
        %2679 = vmatprep.subr.bf16.mxu0 0
        %2680 = vmatpush2.bf16.msra.mxu0 0
        %2681 = vmatprep.subr.bf16.mxu0 0
        %2682 = vmatpush2.bf16.msra.mxu0 0
        %2683 = vmatprep.subr.bf16.mxu0 0
        %2684 = vmatpush2.bf16.msra.mxu0 0
        %2685 = vmatprep.subr.bf16.mxu0 0
        %2686 = vmatpush2.bf16.msra.mxu0 0
        %2687 = vmatprep.subr.bf16.mxu0 0
        %2688 = vmatpush2.bf16.msra.mxu0 0
        %2689 = vmatprep.subr.bf16.mxu0 0
        %2690 = vmatpush2.bf16.msra.mxu0 0
        %2691 = vmatprep.subr.bf16.mxu0 0
        %2692 = vmatpush2.bf16.msra.mxu0 0
        %2693 = vmatprep.subr.bf16.mxu0 0
        %2694 = vmatpush2.bf16.msra.mxu0 0
        %2695 = vmatprep.mubr.bf16.mxu0 0
        %2696 = vmatmul.mubr.bf16.gmra.mxu0 %v2661
        %v2697 = vpop.f32.mrf.mxu0
        %v2698 = vadd.f32 %v2647, %v2697
        %v2699 = vpop.f32.mrf.mxu0
        %v2700 = vpop.f32.mrf.mxu0
        %v2701 = vadd.f32 %v2647, %v2700
        %v2702 = vpop.f32.mrf.mxu0
        %2703 = vdwg.mxu0
        %v2704 = vadd.f32 %v541, %v2698
        %v2705 = vadd.f32 %v542, %v2701
        %v2706 = vsel %vm568, %v2704, 0.0
        %2707 = vadd.xlane.f32.xlu0 %v2706
        %v2708 = vpop.xlane.xlu0 %2707
        %v2709 = vsel %vm568, %v2705, 0.0
        %2710 = vadd.xlane.f32.xlu0 %v2709
        %v2711 = vpop.xlane.xlu0 %2710
        %v2712 = vrcp.pop 32.0
        %v2713 = vmul.f32 %v2708, %v2712
        %v2714 = vmul.f32 %v2711, %v2712
        %v2715 = vsub.f32 %v2704, %v2713
        %v2716 = vsub.f32 %v2705, %v2714
        %v2717 = vmul.f32 %v2715, %v2715
        %v2718 = vmul.f32 %v2716, %v2716
        %v2719 = vsel %vm568, %v2717, 0.0
        %2720 = vadd.xlane.f32.xlu0 %v2719
        %v2721 = vpop.xlane.xlu0 %2720
        %v2722 = vsel %vm568, %v2718, 0.0
        %2723 = vadd.xlane.f32.xlu0 %v2722
        %v2724 = vpop.xlane.xlu0 %2723
        %v2725 = vmul.f32 %v2721, %v2712
        %v2726 = vmul.f32 %v2724, %v2712
        %v2727 = vadd.f32 %v2725, 1e-05
        %v2728 = vadd.f32 %v2726, 1e-05
        %v2729 = vrsqrt.pop %v2727
        %v2730 = vrsqrt.pop %v2728
        %v2731 = vmul.f32 %v2715, %v2729
        %v2732 = vmul.f32 %v2716, %v2730
        %v2733 = vlaneseq
        %v2734 = vshrl.u32 %v2733, 7
        %v2735 = vsub.s32 1, %v2734
        %v2736 = vrot.slane %v543, %v2735
        %v2737 = vmul.f32 %v2731, %v2736
        %v2738 = vmul.f32 %v2732, %v2736
        %v2739 = vlaneseq
        %v2740 = vshrl.u32 %v2739, 7
        %v2741 = vsub.s32 2, %v2740
        %v2742 = vrot.slane %v543, %v2741
        %v2743 = vadd.f32 %v2737, %v2742
        %v2744 = vadd.f32 %v2738, %v2742
        %v2745 = vpack.c.bf16 %v2744, %v2743
        %v2746 = vld [vmem:[%s499] sm:$0xf]
        %v2747 = vld [vmem:[%s499 + $0x4] sm:$0xf]
        %v2748 = vld [vmem:[%s499 + $0x8] sm:$0xf]
        %v2749 = vld [vmem:[%s499 + $0xc] sm:$0xf]
        %v2750 = vld [vmem:[%s502] sm:$0x1]
        %v2752 = vlaneseq
        %v2753 = vshrl.u32 %v2752, 7
        %v2754 = vsub.s32 0, %v2753
        %v2755 = vrot.slane %v2750, %v2754
        %v2761 = vunpack.c.l.b16 %v2746
        %v2762 = vunpack.c.l.b16 %v2747
        %v2763 = vunpack.c.l.b16 %v2748
        %v2764 = vunpack.c.l.b16 %v2749
        %v2765 = vpack.c.b16 %v2762, %v2761
        %v2766 = vpack.c.b16 %v2764, %v2763
        %v2770 = vsel %vm568, %v2745, 0
        %2772 = vmatprep.subr.bf16.mxu0 0
        %2773 = vmatpush1.bf16.msra.mxu0 0
        %2774 = vmatprep.subr.bf16.mxu0 0
        %2775 = vmatpush1.bf16.msra.mxu0 0
        %2776 = vmatprep.subr.bf16.mxu0 0
        %2777 = vmatpush1.bf16.msra.mxu0 0
        %2778 = vmatprep.subr.bf16.mxu0 0
        %2779 = vmatpush1.bf16.msra.mxu0 0
        %2780 = vmatprep.subr.bf16.mxu0 0
        %2781 = vmatpush1.bf16.msra.mxu0 0
        %2782 = vmatprep.subr.bf16.mxu0 0
        %2783 = vmatpush1.bf16.msra.mxu0 0
        %2784 = vmatprep.subr.bf16.mxu0 0
        %2785 = vmatpush1.bf16.msra.mxu0 %v2766
        %2786 = vmatprep.subr.bf16.mxu0 0
        %2787 = vmatpush1.bf16.msra.mxu0 %v2765
        %2788 = vmatprep.subr.bf16.mxu0 0
        %2789 = vmatpush2.bf16.msra.mxu0 0
        %2790 = vmatprep.subr.bf16.mxu0 0
        %2791 = vmatpush2.bf16.msra.mxu0 0
        %2792 = vmatprep.subr.bf16.mxu0 0
        %2793 = vmatpush2.bf16.msra.mxu0 0
        %2794 = vmatprep.subr.bf16.mxu0 0
        %2795 = vmatpush2.bf16.msra.mxu0 0
        %2796 = vmatprep.subr.bf16.mxu0 0
        %2797 = vmatpush2.bf16.msra.mxu0 0
        %2798 = vmatprep.subr.bf16.mxu0 0
        %2799 = vmatpush2.bf16.msra.mxu0 0
        %2800 = vmatprep.subr.bf16.mxu0 0
        %2801 = vmatpush2.bf16.msra.mxu0 0
        %2802 = vmatprep.subr.bf16.mxu0 0
        %2803 = vmatpush2.bf16.msra.mxu0 0
        %2804 = vmatprep.mubr.bf16.mxu0 0
        %2805 = vmatmul.mubr.bf16.gmra.mxu0 %v2770
        %v2806 = vpop.f32.mrf.mxu0
        %v2807 = vadd.f32 %v2755, %v2806
        %v2808 = vpop.f32.mrf.mxu0
        %v2809 = vpop.f32.mrf.mxu0
        %v2810 = vadd.f32 %v2755, %v2809
        %v2811 = vpop.f32.mrf.mxu0
        %2812 = vdwg.mxu0
        %v2813 = vmax.f32 %v2807, 0.0
        %v2814 = vmax.f32 %v2810, 0.0
        %v2815 = vpack.c.bf16 %v2814, %v2813
        %v2816 = vld [vmem:[%s507] sm:$0xf]
        %v2817 = vld [vmem:[%s507 + $0x4] sm:$0xf]
        %v2818 = vld [vmem:[%s507 + $0x8] sm:$0xf]
        %v2819 = vld [vmem:[%s507 + $0xc] sm:$0xf]
        %v2820 = vld [vmem:[%s507 + $0x10] sm:$0xf]
        %v2821 = vld [vmem:[%s507 + $0x14] sm:$0xf]
        %v2822 = vld [vmem:[%s507 + $0x18] sm:$0xf]
        %v2823 = vld [vmem:[%s507 + $0x1c] sm:$0xf]
        %v2824 = vlaneseq
        %v2825 = vshrl.u32 %v2824, 7
        %v2826 = vsub.s32 3, %v2825
        %v2827 = vrot.slane %v543, %v2826
        %v2836 = vunpack.c.l.b16 %v2816
        %v2837 = vunpack.c.l.b16 %v2817
        %v2838 = vunpack.c.l.b16 %v2818
        %v2839 = vunpack.c.l.b16 %v2819
        %v2840 = vunpack.c.l.b16 %v2820
        %v2841 = vunpack.c.l.b16 %v2821
        %v2842 = vunpack.c.l.b16 %v2822
        %v2843 = vunpack.c.l.b16 %v2823
        %v2844 = vpack.c.b16 %v2837, %v2836
        %v2845 = vpack.c.b16 %v2839, %v2838
        %v2846 = vpack.c.b16 %v2841, %v2840
        %v2847 = vpack.c.b16 %v2843, %v2842
        %vm2852 = vcmask 523264
        %v2854 = vsel %vm2852, %v2815, 0
        %2856 = vmatprep.subr.bf16.mxu0 0
        %2857 = vmatpush1.bf16.msra.mxu0 0
        %2858 = vmatprep.subr.bf16.mxu0 0
        %2859 = vmatpush1.bf16.msra.mxu0 0
        %2860 = vmatprep.subr.bf16.mxu0 0
        %2861 = vmatpush1.bf16.msra.mxu0 0
        %2862 = vmatprep.subr.bf16.mxu0 0
        %2863 = vmatpush1.bf16.msra.mxu0 0
        %2864 = vmatprep.subr.bf16.mxu0 0
        %2865 = vmatpush1.bf16.msra.mxu0 %v2847
        %2866 = vmatprep.subr.bf16.mxu0 0
        %2867 = vmatpush1.bf16.msra.mxu0 %v2846
        %2868 = vmatprep.subr.bf16.mxu0 0
        %2869 = vmatpush1.bf16.msra.mxu0 %v2845
        %2870 = vmatprep.subr.bf16.mxu0 0
        %2871 = vmatpush1.bf16.msra.mxu0 %v2844
        %2872 = vmatprep.subr.bf16.mxu0 0
        %2873 = vmatpush2.bf16.msra.mxu0 0
        %2874 = vmatprep.subr.bf16.mxu0 0
        %2875 = vmatpush2.bf16.msra.mxu0 0
        %2876 = vmatprep.subr.bf16.mxu0 0
        %2877 = vmatpush2.bf16.msra.mxu0 0
        %2878 = vmatprep.subr.bf16.mxu0 0
        %2879 = vmatpush2.bf16.msra.mxu0 0
        %2880 = vmatprep.subr.bf16.mxu0 0
        %2881 = vmatpush2.bf16.msra.mxu0 0
        %2882 = vmatprep.subr.bf16.mxu0 0
        %2883 = vmatpush2.bf16.msra.mxu0 0
        %2884 = vmatprep.subr.bf16.mxu0 0
        %2885 = vmatpush2.bf16.msra.mxu0 0
        %2886 = vmatprep.subr.bf16.mxu0 0
        %2887 = vmatpush2.bf16.msra.mxu0 0
        %2888 = vmatprep.mubr.bf16.mxu0 0
        %2889 = vmatmul.mubr.bf16.gmra.mxu0 %v2854
        %v2890 = vpop.f32.mrf.mxu0
        %v2891 = vadd.f32 %v2827, %v2890
        %v2892 = vpop.f32.mrf.mxu0
        %v2893 = vpop.f32.mrf.mxu0
        %v2894 = vadd.f32 %v2827, %v2893
        %v2895 = vpop.f32.mrf.mxu0
        %2896 = vdwg.mxu0
        %v2897 = vadd.f32 %v2743, %v2891
        %v2898 = vadd.f32 %v2744, %v2894
        %v2899 = vsel %vm568, %v2897, 0.0
        %2900 = vadd.xlane.f32.xlu0 %v2899
        %v2901 = vpop.xlane.xlu0 %2900
        %v2902 = vsel %vm568, %v2898, 0.0
        %2903 = vadd.xlane.f32.xlu0 %v2902
        %v2904 = vpop.xlane.xlu0 %2903
        %v2905 = vmul.f32 %v2901, %v2712
        %v2906 = vmul.f32 %v2904, %v2712
        %v2907 = vsub.f32 %v2897, %v2905
        %v2908 = vsub.f32 %v2898, %v2906
        %v2909 = vmul.f32 %v2907, %v2907
        %v2910 = vmul.f32 %v2908, %v2908
        %v2911 = vsel %vm568, %v2909, 0.0
        %2912 = vadd.xlane.f32.xlu0 %v2911
        %v2913 = vpop.xlane.xlu0 %2912
        %v2914 = vsel %vm568, %v2910, 0.0
        %2915 = vadd.xlane.f32.xlu0 %v2914
        %v2916 = vpop.xlane.xlu0 %2915
        %v2917 = vmul.f32 %v2913, %v2712
        %v2918 = vmul.f32 %v2916, %v2712
        %v2919 = vadd.f32 %v2917, 1e-05
        %v2920 = vadd.f32 %v2918, 1e-05
        %v2921 = vrsqrt.pop %v2919
        %v2922 = vrsqrt.pop %v2920
        %v2923 = vmul.f32 %v2907, %v2921
        %v2924 = vmul.f32 %v2908, %v2922
        %v2925 = vlaneseq
        %v2926 = vshrl.u32 %v2925, 7
        %v2927 = vsub.s32 4, %v2926
        %v2928 = vrot.slane %v543, %v2927
        %v2929 = vmul.f32 %v2923, %v2928
        %v2930 = vmul.f32 %v2924, %v2928
        %v2931 = vlaneseq
        %v2932 = vshrl.u32 %v2931, 7
        %v2933 = vsub.s32 5, %v2932
        %v2934 = vrot.slane %v543, %v2933
        %v2935 = vadd.f32 %v2929, %v2934
        %v2936 = vadd.f32 %v2930, %v2934
        %2937 = vst.msk [vmem:[#allocation2] sm:$0xff] %vm568, %v2935
        %2938 = vst.msk [vmem:[#allocation2 + $0x8] sm:$0xff] %vm568, %v2936
        %p2939 = scmp.eq.s32.totalorder %s25, 1
        // Predicated region
        $region77: #{tpu_custom_call.1} parent=63 // pred_check
          %p2940 = pneg %p2939
        $region78: #{tpu_custom_call.1} parent=63 // pred_check_branch
          %2942 = sbr.rel (%p2940) target = $region80
        $region79: #{tpu_custom_call.1} parent=63 // pred_region
          %v2943 = vpack.c.bf16 %v2936, %v2935
          %v2944 = vld [vmem:[#allocation7] sm:$0xf]
          %v2945 = vld [vmem:[#allocation7 + $0x4] sm:$0xf]
          %v2946 = vld [vmem:[#allocation7 + $0x8] sm:$0xf]
          %v2947 = vld [vmem:[#allocation7 + $0xc] sm:$0xf]
          %v2948 = vld [vmem:[%s10] sm:$0x1]
          %v2950 = vlaneseq
          %v2951 = vshrl.u32 %v2950, 7
          %v2952 = vsub.s32 0, %v2951
          %v2953 = vrot.slane %v2948, %v2952
          %v2959 = vunpack.c.l.b16 %v2944
          %v2960 = vunpack.c.l.b16 %v2945
          %v2961 = vunpack.c.l.b16 %v2946
          %v2962 = vunpack.c.l.b16 %v2947
          %v2963 = vpack.c.b16 %v2960, %v2959
          %v2964 = vpack.c.b16 %v2962, %v2961
          %v2968 = vsel %vm568, %v2943, 0
          %2970 = vmatprep.subr.bf16.mxu0 0
          %2971 = vmatpush1.bf16.msra.mxu0 0
          %2972 = vmatprep.subr.bf16.mxu0 0
          %2973 = vmatpush1.bf16.msra.mxu0 0
          %2974 = vmatprep.subr.bf16.mxu0 0
          %2975 = vmatpush1.bf16.msra.mxu0 0
          %2976 = vmatprep.subr.bf16.mxu0 0
          %2977 = vmatpush1.bf16.msra.mxu0 0
          %2978 = vmatprep.subr.bf16.mxu0 0
          %2979 = vmatpush1.bf16.msra.mxu0 0
          %2980 = vmatprep.subr.bf16.mxu0 0
          %2981 = vmatpush1.bf16.msra.mxu0 0
          %2982 = vmatprep.subr.bf16.mxu0 0
          %2983 = vmatpush1.bf16.msra.mxu0 %v2964
          %2984 = vmatprep.subr.bf16.mxu0 0
          %2985 = vmatpush1.bf16.msra.mxu0 %v2963
          %2986 = vmatprep.subr.bf16.mxu0 0
          %2987 = vmatpush2.bf16.msra.mxu0 0
          %2988 = vmatprep.subr.bf16.mxu0 0
          %2989 = vmatpush2.bf16.msra.mxu0 0
          %2990 = vmatprep.subr.bf16.mxu0 0
          %2991 = vmatpush2.bf16.msra.mxu0 0
          %2992 = vmatprep.subr.bf16.mxu0 0
          %2993 = vmatpush2.bf16.msra.mxu0 0
          %2994 = vmatprep.subr.bf16.mxu0 0
          %2995 = vmatpush2.bf16.msra.mxu0 0
          %2996 = vmatprep.subr.bf16.mxu0 0
          %2997 = vmatpush2.bf16.msra.mxu0 0
          %2998 = vmatprep.subr.bf16.mxu0 0
          %2999 = vmatpush2.bf16.msra.mxu0 0
          %3000 = vmatprep.subr.bf16.mxu0 0
          %3001 = vmatpush2.bf16.msra.mxu0 0
          %3002 = vmatprep.mubr.bf16.mxu0 0
          %3003 = vmatmul.mubr.bf16.gmra.mxu0 %v2968
          %v3004 = vpop.f32.mrf.mxu0
          %v3005 = vadd.f32 %v2953, %v3004
          %v3006 = vpop.f32.mrf.mxu0
          %v3007 = vpop.f32.mrf.mxu0
          %v3008 = vadd.f32 %v2953, %v3007
          %v3009 = vpop.f32.mrf.mxu0
          %3010 = vdwg.mxu0
          %3011 = vst [vmem:[#allocation9] sm:$0xff] %v3005
          %3012 = vst [vmem:[#allocation9 + $0x8] sm:$0xff] %v3008
        $region80: #{tpu_custom_call.1} parent=63 // pred_fallthru
          _
        // Predicated region
        $region81: #{tpu_custom_call.1} parent=63 // pred_check
          %p3013 = pneg %p304
        $region82: #{tpu_custom_call.1} parent=63 // pred_check_branch
          %3015 = sbr.rel (%p3013) target = $region84
        $region83: #{tpu_custom_call.1} parent=63 // pred_region
          %s3017 = ssub.s32 256, 256
          %3018 = vsyncadd [#allocation6], %s3017
          %s3019 = sshll.u32 [#allocation9], 4
          %s3020 = int_to_ptr.vmem [resolvable:$true] %s3019
          %3025 = dma.vmem_to_hbm [thread:$0]  %s3020, 256, %s11, [#allocation6], 128, 128, 8
        $region84: #{tpu_custom_call.1} parent=63 // pred_fallthru
          _
        // Predicated region
        $region85: #{tpu_custom_call.1} parent=63 // pred_check
          %p3026 = pneg %p304
        $region86: #{tpu_custom_call.1} parent=63 // pred_check_branch
          %3028 = sbr.rel (%p3026) target = $region88
        $region87: #{tpu_custom_call.1} parent=63 // pred_region
          %3029 = dma.done [#allocation6], 256
        $region88: #{tpu_custom_call.1} parent=63 // pred_fallthru
          _
      $region64: #{tpu_custom_call.1} parent=5 // pred_fallthru
        _
      %p3030 = scmp.le.s32.totalorder 2, %s20
      // Predicated region
      $region89: #{tpu_custom_call.1} parent=5 // pred_check
        %p3031 = pneg %p3030
      $region90: #{tpu_custom_call.1} parent=5 // pred_check_branch
        %3033 = sbr.rel (%p3031) target = $region92
      $region91: #{tpu_custom_call.1} parent=5 // pred_region
        %s3034 = ssub.s32 %s20, 2
      $region92: #{tpu_custom_call.1} parent=5 // pred_fallthru
        _
    $region6: #{tpu_custom_call.1} parent=1 // loop_footer
      %s24 = sadd.s32 1, %s20
    $region7: #{tpu_custom_call.1} parent=1 // loop_footer_branch
      %19 = sbr.rel target = $region3
    $region8: #{tpu_custom_call.1} parent=1 // loop_exit
      _
    %3035 = vsyncpa [#allocation5], 1
    %s3036 = scalar_lea.sflag [#allocation5], 1
    %3037 = vsyncpa %s3036, 1
    %3038 = vsyncpa [#allocation8], 1
    %3039 = vsyncpa [#allocation6], 1
    %s3040 = scalar_lea.sflag [#allocation6], 1
    %3041 = vsyncpa %s3040, 1

</llo_original>
